<compile_context>
chip_gen: v5e
topology: v5e:2x2
jax: 0.10.0
libtpu: 0.0.40
codegen_flags: <defaults>
</compile_context>

<pallas_src>
import functools

import jax
import jax.numpy as jnp
from jax.experimental import pallas as pl
from jax.experimental.pallas import tpu as pltpu

_H1, _H2, _H3 = 512, 256, 128


def _round_up(x, m):
    return ((x + m - 1) // m) * m


def _cdiv(a, b):
    return (a + b - 1) // b


# --------------------------------------------------------------------------- #
# One-time hardware / feature probes (variant selected once, never per call).
# --------------------------------------------------------------------------- #

@functools.lru_cache(maxsize=None)
def _vmem_capacity_bytes():
    """Physical VMEM per TensorCore; conservative 64 MiB (v7x) if unqueryable."""
    try:
        return int(pltpu.get_tpu_info().vmem_capacity_bytes)
    except Exception:
        return 64 << 20


def _probe_kernel(b_ref, w_ref, o_ref):
    o_ref[...] = w_ref[...] + b_ref[0]


@functools.lru_cache(maxsize=None)
def _fancy_specs_ok():
    """Probe once: Buffered(1) grid-invariant specs + SMEM scalar operand."""
    try:
        out = pl.pallas_call(
            _probe_kernel,
            out_shape=jax.ShapeDtypeStruct((8, 128), jnp.float32),
            grid_spec=pltpu.PrefetchScalarGridSpec(
                num_scalar_prefetch=0,
                grid=(1,),
                in_specs=[
                    pl.BlockSpec(memory_space=pltpu.MemorySpace.SMEM),
                    pl.BlockSpec((8, 128), lambda i: (0, 0),
                                 pipeline_mode=pl.Buffered(1)),
                ],
                out_specs=pl.BlockSpec((8, 128), lambda i: (0, 0)),
            ),
        )(jnp.ones((1,), jnp.float32), jnp.zeros((8, 128), jnp.float32))
        jax.block_until_ready(out)
        return True
    except Exception:
        return False


# --------------------------------------------------------------------------- #
# Kernel
# --------------------------------------------------------------------------- #

def _make_kernel(b4_in_smem):
    def kernel(x_ref, w1_ref, b1_ref, w2_ref, b2_ref, w3_ref, b3_ref,
               w4_ref, b4_ref, o_ref, acc_ref):
        k = pl.program_id(1)

        @pl.when(k == 0)
        def _():
            acc_ref[...] = jnp.zeros_like(acc_ref)

        # Layer 1, K-tiled over the input dim: bf16 MXU, f32 accumulation.
        acc_ref[...] += jnp.dot(x_ref[...], w1_ref[...],
                                preferred_element_type=jnp.float32)

        @pl.when(k == pl.num_programs(1) - 1)
        def _():
            h = jnp.maximum(acc_ref[...] + b1_ref[...], 0.0).astype(jnp.bfloat16)
            h = jnp.dot(h, w2_ref[...], preferred_element_type=jnp.float32)
            h = jnp.maximum(h + b2_ref[...], 0.0).astype(jnp.bfloat16)
            h = jnp.dot(h, w3_ref[...], preferred_element_type=jnp.float32)
            h = jnp.maximum(h + b3_ref[...], 0.0)                       # (tb,128) f32
            # Final 128 -> 1 layer on the VPU (multiply + lane reduce); an N=1
            # MXU matmul would waste 255/256 of the array.
            score = jnp.sum(h * w4_ref[...], axis=-1)                   # (tb,)
            b4 = b4_ref[0] if b4_in_smem else b4_ref[0, 0]
            o_ref[...] = (score[None, :] + b4).astype(o_ref.dtype)      # (1, tb)
    return kernel


# --------------------------------------------------------------------------- #
# Cached pallas_call builder
# --------------------------------------------------------------------------- #

@functools.lru_cache(maxsize=None)
def _build_fc_critic_call(D_pad, tk, tb, B_pad, fancy, vmem_limit):
    nk = D_pad // tk
    grid = (B_pad // tb, nk)          # batch "parallel", reduction axis last

    def const_spec(shape):            # grid-invariant weights / biases
        idx = lambda i, k: (0,) * len(shape)
        if fancy:
            return pl.BlockSpec(shape, idx, pipeline_mode=pl.Buffered(1))
        return pl.BlockSpec(shape, idx)

    # w1 streams over k; if there is a single K step it is grid-invariant too.
    if fancy and nk == 1:
        w1_spec = pl.BlockSpec((tk, _H1), lambda i, k: (k, 0),
                               pipeline_mode=pl.Buffered(1))
    else:
        w1_spec = pl.BlockSpec((tk, _H1), lambda i, k: (k, 0))

    if fancy:
        b4_spec = pl.BlockSpec(memory_space=pltpu.MemorySpace.SMEM)  # scalar
    else:
        b4_spec = const_spec((1, 1))

    in_specs = [
        pl.BlockSpec((tb, tk), lambda i, k: (i, k)),    # x tile (bf16)
        w1_spec,
        const_spec((1, _H1)),
        const_spec((_H1, _H2)),
        const_spec((1, _H2)),
        const_spec((_H2, _H3)),
        const_spec((1, _H3)),
        const_spec((1, _H3)),                           # w4 as a (1, 128) row
        b4_spec,
    ]

    flops = 2 * B_pad * (D_pad * _H1 + _H1 * _H2 + _H2 * _H3 + _H3)
    w_bytes = (D_pad * _H1 + _H1 * _H2 + _H2 * _H3) * 2 \
        + (_H1 + _H2 + 2 * _H3 + 1) * 4
    cost = pl.CostEstimate(flops=flops, transcendentals=0,
                           bytes_accessed=B_pad * D_pad * 2 + w_bytes + B_pad * 4)

    return pl.pallas_call(
        _make_kernel(b4_in_smem=fancy),
        out_shape=jax.ShapeDtypeStruct((1, B_pad), jnp.float32),   # lane-dense
        grid_spec=pltpu.PrefetchScalarGridSpec(
            num_scalar_prefetch=0,
            grid=grid,
            in_specs=in_specs,
            out_specs=pl.BlockSpec((1, tb), lambda i, k: (0, i)),
            scratch_shapes=[pltpu.VMEM((tb, _H1), jnp.float32)],   # layer-1 acc
        ),
        compiler_params=pltpu.CompilerParams(
            dimension_semantics=("parallel", "arbitrary"),
            vmem_limit_bytes=int(vmem_limit)),
        cost_estimate=cost,
    )


def _choose_tiles(B, D, batch_tile, k_tile):
    vmem = _vmem_capacity_bytes()
    vmem_cap = int(vmem * 0.85)       # headroom for Mosaic internal scratch

    if batch_tile is None:
        # ~64 MiB VMEM (v7x): modest tiles; 128 MiB (v5e/v6e): go larger.
        batch_tile = 256 if vmem <= (96 << 20) else 512
    tb_cap = _round_up(max(int(batch_tile), 1), 128)
    # >= 2 batch grid steps whenever B allows, so v7x's 2 TensorCores both get
    # work via the "parallel" axis (an extra step is ~0.35us on 1-TC chips).
    tb = min(tb_cap, _round_up(_cdiv(B, 2), 128))
    B_pad = _round_up(B, tb)

    D128 = _round_up(D, 128)          # lane / MXU aligned K
    # VMEM not taken by the streamed x / w1 tiles (weights single-buffered).
    fixed = ((_H1 * _H2 + _H2 * _H3) * 2            # w2, w3 (bf16)
             + 8 * (_H1 + _H2 + 2 * _H3 + 128) * 4  # bias / w4 rows (padded)
             + tb * _H1 * 4                         # layer-1 f32 accumulator
             + tb * (_H1 + _H2 + _H3) * 4           # live f32 intermediates
             + 2 * tb * 4                           # (1, tb) output buffers
             + (6 << 20))                           # compiler headroom
    stream_budget = max(vmem_cap - fixed, 1 << 20)

    if k_tile is not None:
        tk = _round_up(int(k_tile), 128)
    elif 2 * tb * D128 * 2 + D128 * _H1 * 2 <= stream_budget:
        tk = D128                                   # single K step
    else:
        # K-tile layer 1: x and w1 double-buffered per 128 columns of K.
        per128 = 2 * tb * 128 * 2 + 2 * 128 * _H1 * 2
        tk = max((stream_budget // per128) * 128, 128)
    tk = min(tk, D128)
    D_pad = _round_up(D128, tk)

    w1_bufs = 1 if tk == D_pad else 2
    est = fixed + 2 * tb * tk * 2 + w1_bufs * tk * _H1 * 2
    vmem_limit = min(max(est, 16 << 20), vmem_cap)
    return tb, B_pad, tk, D_pad, vmem_limit


# --------------------------------------------------------------------------- #
# Forward (jit-friendly; no host sync, no per-call fallback)
# --------------------------------------------------------------------------- #

def fc_critic_forward(x_nchw, params, *, batch_tile=None, k_tile=None):
    """FCCritic forward. x_nchw: (B, C, H, W). Returns (B,) f32 == out.view(-1)."""
    B = x_nchw.shape[0]
    x = x_nchw.reshape(B, -1)                      # == torch input.view(B, -1)
    D = x.shape[1]

    w1, b1, w2, b2, w3, b3, w4, b4 = params
    assert w1.shape[0] == D and w1.shape[1] == _H1

    tb, B_pad, tk, D_pad, vmem_limit = _choose_tiles(B, D, batch_tile, k_tile)
    fancy = _fancy_specs_ok()

    # bf16 MXU operands; f32 biases / final row / accumulation.
    x = x.astype(jnp.bfloat16)
    w1b = w1.astype(jnp.bfloat16)
    if D_pad != D:                                 # keep K lane/MXU aligned
        x = jnp.pad(x, ((0, 0), (0, D_pad - D)))
        w1b = jnp.pad(w1b, ((0, D_pad - D), (0, 0)))
    if B_pad != B:                                 # padded rows sliced off below
        x = jnp.pad(x, ((0, B_pad - B), (0, 0)))

    args = (
        x, w1b,
        b1.reshape(1, _H1).astype(jnp.float32),
        w2.astype(jnp.bfloat16),
        b2.reshape(1, _H2).astype(jnp.float32),
        w3.astype(jnp.bfloat16),
        b3.reshape(1, _H3).astype(jnp.float32),
        w4.reshape(1, _H3).astype(jnp.float32),
        (b4.reshape(1).astype(jnp.float32) if fancy
         else b4.reshape(1, 1).astype(jnp.float32)),
    )

    call = _build_fc_critic_call(D_pad, tk, tb, B_pad, fancy, vmem_limit)
    out = call(*args)                              # (1, B_pad) f32, lane-dense
    return out[0, :B]


# --------------------------------------------------------------------------- #
# Params / references
# --------------------------------------------------------------------------- #

def init_fc_critic_params(key, input_dim):
    """Deterministic params matching nn.Linear shapes (stored as (in, out))."""
    dims = [(input_dim, _H1), (_H1, _H2), (_H2, _H3), (_H3, 1)]
    params = []
    for fan_in, fan_out in dims:
        key, kw, kb = jax.random.split(key, 3)
        bound = 1.0 / jnp.sqrt(jnp.float32(fan_in))   # PyTorch Linear default
        w = jax.random.uniform(kw, (fan_in, fan_out), jnp.float32, -bound, bound)
        b = jax.random.uniform(kb, (1, fan_out), jnp.float32, -bound, bound)
        params += [w, b]
    return tuple(params)


def fc_critic_ref_f32(x_nchw, params):
    """Pure f32 reference == the PyTorch FCCritic forward."""
    B = x_nchw.shape[0]
    h = x_nchw.reshape(B, -1)
    w1, b1, w2, b2, w3, b3, w4, b4 = params
    h = jnp.maximum(h @ w1 + b1, 0.0)
    h = jnp.maximum(h @ w2 + b2, 0.0)
    h = jnp.maximum(h @ w3 + b3, 0.0)
    return (h @ w4 + b4).reshape(-1)


def fc_critic_ref_bf16(x_nchw, params):
    """Reference mirroring the kernel numerics (bf16 MXU operands, f32 accum)."""
    B = x_nchw.shape[0]
    h = x_nchw.reshape(B, -1)
    w1, b1, w2, b2, w3, b3, w4, b4 = params
    bf = jnp.bfloat16
    h = jnp.maximum(jnp.dot(h.astype(bf), w1.astype(bf),
                            preferred_element_type=jnp.float32) + b1, 0.0)
    h = jnp.maximum(jnp.dot(h.astype(bf), w2.astype(bf),
                            preferred_element_type=jnp.float32) + b2, 0.0)
    h = jnp.maximum(jnp.dot(h.astype(bf), w3.astype(bf),
                            preferred_element_type=jnp.float32) + b3, 0.0)
    return (jnp.sum(h * w4.reshape(1, -1), axis=-1)
            + b4.reshape(())).astype(jnp.float32)


if __name__ == "__main__":
    key = jax.random.PRNGKey(0)
    kx, kp = jax.random.split(key)

    # Small example: batch=2, channels=4, spatial=16 -> input_dim = 4*16*16 = 1024
    B, C, H, W = 2, 4, 16, 16
    input_dim = C * H * W

    x = jax.random.normal(kx, (B, C, H, W), jnp.float32)
    params = init_fc_critic_params(kp, input_dim)

    fwd = jax.jit(fc_critic_forward, static_argnames=("batch_tile", "k_tile"))

    out = jax.block_until_ready(fwd(x, params))
    ref16 = jax.block_until_ready(fc_critic_ref_bf16(x, params))
    ref32 = jax.block_until_ready(fc_critic_ref_f32(x, params))

    assert out.shape == (B,)
    assert jnp.allclose(out, ref16, atol=2e-2, rtol=2e-2), (out, ref16)
    assert jnp.allclose(out, ref32, atol=5e-2, rtol=5e-2), (out, ref32)

    # Exercise the K-tiled layer-1 reduction path (2 K steps over D=1024) once.
    out_kt = jax.block_until_ready(fwd(x, params, k_tile=512))
    assert jnp.allclose(out_kt, ref16, atol=2e-2, rtol=2e-2), (out_kt, ref16)

    print("KERNEL_OK")
</pallas_src>

<mosaic_0001>
module attributes {stable_mosaic.version = 11 : i64} {
  func.func @kernel(%arg0: i32, %arg1: i32, %arg2: memref<128x1024xbf16, #tpu.memory_space<vmem>>, %arg3: memref<1024x512xbf16, #tpu.memory_space<vmem>>, %arg4: memref<1x512xf32, #tpu.memory_space<vmem>>, %arg5: memref<512x256xbf16, #tpu.memory_space<vmem>>, %arg6: memref<1x256xf32, #tpu.memory_space<vmem>>, %arg7: memref<256x128xbf16, #tpu.memory_space<vmem>>, %arg8: memref<1x128xf32, #tpu.memory_space<vmem>>, %arg9: memref<1x128xf32, #tpu.memory_space<vmem>>, %arg10: memref<1xf32, #tpu.memory_space<smem>>, %arg11: memref<1x128xf32, #tpu.memory_space<vmem>>, %arg12: memref<128x512xf32, #tpu.memory_space<vmem>>) attributes {dimension_semantics = [#tpu.dimension_semantics<parallel>, #tpu.dimension_semantics<arbitrary>], iteration_bounds = array<i64: 1, 1>, scalar_prefetch = 0 : i64, scratch_operands = 1 : i64, tpu.core_type = #tpu.core_type<tc>, window_params = [{transform_indices = @transform_0, window_bounds = array<i64: 128, 1024>}, {pipeline_mode = #tpu.pipeline_mode<synchronous>, transform_indices = @transform_1, window_bounds = array<i64: 1024, 512>}, {pipeline_mode = #tpu.pipeline_mode<synchronous>, transform_indices = @transform_2, window_bounds = array<i64: 1, 512>}, {pipeline_mode = #tpu.pipeline_mode<synchronous>, transform_indices = @transform_3, window_bounds = array<i64: 512, 256>}, {pipeline_mode = #tpu.pipeline_mode<synchronous>, transform_indices = @transform_4, window_bounds = array<i64: 1, 256>}, {pipeline_mode = #tpu.pipeline_mode<synchronous>, transform_indices = @transform_5, window_bounds = array<i64: 256, 128>}, {pipeline_mode = #tpu.pipeline_mode<synchronous>, transform_indices = @transform_6, window_bounds = array<i64: 1, 128>}, {pipeline_mode = #tpu.pipeline_mode<synchronous>, transform_indices = @transform_7, window_bounds = array<i64: 1, 128>}, {transform_indices = @transform_8, window_bounds = array<i64: 1>}, {transform_indices = @transform_9, window_bounds = array<i64: 1, 128>}]} {
    %c0_i32 = arith.constant 0 : i32
    %0 = arith.cmpi eq, %arg1, %c0_i32 : i32
    %1 = arith.extui %0 : i1 to i32
    %c0_i32_0 = arith.constant 0 : i32
    %2 = arith.cmpi ne, %1, %c0_i32_0 : i32
    scf.if %2 {
      %cst_10 = arith.constant 0.000000e+00 : f32
      %12 = vector.broadcast %cst_10 : f32 to vector<128x512xf32>
      %c0_11 = arith.constant 0 : index
      %c0_12 = arith.constant 0 : index
      %13 = vector.load %arg12[%c0_11, %c0_12] : memref<128x512xf32, #tpu.memory_space<vmem>>, vector<128x512xf32>
      tpu.vector_store %arg12[%c0_11, %c0_12], %12 {strides = array<i32>} : memref<128x512xf32, #tpu.memory_space<vmem>>, vector<128x512xf32>,
    } else {
    }
    %c0 = arith.constant 0 : index
    %c0_1 = arith.constant 0 : index
    %3 = vector.load %arg12[%c0, %c0_1] : memref<128x512xf32, #tpu.memory_space<vmem>>, vector<128x512xf32>
    %c0_2 = arith.constant 0 : index
    %c0_3 = arith.constant 0 : index
    %4 = vector.load %arg2[%c0_2, %c0_3] : memref<128x1024xbf16, #tpu.memory_space<vmem>>, vector<128x1024xbf16>
    %c0_4 = arith.constant 0 : index
    %c0_5 = arith.constant 0 : index
    %5 = vector.load %arg3[%c0_4, %c0_5] : memref<1024x512xbf16, #tpu.memory_space<vmem>>, vector<1024x512xbf16>
    %cst = arith.constant dense<0.000000e+00> : vector<128x512xf32>
    %6 = tpu.matmul %4, %5, %cst {dimension_numbers = #tpu.dot_dimension_numbers<[1], [0], [0], [1], [0, 0, 1, 1], [], []>} : vector<128x1024xbf16>, vector<1024x512xbf16>, vector<128x512xf32> -> vector<128x512xf32>
    %7 = arith.addf %3, %6 : vector<128x512xf32>
    %c0_6 = arith.constant 0 : index
    %c0_7 = arith.constant 0 : index
    %8 = vector.load %arg12[%c0_6, %c0_7] : memref<128x512xf32, #tpu.memory_space<vmem>>, vector<128x512xf32>
    tpu.vector_store %arg12[%c0_6, %c0_7], %7 {strides = array<i32>} : memref<128x512xf32, #tpu.memory_space<vmem>>, vector<128x512xf32>,
    %c0_i32_8 = arith.constant 0 : i32
    %9 = arith.cmpi eq, %arg1, %c0_i32_8 : i32
    %10 = arith.extui %9 : i1 to i32
    %c0_i32_9 = arith.constant 0 : i32
    %11 = arith.cmpi ne, %10, %c0_i32_9 : i32
    scf.if %11 {
      %c0_10 = arith.constant 0 : index
      %c0_11 = arith.constant 0 : index
      %12 = vector.load %arg12[%c0_10, %c0_11] : memref<128x512xf32, #tpu.memory_space<vmem>>, vector<128x512xf32>
      %c0_12 = arith.constant 0 : index
      %c0_13 = arith.constant 0 : index
      %13 = vector.load %arg4[%c0_12, %c0_13] : memref<1x512xf32, #tpu.memory_space<vmem>>, vector<1x512xf32>
      %14 = vector.broadcast %13 : vector<1x512xf32> to vector<128x512xf32>
      %15 = arith.addf %12, %14 : vector<128x512xf32>
      %cst_14 = arith.constant 0.000000e+00 : f32
      %16 = vector.broadcast %cst_14 : f32 to vector<128x512xf32>
      %17 = arith.maximumf %15, %16 : vector<128x512xf32>
      %18 = arith.truncf %17 : vector<128x512xf32> to vector<128x512xbf16>
      %c0_15 = arith.constant 0 : index
      %c0_16 = arith.constant 0 : index
      %19 = vector.load %arg5[%c0_15, %c0_16] : memref<512x256xbf16, #tpu.memory_space<vmem>>, vector<512x256xbf16>
      %cst_17 = arith.constant dense<0.000000e+00> : vector<128x256xf32>
      %20 = tpu.matmul %18, %19, %cst_17 {dimension_numbers = #tpu.dot_dimension_numbers<[1], [0], [0], [1], [0, 0, 1, 1], [], []>} : vector<128x512xbf16>, vector<512x256xbf16>, vector<128x256xf32> -> vector<128x256xf32>
      %c0_18 = arith.constant 0 : index
      %c0_19 = arith.constant 0 : index
      %21 = vector.load %arg6[%c0_18, %c0_19] : memref<1x256xf32, #tpu.memory_space<vmem>>, vector<1x256xf32>
      %22 = vector.broadcast %21 : vector<1x256xf32> to vector<128x256xf32>
      %23 = arith.addf %20, %22 : vector<128x256xf32>
      %cst_20 = arith.constant 0.000000e+00 : f32
      %24 = vector.broadcast %cst_20 : f32 to vector<128x256xf32>
      %25 = arith.maximumf %23, %24 : vector<128x256xf32>
      %26 = arith.truncf %25 : vector<128x256xf32> to vector<128x256xbf16>
      %c0_21 = arith.constant 0 : index
      %c0_22 = arith.constant 0 : index
      %27 = vector.load %arg7[%c0_21, %c0_22] : memref<256x128xbf16, #tpu.memory_space<vmem>>, vector<256x128xbf16>
      %cst_23 = arith.constant dense<0.000000e+00> : vector<128x128xf32>
      %28 = tpu.matmul %26, %27, %cst_23 {dimension_numbers = #tpu.dot_dimension_numbers<[1], [0], [0], [1], [0, 0, 1, 1], [], []>} : vector<128x256xbf16>, vector<256x128xbf16>, vector<128x128xf32> -> vector<128x128xf32>
      %c0_24 = arith.constant 0 : index
      %c0_25 = arith.constant 0 : index
      %29 = vector.load %arg8[%c0_24, %c0_25] : memref<1x128xf32, #tpu.memory_space<vmem>>, vector<1x128xf32>
      %30 = vector.broadcast %29 : vector<1x128xf32> to vector<128x128xf32>
      %31 = arith.addf %28, %30 : vector<128x128xf32>
      %cst_26 = arith.constant 0.000000e+00 : f32
      %32 = vector.broadcast %cst_26 : f32 to vector<128x128xf32>
      %33 = arith.maximumf %31, %32 : vector<128x128xf32>
      %c0_27 = arith.constant 0 : index
      %c0_28 = arith.constant 0 : index
      %34 = vector.load %arg9[%c0_27, %c0_28] : memref<1x128xf32, #tpu.memory_space<vmem>>, vector<1x128xf32>
      %35 = vector.broadcast %34 : vector<1x128xf32> to vector<128x128xf32>
      %36 = arith.mulf %33, %35 : vector<128x128xf32>
      %cst_29 = arith.constant dense<0.000000e+00> : vector<128xf32>
      %37 = vector.multi_reduction <add>, %36, %cst_29 [1] : vector<128x128xf32> to vector<128xf32>
      %c0_30 = arith.constant 0 : index
      %38 = memref.load %arg10[%c0_30] : memref<1xf32, #tpu.memory_space<smem>>
      %39 = vector.shape_cast %37 : vector<128xf32> to vector<1x128xf32>
      %40 = vector.broadcast %38 : f32 to vector<1x128xf32>
      %41 = arith.addf %39, %40 : vector<1x128xf32>
      %c0_31 = arith.constant 0 : index
      %c0_32 = arith.constant 0 : index
      %42 = vector.load %arg11[%c0_31, %c0_32] : memref<1x128xf32, #tpu.memory_space<vmem>>, vector<1x128xf32>
      tpu.vector_store %arg11[%c0_31, %c0_32], %41 {strides = array<i32>} : memref<1x128xf32, #tpu.memory_space<vmem>>, vector<1x128xf32>,
    } else {
    }
    return
  }
  func.func @transform_0(%arg0: i32, %arg1: i32) -> (i32, i32) {
    %c0_i32 = arith.constant 0 : i32
    return %arg0, %arg1 : i32, i32
  }
  func.func @transform_1(%arg0: i32, %arg1: i32) -> (i32, i32) {
    %c0_i32 = arith.constant 0 : i32
    %c0_i32_0 = arith.constant 0 : i32
    return %arg1, %c0_i32 : i32, i32
  }
  func.func @transform_2(%arg0: i32, %arg1: i32) -> (i32, i32) {
    %c0_i32 = arith.constant 0 : i32
    %c0_i32_0 = arith.constant 0 : i32
    %c0_i32_1 = arith.constant 0 : i32
    return %c0_i32, %c0_i32_0 : i32, i32
  }
  func.func @transform_3(%arg0: i32, %arg1: i32) -> (i32, i32) {
    %c0_i32 = arith.constant 0 : i32
    %c0_i32_0 = arith.constant 0 : i32
    %c0_i32_1 = arith.constant 0 : i32
    return %c0_i32, %c0_i32_0 : i32, i32
  }
  func.func @transform_4(%arg0: i32, %arg1: i32) -> (i32, i32) {
    %c0_i32 = arith.constant 0 : i32
    %c0_i32_0 = arith.constant 0 : i32
    %c0_i32_1 = arith.constant 0 : i32
    return %c0_i32, %c0_i32_0 : i32, i32
  }
  func.func @transform_5(%arg0: i32, %arg1: i32) -> (i32, i32) {
    %c0_i32 = arith.constant 0 : i32
    %c0_i32_0 = arith.constant 0 : i32
    %c0_i32_1 = arith.constant 0 : i32
    return %c0_i32, %c0_i32_0 : i32, i32
  }
  func.func @transform_6(%arg0: i32, %arg1: i32) -> (i32, i32) {
    %c0_i32 = arith.constant 0 : i32
    %c0_i32_0 = arith.constant 0 : i32
    %c0_i32_1 = arith.constant 0 : i32
    return %c0_i32, %c0_i32_0 : i32, i32
  }
  func.func @transform_7(%arg0: i32, %arg1: i32) -> (i32, i32) {
    %c0_i32 = arith.constant 0 : i32
    %c0_i32_0 = arith.constant 0 : i32
    %c0_i32_1 = arith.constant 0 : i32
    return %c0_i32, %c0_i32_0 : i32, i32
  }
  func.func @transform_8(%arg0: i32, %arg1: i32) -> i32 {
    %c0_i32 = arith.constant 0 : i32
    %c0_i32_0 = arith.constant 0 : i32
    return %c0_i32 : i32
  }
  func.func @transform_9(%arg0: i32, %arg1: i32) -> (i32, i32) {
    %c0_i32 = arith.constant 0 : i32
    %c0_i32_0 = arith.constant 0 : i32
    return %c0_i32, %arg0 : i32, i32
  }
}

</mosaic_0001>

<llo_original>
// kernel: fc_critic_forward.1
$region0: #{fc_critic_forward.1}
  #allocation0 [shape = 'u32[]', space=smem, size = 0x4, offset = 0x4, fixed_abs, tag = 'smem constant byte address 0x4 - core index']
  #allocation1 [shape = 'u32[72,128]{1,0:T(1,128)}', space=vmem, size = 0x9000, scoped, tag = 'internal scratch']
  #allocation2 [shape = 'f32[128,512]{1,0:T(8,128)}', space=vmem, size = 0x40000, scoped, tag = 'scratch operand']
  #allocation3 [shape = 'f32[1]{0:T(128)S(6)}', space=smem, size = 0x200, scoped, tag = 'scoped memory for fc_critic_forward.1']
  %s0 = inlined_call_operand.vmem [shape: bf16[128,1024], index: 0, kind: input, shape index: {}]
  %s1 = inlined_call_operand.vmem [shape: bf16[1024,512], index: 1, kind: input, shape index: {}]
  %s2 = inlined_call_operand.vmem [shape: f32[1,512], index: 2, kind: input, shape index: {}]
  %s3 = inlined_call_operand.vmem [shape: bf16[512,256], index: 3, kind: input, shape index: {}]
  %s4 = inlined_call_operand.vmem [shape: f32[1,256], index: 4, kind: input, shape index: {}]
  %s5 = inlined_call_operand.vmem [shape: bf16[256,128], index: 5, kind: input, shape index: {}]
  %s6 = inlined_call_operand.vmem [shape: f32[1,128], index: 6, kind: input, shape index: {}]
  %s7 = inlined_call_operand.vmem [shape: f32[1,128], index: 7, kind: input, shape index: {}]
  %s8 = inlined_call_operand.<no memory space> [shape: f32[1], index: 8, kind: input, shape index: {}]
  %s9 = inlined_call_operand.vmem [shape: f32[1,128], index: 9, kind: output, shape index: {}]
  %s10 = sld [smem:[#allocation0]]
  $region54: #{fc_critic_forward.1} parent=0
    _
  %s12 = ssub.s32 1, %s10
  %s13 = scalar_select 0, %s12, %s10
  %14 = sst [smem:[#allocation3]] %s8
  // Predicated region
  $region2: #{fc_critic_forward.1} parent=0 // pred_check
    _
  $region3: #{fc_critic_forward.1} parent=0 // pred_check_branch
    %16 = sbr.rel (0) target = $region5
  $region4: #{fc_critic_forward.1} parent=0 // pred_region
    _
  $region5: #{fc_critic_forward.1} parent=0 // pred_fallthru
    _
  // Predicated region
  $region6: #{fc_critic_forward.1} parent=0 // pred_check
    _
  $region7: #{fc_critic_forward.1} parent=0 // pred_check_branch
    %18 = sbr.rel (0) target = $region9
  $region8: #{fc_critic_forward.1} parent=0 // pred_region
    _
  $region9: #{fc_critic_forward.1} parent=0 // pred_fallthru
    _
  // Predicated region
  $region10: #{fc_critic_forward.1} parent=0 // pred_check
    _
  $region11: #{fc_critic_forward.1} parent=0 // pred_check_branch
    %20 = sbr.rel (0) target = $region13
  $region12: #{fc_critic_forward.1} parent=0 // pred_region
    _
  $region13: #{fc_critic_forward.1} parent=0 // pred_fallthru
    _
  // Predicated region
  $region14: #{fc_critic_forward.1} parent=0 // pred_check
    _
  $region15: #{fc_critic_forward.1} parent=0 // pred_check_branch
    %22 = sbr.rel (0) target = $region17
  $region16: #{fc_critic_forward.1} parent=0 // pred_region
    _
  $region17: #{fc_critic_forward.1} parent=0 // pred_fallthru
    _
  // Predicated region
  $region18: #{fc_critic_forward.1} parent=0 // pred_check
    _
  $region19: #{fc_critic_forward.1} parent=0 // pred_check_branch
    %24 = sbr.rel (0) target = $region21
  $region20: #{fc_critic_forward.1} parent=0 // pred_region
    _
  $region21: #{fc_critic_forward.1} parent=0 // pred_fallthru
    _
  // Predicated region
  $region22: #{fc_critic_forward.1} parent=0 // pred_check
    _
  $region23: #{fc_critic_forward.1} parent=0 // pred_check_branch
    %26 = sbr.rel (0) target = $region25
  $region24: #{fc_critic_forward.1} parent=0 // pred_region
    _
  $region25: #{fc_critic_forward.1} parent=0 // pred_fallthru
    _
  // Predicated region
  $region26: #{fc_critic_forward.1} parent=0 // pred_check
    _
  $region27: #{fc_critic_forward.1} parent=0 // pred_check_branch
    %28 = sbr.rel (0) target = $region29
  $region28: #{fc_critic_forward.1} parent=0 // pred_region
    _
  $region29: #{fc_critic_forward.1} parent=0 // pred_fallthru
    _
  // Predicated region
  $region30: #{fc_critic_forward.1} parent=0 // pred_check
    _
  $region31: #{fc_critic_forward.1} parent=0 // pred_check_branch
    %30 = sbr.rel (0) target = $region33
  $region32: #{fc_critic_forward.1} parent=0 // pred_region
    _
  $region33: #{fc_critic_forward.1} parent=0 // pred_fallthru
    _
  // Predicated region
  $region34: #{fc_critic_forward.1} parent=0 // pred_check
    _
  $region35: #{fc_critic_forward.1} parent=0 // pred_check_branch
    %32 = sbr.rel (0) target = $region37
  $region36: #{fc_critic_forward.1} parent=0 // pred_region
    _
  $region37: #{fc_critic_forward.1} parent=0 // pred_fallthru
    _
  %p33 = scmp.eq.s32.totalorder 0, 0
  // Predicated region
  $region38: #{fc_critic_forward.1} parent=0 // pred_check
    %p34 = pneg %p33
  $region39: #{fc_critic_forward.1} parent=0 // pred_check_branch
    %36 = sbr.rel (%p34) target = $region41
  $region40: #{fc_critic_forward.1} parent=0 // pred_region
    %37 = vst [vmem:[#allocation2] sm:$0xff] 0.0
    %38 = vst [vmem:[#allocation2 + $0x8] sm:$0xff] 0.0
    %39 = vst [vmem:[#allocation2 + $0x10] sm:$0xff] 0.0
    %40 = vst [vmem:[#allocation2 + $0x18] sm:$0xff] 0.0
    %41 = vst [vmem:[#allocation2 + $0x20] sm:$0xff] 0.0
    %42 = vst [vmem:[#allocation2 + $0x28] sm:$0xff] 0.0
    %43 = vst [vmem:[#allocation2 + $0x30] sm:$0xff] 0.0
    %44 = vst [vmem:[#allocation2 + $0x38] sm:$0xff] 0.0
    %45 = vst [vmem:[#allocation2 + $0x40] sm:$0xff] 0.0
    %46 = vst [vmem:[#allocation2 + $0x48] sm:$0xff] 0.0
    %47 = vst [vmem:[#allocation2 + $0x50] sm:$0xff] 0.0
    %48 = vst [vmem:[#allocation2 + $0x58] sm:$0xff] 0.0
    %49 = vst [vmem:[#allocation2 + $0x60] sm:$0xff] 0.0
    %50 = vst [vmem:[#allocation2 + $0x68] sm:$0xff] 0.0
    %51 = vst [vmem:[#allocation2 + $0x70] sm:$0xff] 0.0
    %52 = vst [vmem:[#allocation2 + $0x78] sm:$0xff] 0.0
    %53 = vst [vmem:[#allocation2 + $0x80] sm:$0xff] 0.0
    %54 = vst [vmem:[#allocation2 + $0x88] sm:$0xff] 0.0
    %55 = vst [vmem:[#allocation2 + $0x90] sm:$0xff] 0.0
    %56 = vst [vmem:[#allocation2 + $0x98] sm:$0xff] 0.0
    %57 = vst [vmem:[#allocation2 + $0xa0] sm:$0xff] 0.0
    %58 = vst [vmem:[#allocation2 + $0xa8] sm:$0xff] 0.0
    %59 = vst [vmem:[#allocation2 + $0xb0] sm:$0xff] 0.0
    %60 = vst [vmem:[#allocation2 + $0xb8] sm:$0xff] 0.0
    %61 = vst [vmem:[#allocation2 + $0xc0] sm:$0xff] 0.0
    %62 = vst [vmem:[#allocation2 + $0xc8] sm:$0xff] 0.0
    %63 = vst [vmem:[#allocation2 + $0xd0] sm:$0xff] 0.0
    %64 = vst [vmem:[#allocation2 + $0xd8] sm:$0xff] 0.0
    %65 = vst [vmem:[#allocation2 + $0xe0] sm:$0xff] 0.0
    %66 = vst [vmem:[#allocation2 + $0xe8] sm:$0xff] 0.0
    %67 = vst [vmem:[#allocation2 + $0xf0] sm:$0xff] 0.0
    %68 = vst [vmem:[#allocation2 + $0xf8] sm:$0xff] 0.0
    %69 = vst [vmem:[#allocation2 + $0x100] sm:$0xff] 0.0
    %70 = vst [vmem:[#allocation2 + $0x108] sm:$0xff] 0.0
    %71 = vst [vmem:[#allocation2 + $0x110] sm:$0xff] 0.0
    %72 = vst [vmem:[#allocation2 + $0x118] sm:$0xff] 0.0
    %73 = vst [vmem:[#allocation2 + $0x120] sm:$0xff] 0.0
    %74 = vst [vmem:[#allocation2 + $0x128] sm:$0xff] 0.0
    %75 = vst [vmem:[#allocation2 + $0x130] sm:$0xff] 0.0
    %76 = vst [vmem:[#allocation2 + $0x138] sm:$0xff] 0.0
    %77 = vst [vmem:[#allocation2 + $0x140] sm:$0xff] 0.0
    %78 = vst [vmem:[#allocation2 + $0x148] sm:$0xff] 0.0
    %79 = vst [vmem:[#allocation2 + $0x150] sm:$0xff] 0.0
    %80 = vst [vmem:[#allocation2 + $0x158] sm:$0xff] 0.0
    %81 = vst [vmem:[#allocation2 + $0x160] sm:$0xff] 0.0
    %82 = vst [vmem:[#allocation2 + $0x168] sm:$0xff] 0.0
    %83 = vst [vmem:[#allocation2 + $0x170] sm:$0xff] 0.0
    %84 = vst [vmem:[#allocation2 + $0x178] sm:$0xff] 0.0
    %85 = vst [vmem:[#allocation2 + $0x180] sm:$0xff] 0.0
    %86 = vst [vmem:[#allocation2 + $0x188] sm:$0xff] 0.0
    %87 = vst [vmem:[#allocation2 + $0x190] sm:$0xff] 0.0
    %88 = vst [vmem:[#allocation2 + $0x198] sm:$0xff] 0.0
    %89 = vst [vmem:[#allocation2 + $0x1a0] sm:$0xff] 0.0
    %90 = vst [vmem:[#allocation2 + $0x1a8] sm:$0xff] 0.0
    %91 = vst [vmem:[#allocation2 + $0x1b0] sm:$0xff] 0.0
    %92 = vst [vmem:[#allocation2 + $0x1b8] sm:$0xff] 0.0
    %93 = vst [vmem:[#allocation2 + $0x1c0] sm:$0xff] 0.0
    %94 = vst [vmem:[#allocation2 + $0x1c8] sm:$0xff] 0.0
    %95 = vst [vmem:[#allocation2 + $0x1d0] sm:$0xff] 0.0
    %96 = vst [vmem:[#allocation2 + $0x1d8] sm:$0xff] 0.0
    %97 = vst [vmem:[#allocation2 + $0x1e0] sm:$0xff] 0.0
    %98 = vst [vmem:[#allocation2 + $0x1e8] sm:$0xff] 0.0
    %99 = vst [vmem:[#allocation2 + $0x1f0] sm:$0xff] 0.0
    %100 = vst [vmem:[#allocation2 + $0x1f8] sm:$0xff] 0.0
  $region41: #{fc_critic_forward.1} parent=0 // pred_fallthru
    _
  %v101 = vld [vmem:[#allocation2] sm:$0xff]
  %v102 = vld [vmem:[#allocation2 + $0x8] sm:$0xff]
  %v103 = vld [vmem:[#allocation2 + $0x10] sm:$0xff]
  %v104 = vld [vmem:[#allocation2 + $0x18] sm:$0xff]
  %v105 = vld [vmem:[#allocation2 + $0x20] sm:$0xff]
  %v106 = vld [vmem:[#allocation2 + $0x28] sm:$0xff]
  %v107 = vld [vmem:[#allocation2 + $0x30] sm:$0xff]
  %v108 = vld [vmem:[#allocation2 + $0x38] sm:$0xff]
  %v109 = vld [vmem:[#allocation2 + $0x40] sm:$0xff]
  %v110 = vld [vmem:[#allocation2 + $0x48] sm:$0xff]
  %v111 = vld [vmem:[#allocation2 + $0x50] sm:$0xff]
  %v112 = vld [vmem:[#allocation2 + $0x58] sm:$0xff]
  %v113 = vld [vmem:[#allocation2 + $0x60] sm:$0xff]
  %v114 = vld [vmem:[#allocation2 + $0x68] sm:$0xff]
  %v115 = vld [vmem:[#allocation2 + $0x70] sm:$0xff]
  %v116 = vld [vmem:[#allocation2 + $0x78] sm:$0xff]
  %v117 = vld [vmem:[#allocation2 + $0x80] sm:$0xff]
  %v118 = vld [vmem:[#allocation2 + $0x88] sm:$0xff]
  %v119 = vld [vmem:[#allocation2 + $0x90] sm:$0xff]
  %v120 = vld [vmem:[#allocation2 + $0x98] sm:$0xff]
  %v121 = vld [vmem:[#allocation2 + $0xa0] sm:$0xff]
  %v122 = vld [vmem:[#allocation2 + $0xa8] sm:$0xff]
  %v123 = vld [vmem:[#allocation2 + $0xb0] sm:$0xff]
  %v124 = vld [vmem:[#allocation2 + $0xb8] sm:$0xff]
  %v125 = vld [vmem:[#allocation2 + $0xc0] sm:$0xff]
  %v126 = vld [vmem:[#allocation2 + $0xc8] sm:$0xff]
  %v127 = vld [vmem:[#allocation2 + $0xd0] sm:$0xff]
  %v128 = vld [vmem:[#allocation2 + $0xd8] sm:$0xff]
  %v129 = vld [vmem:[#allocation2 + $0xe0] sm:$0xff]
  %v130 = vld [vmem:[#allocation2 + $0xe8] sm:$0xff]
  %v131 = vld [vmem:[#allocation2 + $0xf0] sm:$0xff]
  %v132 = vld [vmem:[#allocation2 + $0xf8] sm:$0xff]
  %v133 = vld [vmem:[#allocation2 + $0x100] sm:$0xff]
  %v134 = vld [vmem:[#allocation2 + $0x108] sm:$0xff]
  %v135 = vld [vmem:[#allocation2 + $0x110] sm:$0xff]
  %v136 = vld [vmem:[#allocation2 + $0x118] sm:$0xff]
  %v137 = vld [vmem:[#allocation2 + $0x120] sm:$0xff]
  %v138 = vld [vmem:[#allocation2 + $0x128] sm:$0xff]
  %v139 = vld [vmem:[#allocation2 + $0x130] sm:$0xff]
  %v140 = vld [vmem:[#allocation2 + $0x138] sm:$0xff]
  %v141 = vld [vmem:[#allocation2 + $0x140] sm:$0xff]
  %v142 = vld [vmem:[#allocation2 + $0x148] sm:$0xff]
  %v143 = vld [vmem:[#allocation2 + $0x150] sm:$0xff]
  %v144 = vld [vmem:[#allocation2 + $0x158] sm:$0xff]
  %v145 = vld [vmem:[#allocation2 + $0x160] sm:$0xff]
  %v146 = vld [vmem:[#allocation2 + $0x168] sm:$0xff]
  %v147 = vld [vmem:[#allocation2 + $0x170] sm:$0xff]
  %v148 = vld [vmem:[#allocation2 + $0x178] sm:$0xff]
  %v149 = vld [vmem:[#allocation2 + $0x180] sm:$0xff]
  %v150 = vld [vmem:[#allocation2 + $0x188] sm:$0xff]
  %v151 = vld [vmem:[#allocation2 + $0x190] sm:$0xff]
  %v152 = vld [vmem:[#allocation2 + $0x198] sm:$0xff]
  %v153 = vld [vmem:[#allocation2 + $0x1a0] sm:$0xff]
  %v154 = vld [vmem:[#allocation2 + $0x1a8] sm:$0xff]
  %v155 = vld [vmem:[#allocation2 + $0x1b0] sm:$0xff]
  %v156 = vld [vmem:[#allocation2 + $0x1b8] sm:$0xff]
  %v157 = vld [vmem:[#allocation2 + $0x1c0] sm:$0xff]
  %v158 = vld [vmem:[#allocation2 + $0x1c8] sm:$0xff]
  %v159 = vld [vmem:[#allocation2 + $0x1d0] sm:$0xff]
  %v160 = vld [vmem:[#allocation2 + $0x1d8] sm:$0xff]
  %v161 = vld [vmem:[#allocation2 + $0x1e0] sm:$0xff]
  %v162 = vld [vmem:[#allocation2 + $0x1e8] sm:$0xff]
  %v163 = vld [vmem:[#allocation2 + $0x1f0] sm:$0xff]
  %v164 = vld [vmem:[#allocation2 + $0x1f8] sm:$0xff]
  %v165 = vld [vmem:[%s0] sm:$0xff]
  %v166 = vld [vmem:[%s0 + $0x8] sm:$0xff]
  %v167 = vld [vmem:[%s0 + $0x10] sm:$0xff]
  %v168 = vld [vmem:[%s0 + $0x18] sm:$0xff]
  %v169 = vld [vmem:[%s0 + $0x20] sm:$0xff]
  %v170 = vld [vmem:[%s0 + $0x28] sm:$0xff]
  %v171 = vld [vmem:[%s0 + $0x30] sm:$0xff]
  %v172 = vld [vmem:[%s0 + $0x38] sm:$0xff]
  %v173 = vld [vmem:[%s0 + $0x40] sm:$0xff]
  %v174 = vld [vmem:[%s0 + $0x48] sm:$0xff]
  %v175 = vld [vmem:[%s0 + $0x50] sm:$0xff]
  %v176 = vld [vmem:[%s0 + $0x58] sm:$0xff]
  %v177 = vld [vmem:[%s0 + $0x60] sm:$0xff]
  %v178 = vld [vmem:[%s0 + $0x68] sm:$0xff]
  %v179 = vld [vmem:[%s0 + $0x70] sm:$0xff]
  %v180 = vld [vmem:[%s0 + $0x78] sm:$0xff]
  %v181 = vld [vmem:[%s0 + $0x80] sm:$0xff]
  %v182 = vld [vmem:[%s0 + $0x88] sm:$0xff]
  %v183 = vld [vmem:[%s0 + $0x90] sm:$0xff]
  %v184 = vld [vmem:[%s0 + $0x98] sm:$0xff]
  %v185 = vld [vmem:[%s0 + $0xa0] sm:$0xff]
  %v186 = vld [vmem:[%s0 + $0xa8] sm:$0xff]
  %v187 = vld [vmem:[%s0 + $0xb0] sm:$0xff]
  %v188 = vld [vmem:[%s0 + $0xb8] sm:$0xff]
  %v189 = vld [vmem:[%s0 + $0xc0] sm:$0xff]
  %v190 = vld [vmem:[%s0 + $0xc8] sm:$0xff]
  %v191 = vld [vmem:[%s0 + $0xd0] sm:$0xff]
  %v192 = vld [vmem:[%s0 + $0xd8] sm:$0xff]
  %v193 = vld [vmem:[%s0 + $0xe0] sm:$0xff]
  %v194 = vld [vmem:[%s0 + $0xe8] sm:$0xff]
  %v195 = vld [vmem:[%s0 + $0xf0] sm:$0xff]
  %v196 = vld [vmem:[%s0 + $0xf8] sm:$0xff]
  %v197 = vld [vmem:[%s0 + $0x100] sm:$0xff]
  %v198 = vld [vmem:[%s0 + $0x108] sm:$0xff]
  %v199 = vld [vmem:[%s0 + $0x110] sm:$0xff]
  %v200 = vld [vmem:[%s0 + $0x118] sm:$0xff]
  %v201 = vld [vmem:[%s0 + $0x120] sm:$0xff]
  %v202 = vld [vmem:[%s0 + $0x128] sm:$0xff]
  %v203 = vld [vmem:[%s0 + $0x130] sm:$0xff]
  %v204 = vld [vmem:[%s0 + $0x138] sm:$0xff]
  %v205 = vld [vmem:[%s0 + $0x140] sm:$0xff]
  %v206 = vld [vmem:[%s0 + $0x148] sm:$0xff]
  %v207 = vld [vmem:[%s0 + $0x150] sm:$0xff]
  %v208 = vld [vmem:[%s0 + $0x158] sm:$0xff]
  %v209 = vld [vmem:[%s0 + $0x160] sm:$0xff]
  %v210 = vld [vmem:[%s0 + $0x168] sm:$0xff]
  %v211 = vld [vmem:[%s0 + $0x170] sm:$0xff]
  %v212 = vld [vmem:[%s0 + $0x178] sm:$0xff]
  %v213 = vld [vmem:[%s0 + $0x180] sm:$0xff]
  %v214 = vld [vmem:[%s0 + $0x188] sm:$0xff]
  %v215 = vld [vmem:[%s0 + $0x190] sm:$0xff]
  %v216 = vld [vmem:[%s0 + $0x198] sm:$0xff]
  %v217 = vld [vmem:[%s0 + $0x1a0] sm:$0xff]
  %v218 = vld [vmem:[%s0 + $0x1a8] sm:$0xff]
  %v219 = vld [vmem:[%s0 + $0x1b0] sm:$0xff]
  %v220 = vld [vmem:[%s0 + $0x1b8] sm:$0xff]
  %v221 = vld [vmem:[%s0 + $0x1c0] sm:$0xff]
  %v222 = vld [vmem:[%s0 + $0x1c8] sm:$0xff]
  %v223 = vld [vmem:[%s0 + $0x1d0] sm:$0xff]
  %v224 = vld [vmem:[%s0 + $0x1d8] sm:$0xff]
  %v225 = vld [vmem:[%s0 + $0x1e0] sm:$0xff]
  %v226 = vld [vmem:[%s0 + $0x1e8] sm:$0xff]
  %v227 = vld [vmem:[%s0 + $0x1f0] sm:$0xff]
  %v228 = vld [vmem:[%s0 + $0x1f8] sm:$0xff]
  %v229 = vld [vmem:[%s1] sm:$0xff]
  %v230 = vld [vmem:[%s1 + $0x8] sm:$0xff]
  %v231 = vld [vmem:[%s1 + $0x10] sm:$0xff]
  %v232 = vld [vmem:[%s1 + $0x18] sm:$0xff]
  %v233 = vld [vmem:[%s1 + $0x20] sm:$0xff]
  %v234 = vld [vmem:[%s1 + $0x28] sm:$0xff]
  %v235 = vld [vmem:[%s1 + $0x30] sm:$0xff]
  %v236 = vld [vmem:[%s1 + $0x38] sm:$0xff]
  %v237 = vld [vmem:[%s1 + $0x40] sm:$0xff]
  %v238 = vld [vmem:[%s1 + $0x48] sm:$0xff]
  %v239 = vld [vmem:[%s1 + $0x50] sm:$0xff]
  %v240 = vld [vmem:[%s1 + $0x58] sm:$0xff]
  %v241 = vld [vmem:[%s1 + $0x60] sm:$0xff]
  %v242 = vld [vmem:[%s1 + $0x68] sm:$0xff]
  %v243 = vld [vmem:[%s1 + $0x70] sm:$0xff]
  %v244 = vld [vmem:[%s1 + $0x78] sm:$0xff]
  %v245 = vld [vmem:[%s1 + $0x80] sm:$0xff]
  %v246 = vld [vmem:[%s1 + $0x88] sm:$0xff]
  %v247 = vld [vmem:[%s1 + $0x90] sm:$0xff]
  %v248 = vld [vmem:[%s1 + $0x98] sm:$0xff]
  %v249 = vld [vmem:[%s1 + $0xa0] sm:$0xff]
  %v250 = vld [vmem:[%s1 + $0xa8] sm:$0xff]
  %v251 = vld [vmem:[%s1 + $0xb0] sm:$0xff]
  %v252 = vld [vmem:[%s1 + $0xb8] sm:$0xff]
  %v253 = vld [vmem:[%s1 + $0xc0] sm:$0xff]
  %v254 = vld [vmem:[%s1 + $0xc8] sm:$0xff]
  %v255 = vld [vmem:[%s1 + $0xd0] sm:$0xff]
  %v256 = vld [vmem:[%s1 + $0xd8] sm:$0xff]
  %v257 = vld [vmem:[%s1 + $0xe0] sm:$0xff]
  %v258 = vld [vmem:[%s1 + $0xe8] sm:$0xff]
  %v259 = vld [vmem:[%s1 + $0xf0] sm:$0xff]
  %v260 = vld [vmem:[%s1 + $0xf8] sm:$0xff]
  %v261 = vld [vmem:[%s1 + $0x100] sm:$0xff]
  %v262 = vld [vmem:[%s1 + $0x108] sm:$0xff]
  %v263 = vld [vmem:[%s1 + $0x110] sm:$0xff]
  %v264 = vld [vmem:[%s1 + $0x118] sm:$0xff]
  %v265 = vld [vmem:[%s1 + $0x120] sm:$0xff]
  %v266 = vld [vmem:[%s1 + $0x128] sm:$0xff]
  %v267 = vld [vmem:[%s1 + $0x130] sm:$0xff]
  %v268 = vld [vmem:[%s1 + $0x138] sm:$0xff]
  %v269 = vld [vmem:[%s1 + $0x140] sm:$0xff]
  %v270 = vld [vmem:[%s1 + $0x148] sm:$0xff]
  %v271 = vld [vmem:[%s1 + $0x150] sm:$0xff]
  %v272 = vld [vmem:[%s1 + $0x158] sm:$0xff]
  %v273 = vld [vmem:[%s1 + $0x160] sm:$0xff]
  %v274 = vld [vmem:[%s1 + $0x168] sm:$0xff]
  %v275 = vld [vmem:[%s1 + $0x170] sm:$0xff]
  %v276 = vld [vmem:[%s1 + $0x178] sm:$0xff]
  %v277 = vld [vmem:[%s1 + $0x180] sm:$0xff]
  %v278 = vld [vmem:[%s1 + $0x188] sm:$0xff]
  %v279 = vld [vmem:[%s1 + $0x190] sm:$0xff]
  %v280 = vld [vmem:[%s1 + $0x198] sm:$0xff]
  %v281 = vld [vmem:[%s1 + $0x1a0] sm:$0xff]
  %v282 = vld [vmem:[%s1 + $0x1a8] sm:$0xff]
  %v283 = vld [vmem:[%s1 + $0x1b0] sm:$0xff]
  %v284 = vld [vmem:[%s1 + $0x1b8] sm:$0xff]
  %v285 = vld [vmem:[%s1 + $0x1c0] sm:$0xff]
  %v286 = vld [vmem:[%s1 + $0x1c8] sm:$0xff]
  %v287 = vld [vmem:[%s1 + $0x1d0] sm:$0xff]
  %v288 = vld [vmem:[%s1 + $0x1d8] sm:$0xff]
  %v289 = vld [vmem:[%s1 + $0x1e0] sm:$0xff]
  %v290 = vld [vmem:[%s1 + $0x1e8] sm:$0xff]
  %v291 = vld [vmem:[%s1 + $0x1f0] sm:$0xff]
  %v292 = vld [vmem:[%s1 + $0x1f8] sm:$0xff]
  %v293 = vld [vmem:[%s1 + $0x200] sm:$0xff]
  %v294 = vld [vmem:[%s1 + $0x208] sm:$0xff]
  %v295 = vld [vmem:[%s1 + $0x210] sm:$0xff]
  %v296 = vld [vmem:[%s1 + $0x218] sm:$0xff]
  %v297 = vld [vmem:[%s1 + $0x220] sm:$0xff]
  %v298 = vld [vmem:[%s1 + $0x228] sm:$0xff]
  %v299 = vld [vmem:[%s1 + $0x230] sm:$0xff]
  %v300 = vld [vmem:[%s1 + $0x238] sm:$0xff]
  %v301 = vld [vmem:[%s1 + $0x240] sm:$0xff]
  %v302 = vld [vmem:[%s1 + $0x248] sm:$0xff]
  %v303 = vld [vmem:[%s1 + $0x250] sm:$0xff]
  %v304 = vld [vmem:[%s1 + $0x258] sm:$0xff]
  %v305 = vld [vmem:[%s1 + $0x260] sm:$0xff]
  %v306 = vld [vmem:[%s1 + $0x268] sm:$0xff]
  %v307 = vld [vmem:[%s1 + $0x270] sm:$0xff]
  %v308 = vld [vmem:[%s1 + $0x278] sm:$0xff]
  %v309 = vld [vmem:[%s1 + $0x280] sm:$0xff]
  %v310 = vld [vmem:[%s1 + $0x288] sm:$0xff]
  %v311 = vld [vmem:[%s1 + $0x290] sm:$0xff]
  %v312 = vld [vmem:[%s1 + $0x298] sm:$0xff]
  %v313 = vld [vmem:[%s1 + $0x2a0] sm:$0xff]
  %v314 = vld [vmem:[%s1 + $0x2a8] sm:$0xff]
  %v315 = vld [vmem:[%s1 + $0x2b0] sm:$0xff]
  %v316 = vld [vmem:[%s1 + $0x2b8] sm:$0xff]
  %v317 = vld [vmem:[%s1 + $0x2c0] sm:$0xff]
  %v318 = vld [vmem:[%s1 + $0x2c8] sm:$0xff]
  %v319 = vld [vmem:[%s1 + $0x2d0] sm:$0xff]
  %v320 = vld [vmem:[%s1 + $0x2d8] sm:$0xff]
  %v321 = vld [vmem:[%s1 + $0x2e0] sm:$0xff]
  %v322 = vld [vmem:[%s1 + $0x2e8] sm:$0xff]
  %v323 = vld [vmem:[%s1 + $0x2f0] sm:$0xff]
  %v324 = vld [vmem:[%s1 + $0x2f8] sm:$0xff]
  %v325 = vld [vmem:[%s1 + $0x300] sm:$0xff]
  %v326 = vld [vmem:[%s1 + $0x308] sm:$0xff]
  %v327 = vld [vmem:[%s1 + $0x310] sm:$0xff]
  %v328 = vld [vmem:[%s1 + $0x318] sm:$0xff]
  %v329 = vld [vmem:[%s1 + $0x320] sm:$0xff]
  %v330 = vld [vmem:[%s1 + $0x328] sm:$0xff]
  %v331 = vld [vmem:[%s1 + $0x330] sm:$0xff]
  %v332 = vld [vmem:[%s1 + $0x338] sm:$0xff]
  %v333 = vld [vmem:[%s1 + $0x340] sm:$0xff]
  %v334 = vld [vmem:[%s1 + $0x348] sm:$0xff]
  %v335 = vld [vmem:[%s1 + $0x350] sm:$0xff]
  %v336 = vld [vmem:[%s1 + $0x358] sm:$0xff]
  %v337 = vld [vmem:[%s1 + $0x360] sm:$0xff]
  %v338 = vld [vmem:[%s1 + $0x368] sm:$0xff]
  %v339 = vld [vmem:[%s1 + $0x370] sm:$0xff]
  %v340 = vld [vmem:[%s1 + $0x378] sm:$0xff]
  %v341 = vld [vmem:[%s1 + $0x380] sm:$0xff]
  %v342 = vld [vmem:[%s1 + $0x388] sm:$0xff]
  %v343 = vld [vmem:[%s1 + $0x390] sm:$0xff]
  %v344 = vld [vmem:[%s1 + $0x398] sm:$0xff]
  %v345 = vld [vmem:[%s1 + $0x3a0] sm:$0xff]
  %v346 = vld [vmem:[%s1 + $0x3a8] sm:$0xff]
  %v347 = vld [vmem:[%s1 + $0x3b0] sm:$0xff]
  %v348 = vld [vmem:[%s1 + $0x3b8] sm:$0xff]
  %v349 = vld [vmem:[%s1 + $0x3c0] sm:$0xff]
  %v350 = vld [vmem:[%s1 + $0x3c8] sm:$0xff]
  %v351 = vld [vmem:[%s1 + $0x3d0] sm:$0xff]
  %v352 = vld [vmem:[%s1 + $0x3d8] sm:$0xff]
  %v353 = vld [vmem:[%s1 + $0x3e0] sm:$0xff]
  %v354 = vld [vmem:[%s1 + $0x3e8] sm:$0xff]
  %v355 = vld [vmem:[%s1 + $0x3f0] sm:$0xff]
  %v356 = vld [vmem:[%s1 + $0x3f8] sm:$0xff]
  %v357 = vld [vmem:[%s1 + $0x400] sm:$0xff]
  %v358 = vld [vmem:[%s1 + $0x408] sm:$0xff]
  %v359 = vld [vmem:[%s1 + $0x410] sm:$0xff]
  %v360 = vld [vmem:[%s1 + $0x418] sm:$0xff]
  %v361 = vld [vmem:[%s1 + $0x420] sm:$0xff]
  %v362 = vld [vmem:[%s1 + $0x428] sm:$0xff]
  %v363 = vld [vmem:[%s1 + $0x430] sm:$0xff]
  %v364 = vld [vmem:[%s1 + $0x438] sm:$0xff]
  %v365 = vld [vmem:[%s1 + $0x440] sm:$0xff]
  %v366 = vld [vmem:[%s1 + $0x448] sm:$0xff]
  %v367 = vld [vmem:[%s1 + $0x450] sm:$0xff]
  %v368 = vld [vmem:[%s1 + $0x458] sm:$0xff]
  %v369 = vld [vmem:[%s1 + $0x460] sm:$0xff]
  %v370 = vld [vmem:[%s1 + $0x468] sm:$0xff]
  %v371 = vld [vmem:[%s1 + $0x470] sm:$0xff]
  %v372 = vld [vmem:[%s1 + $0x478] sm:$0xff]
  %v373 = vld [vmem:[%s1 + $0x480] sm:$0xff]
  %v374 = vld [vmem:[%s1 + $0x488] sm:$0xff]
  %v375 = vld [vmem:[%s1 + $0x490] sm:$0xff]
  %v376 = vld [vmem:[%s1 + $0x498] sm:$0xff]
  %v377 = vld [vmem:[%s1 + $0x4a0] sm:$0xff]
  %v378 = vld [vmem:[%s1 + $0x4a8] sm:$0xff]
  %v379 = vld [vmem:[%s1 + $0x4b0] sm:$0xff]
  %v380 = vld [vmem:[%s1 + $0x4b8] sm:$0xff]
  %v381 = vld [vmem:[%s1 + $0x4c0] sm:$0xff]
  %v382 = vld [vmem:[%s1 + $0x4c8] sm:$0xff]
  %v383 = vld [vmem:[%s1 + $0x4d0] sm:$0xff]
  %v384 = vld [vmem:[%s1 + $0x4d8] sm:$0xff]
  %v385 = vld [vmem:[%s1 + $0x4e0] sm:$0xff]
  %v386 = vld [vmem:[%s1 + $0x4e8] sm:$0xff]
  %v387 = vld [vmem:[%s1 + $0x4f0] sm:$0xff]
  %v388 = vld [vmem:[%s1 + $0x4f8] sm:$0xff]
  %v389 = vld [vmem:[%s1 + $0x500] sm:$0xff]
  %v390 = vld [vmem:[%s1 + $0x508] sm:$0xff]
  %v391 = vld [vmem:[%s1 + $0x510] sm:$0xff]
  %v392 = vld [vmem:[%s1 + $0x518] sm:$0xff]
  %v393 = vld [vmem:[%s1 + $0x520] sm:$0xff]
  %v394 = vld [vmem:[%s1 + $0x528] sm:$0xff]
  %v395 = vld [vmem:[%s1 + $0x530] sm:$0xff]
  %v396 = vld [vmem:[%s1 + $0x538] sm:$0xff]
  %v397 = vld [vmem:[%s1 + $0x540] sm:$0xff]
  %v398 = vld [vmem:[%s1 + $0x548] sm:$0xff]
  %v399 = vld [vmem:[%s1 + $0x550] sm:$0xff]
  %v400 = vld [vmem:[%s1 + $0x558] sm:$0xff]
  %v401 = vld [vmem:[%s1 + $0x560] sm:$0xff]
  %v402 = vld [vmem:[%s1 + $0x568] sm:$0xff]
  %v403 = vld [vmem:[%s1 + $0x570] sm:$0xff]
  %v404 = vld [vmem:[%s1 + $0x578] sm:$0xff]
  %v405 = vld [vmem:[%s1 + $0x580] sm:$0xff]
  %v406 = vld [vmem:[%s1 + $0x588] sm:$0xff]
  %v407 = vld [vmem:[%s1 + $0x590] sm:$0xff]
  %v408 = vld [vmem:[%s1 + $0x598] sm:$0xff]
  %v409 = vld [vmem:[%s1 + $0x5a0] sm:$0xff]
  %v410 = vld [vmem:[%s1 + $0x5a8] sm:$0xff]
  %v411 = vld [vmem:[%s1 + $0x5b0] sm:$0xff]
  %v412 = vld [vmem:[%s1 + $0x5b8] sm:$0xff]
  %v413 = vld [vmem:[%s1 + $0x5c0] sm:$0xff]
  %v414 = vld [vmem:[%s1 + $0x5c8] sm:$0xff]
  %v415 = vld [vmem:[%s1 + $0x5d0] sm:$0xff]
  %v416 = vld [vmem:[%s1 + $0x5d8] sm:$0xff]
  %v417 = vld [vmem:[%s1 + $0x5e0] sm:$0xff]
  %v418 = vld [vmem:[%s1 + $0x5e8] sm:$0xff]
  %v419 = vld [vmem:[%s1 + $0x5f0] sm:$0xff]
  %v420 = vld [vmem:[%s1 + $0x5f8] sm:$0xff]
  %v421 = vld [vmem:[%s1 + $0x600] sm:$0xff]
  %v422 = vld [vmem:[%s1 + $0x608] sm:$0xff]
  %v423 = vld [vmem:[%s1 + $0x610] sm:$0xff]
  %v424 = vld [vmem:[%s1 + $0x618] sm:$0xff]
  %v425 = vld [vmem:[%s1 + $0x620] sm:$0xff]
  %v426 = vld [vmem:[%s1 + $0x628] sm:$0xff]
  %v427 = vld [vmem:[%s1 + $0x630] sm:$0xff]
  %v428 = vld [vmem:[%s1 + $0x638] sm:$0xff]
  %v429 = vld [vmem:[%s1 + $0x640] sm:$0xff]
  %v430 = vld [vmem:[%s1 + $0x648] sm:$0xff]
  %v431 = vld [vmem:[%s1 + $0x650] sm:$0xff]
  %v432 = vld [vmem:[%s1 + $0x658] sm:$0xff]
  %v433 = vld [vmem:[%s1 + $0x660] sm:$0xff]
  %v434 = vld [vmem:[%s1 + $0x668] sm:$0xff]
  %v435 = vld [vmem:[%s1 + $0x670] sm:$0xff]
  %v436 = vld [vmem:[%s1 + $0x678] sm:$0xff]
  %v437 = vld [vmem:[%s1 + $0x680] sm:$0xff]
  %v438 = vld [vmem:[%s1 + $0x688] sm:$0xff]
  %v439 = vld [vmem:[%s1 + $0x690] sm:$0xff]
  %v440 = vld [vmem:[%s1 + $0x698] sm:$0xff]
  %v441 = vld [vmem:[%s1 + $0x6a0] sm:$0xff]
  %v442 = vld [vmem:[%s1 + $0x6a8] sm:$0xff]
  %v443 = vld [vmem:[%s1 + $0x6b0] sm:$0xff]
  %v444 = vld [vmem:[%s1 + $0x6b8] sm:$0xff]
  %v445 = vld [vmem:[%s1 + $0x6c0] sm:$0xff]
  %v446 = vld [vmem:[%s1 + $0x6c8] sm:$0xff]
  %v447 = vld [vmem:[%s1 + $0x6d0] sm:$0xff]
  %v448 = vld [vmem:[%s1 + $0x6d8] sm:$0xff]
  %v449 = vld [vmem:[%s1 + $0x6e0] sm:$0xff]
  %v450 = vld [vmem:[%s1 + $0x6e8] sm:$0xff]
  %v451 = vld [vmem:[%s1 + $0x6f0] sm:$0xff]
  %v452 = vld [vmem:[%s1 + $0x6f8] sm:$0xff]
  %v453 = vld [vmem:[%s1 + $0x700] sm:$0xff]
  %v454 = vld [vmem:[%s1 + $0x708] sm:$0xff]
  %v455 = vld [vmem:[%s1 + $0x710] sm:$0xff]
  %v456 = vld [vmem:[%s1 + $0x718] sm:$0xff]
  %v457 = vld [vmem:[%s1 + $0x720] sm:$0xff]
  %v458 = vld [vmem:[%s1 + $0x728] sm:$0xff]
  %v459 = vld [vmem:[%s1 + $0x730] sm:$0xff]
  %v460 = vld [vmem:[%s1 + $0x738] sm:$0xff]
  %v461 = vld [vmem:[%s1 + $0x740] sm:$0xff]
  %v462 = vld [vmem:[%s1 + $0x748] sm:$0xff]
  %v463 = vld [vmem:[%s1 + $0x750] sm:$0xff]
  %v464 = vld [vmem:[%s1 + $0x758] sm:$0xff]
  %v465 = vld [vmem:[%s1 + $0x760] sm:$0xff]
  %v466 = vld [vmem:[%s1 + $0x768] sm:$0xff]
  %v467 = vld [vmem:[%s1 + $0x770] sm:$0xff]
  %v468 = vld [vmem:[%s1 + $0x778] sm:$0xff]
  %v469 = vld [vmem:[%s1 + $0x780] sm:$0xff]
  %v470 = vld [vmem:[%s1 + $0x788] sm:$0xff]
  %v471 = vld [vmem:[%s1 + $0x790] sm:$0xff]
  %v472 = vld [vmem:[%s1 + $0x798] sm:$0xff]
  %v473 = vld [vmem:[%s1 + $0x7a0] sm:$0xff]
  %v474 = vld [vmem:[%s1 + $0x7a8] sm:$0xff]
  %v475 = vld [vmem:[%s1 + $0x7b0] sm:$0xff]
  %v476 = vld [vmem:[%s1 + $0x7b8] sm:$0xff]
  %v477 = vld [vmem:[%s1 + $0x7c0] sm:$0xff]
  %v478 = vld [vmem:[%s1 + $0x7c8] sm:$0xff]
  %v479 = vld [vmem:[%s1 + $0x7d0] sm:$0xff]
  %v480 = vld [vmem:[%s1 + $0x7d8] sm:$0xff]
  %v481 = vld [vmem:[%s1 + $0x7e0] sm:$0xff]
  %v482 = vld [vmem:[%s1 + $0x7e8] sm:$0xff]
  %v483 = vld [vmem:[%s1 + $0x7f0] sm:$0xff]
  %v484 = vld [vmem:[%s1 + $0x7f8] sm:$0xff]
  %v549 = vunpack.c.l.b16 %v165
  %v550 = vunpack.c.h.b16 %v165
  %v551 = vunpack.c.l.b16 %v166
  %v552 = vunpack.c.h.b16 %v166
  %v553 = vunpack.c.l.b16 %v167
  %v554 = vunpack.c.h.b16 %v167
  %v555 = vunpack.c.l.b16 %v168
  %v556 = vunpack.c.h.b16 %v168
  %v557 = vunpack.c.l.b16 %v169
  %v558 = vunpack.c.h.b16 %v169
  %v559 = vunpack.c.l.b16 %v170
  %v560 = vunpack.c.h.b16 %v170
  %v561 = vunpack.c.l.b16 %v171
  %v562 = vunpack.c.h.b16 %v171
  %v563 = vunpack.c.l.b16 %v172
  %v564 = vunpack.c.h.b16 %v172
  %v565 = vunpack.c.l.b16 %v173
  %v566 = vunpack.c.h.b16 %v173
  %v567 = vunpack.c.l.b16 %v174
  %v568 = vunpack.c.h.b16 %v174
  %v569 = vunpack.c.l.b16 %v175
  %v570 = vunpack.c.h.b16 %v175
  %v571 = vunpack.c.l.b16 %v176
  %v572 = vunpack.c.h.b16 %v176
  %v573 = vunpack.c.l.b16 %v177
  %v574 = vunpack.c.h.b16 %v177
  %v575 = vunpack.c.l.b16 %v178
  %v576 = vunpack.c.h.b16 %v178
  %v577 = vunpack.c.l.b16 %v179
  %v578 = vunpack.c.h.b16 %v179
  %v579 = vunpack.c.l.b16 %v180
  %v580 = vunpack.c.h.b16 %v180
  %v581 = vunpack.c.l.b16 %v181
  %v582 = vunpack.c.h.b16 %v181
  %v583 = vunpack.c.l.b16 %v182
  %v584 = vunpack.c.h.b16 %v182
  %v585 = vunpack.c.l.b16 %v183
  %v586 = vunpack.c.h.b16 %v183
  %v587 = vunpack.c.l.b16 %v184
  %v588 = vunpack.c.h.b16 %v184
  %v589 = vunpack.c.l.b16 %v185
  %v590 = vunpack.c.h.b16 %v185
  %v591 = vunpack.c.l.b16 %v186
  %v592 = vunpack.c.h.b16 %v186
  %v593 = vunpack.c.l.b16 %v187
  %v594 = vunpack.c.h.b16 %v187
  %v595 = vunpack.c.l.b16 %v188
  %v596 = vunpack.c.h.b16 %v188
  %v597 = vunpack.c.l.b16 %v189
  %v598 = vunpack.c.h.b16 %v189
  %v599 = vunpack.c.l.b16 %v190
  %v600 = vunpack.c.h.b16 %v190
  %v601 = vunpack.c.l.b16 %v191
  %v602 = vunpack.c.h.b16 %v191
  %v603 = vunpack.c.l.b16 %v192
  %v604 = vunpack.c.h.b16 %v192
  %v605 = vunpack.c.l.b16 %v193
  %v606 = vunpack.c.h.b16 %v193
  %v607 = vunpack.c.l.b16 %v194
  %v608 = vunpack.c.h.b16 %v194
  %v609 = vunpack.c.l.b16 %v195
  %v610 = vunpack.c.h.b16 %v195
  %v611 = vunpack.c.l.b16 %v196
  %v612 = vunpack.c.h.b16 %v196
  %v613 = vunpack.c.l.b16 %v197
  %v614 = vunpack.c.h.b16 %v197
  %v615 = vunpack.c.l.b16 %v198
  %v616 = vunpack.c.h.b16 %v198
  %v617 = vunpack.c.l.b16 %v199
  %v618 = vunpack.c.h.b16 %v199
  %v619 = vunpack.c.l.b16 %v200
  %v620 = vunpack.c.h.b16 %v200
  %v621 = vunpack.c.l.b16 %v201
  %v622 = vunpack.c.h.b16 %v201
  %v623 = vunpack.c.l.b16 %v202
  %v624 = vunpack.c.h.b16 %v202
  %v625 = vunpack.c.l.b16 %v203
  %v626 = vunpack.c.h.b16 %v203
  %v627 = vunpack.c.l.b16 %v204
  %v628 = vunpack.c.h.b16 %v204
  %v629 = vunpack.c.l.b16 %v205
  %v630 = vunpack.c.h.b16 %v205
  %v631 = vunpack.c.l.b16 %v206
  %v632 = vunpack.c.h.b16 %v206
  %v633 = vunpack.c.l.b16 %v207
  %v634 = vunpack.c.h.b16 %v207
  %v635 = vunpack.c.l.b16 %v208
  %v636 = vunpack.c.h.b16 %v208
  %v637 = vunpack.c.l.b16 %v209
  %v638 = vunpack.c.h.b16 %v209
  %v639 = vunpack.c.l.b16 %v210
  %v640 = vunpack.c.h.b16 %v210
  %v641 = vunpack.c.l.b16 %v211
  %v642 = vunpack.c.h.b16 %v211
  %v643 = vunpack.c.l.b16 %v212
  %v644 = vunpack.c.h.b16 %v212
  %v645 = vunpack.c.l.b16 %v213
  %v646 = vunpack.c.h.b16 %v213
  %v647 = vunpack.c.l.b16 %v214
  %v648 = vunpack.c.h.b16 %v214
  %v649 = vunpack.c.l.b16 %v215
  %v650 = vunpack.c.h.b16 %v215
  %v651 = vunpack.c.l.b16 %v216
  %v652 = vunpack.c.h.b16 %v216
  %v653 = vunpack.c.l.b16 %v217
  %v654 = vunpack.c.h.b16 %v217
  %v655 = vunpack.c.l.b16 %v218
  %v656 = vunpack.c.h.b16 %v218
  %v657 = vunpack.c.l.b16 %v219
  %v658 = vunpack.c.h.b16 %v219
  %v659 = vunpack.c.l.b16 %v220
  %v660 = vunpack.c.h.b16 %v220
  %v661 = vunpack.c.l.b16 %v221
  %v662 = vunpack.c.h.b16 %v221
  %v663 = vunpack.c.l.b16 %v222
  %v664 = vunpack.c.h.b16 %v222
  %v665 = vunpack.c.l.b16 %v223
  %v666 = vunpack.c.h.b16 %v223
  %v667 = vunpack.c.l.b16 %v224
  %v668 = vunpack.c.h.b16 %v224
  %v669 = vunpack.c.l.b16 %v225
  %v670 = vunpack.c.h.b16 %v225
  %v671 = vunpack.c.l.b16 %v226
  %v672 = vunpack.c.h.b16 %v226
  %v673 = vunpack.c.l.b16 %v227
  %v674 = vunpack.c.h.b16 %v227
  %v675 = vunpack.c.l.b16 %v228
  %v676 = vunpack.c.h.b16 %v228
  %v677 = vpack.c.b16 %v557, %v549
  %v678 = vpack.c.b16 %v558, %v550
  %v679 = vpack.c.b16 %v559, %v551
  %v680 = vpack.c.b16 %v560, %v552
  %v681 = vpack.c.b16 %v561, %v553
  %v682 = vpack.c.b16 %v562, %v554
  %v683 = vpack.c.b16 %v563, %v555
  %v684 = vpack.c.b16 %v564, %v556
  %v685 = vpack.c.b16 %v573, %v565
  %v686 = vpack.c.b16 %v574, %v566
  %v687 = vpack.c.b16 %v575, %v567
  %v688 = vpack.c.b16 %v576, %v568
  %v689 = vpack.c.b16 %v577, %v569
  %v690 = vpack.c.b16 %v578, %v570
  %v691 = vpack.c.b16 %v579, %v571
  %v692 = vpack.c.b16 %v580, %v572
  %v693 = vpack.c.b16 %v589, %v581
  %v694 = vpack.c.b16 %v590, %v582
  %v695 = vpack.c.b16 %v591, %v583
  %v696 = vpack.c.b16 %v592, %v584
  %v697 = vpack.c.b16 %v593, %v585
  %v698 = vpack.c.b16 %v594, %v586
  %v699 = vpack.c.b16 %v595, %v587
  %v700 = vpack.c.b16 %v596, %v588
  %v701 = vpack.c.b16 %v605, %v597
  %v702 = vpack.c.b16 %v606, %v598
  %v703 = vpack.c.b16 %v607, %v599
  %v704 = vpack.c.b16 %v608, %v600
  %v705 = vpack.c.b16 %v609, %v601
  %v706 = vpack.c.b16 %v610, %v602
  %v707 = vpack.c.b16 %v611, %v603
  %v708 = vpack.c.b16 %v612, %v604
  %v709 = vpack.c.b16 %v621, %v613
  %v710 = vpack.c.b16 %v622, %v614
  %v711 = vpack.c.b16 %v623, %v615
  %v712 = vpack.c.b16 %v624, %v616
  %v713 = vpack.c.b16 %v625, %v617
  %v714 = vpack.c.b16 %v626, %v618
  %v715 = vpack.c.b16 %v627, %v619
  %v716 = vpack.c.b16 %v628, %v620
  %v717 = vpack.c.b16 %v637, %v629
  %v718 = vpack.c.b16 %v638, %v630
  %v719 = vpack.c.b16 %v639, %v631
  %v720 = vpack.c.b16 %v640, %v632
  %v721 = vpack.c.b16 %v641, %v633
  %v722 = vpack.c.b16 %v642, %v634
  %v723 = vpack.c.b16 %v643, %v635
  %v724 = vpack.c.b16 %v644, %v636
  %v725 = vpack.c.b16 %v653, %v645
  %v726 = vpack.c.b16 %v654, %v646
  %v727 = vpack.c.b16 %v655, %v647
  %v728 = vpack.c.b16 %v656, %v648
  %v729 = vpack.c.b16 %v657, %v649
  %v730 = vpack.c.b16 %v658, %v650
  %v731 = vpack.c.b16 %v659, %v651
  %v732 = vpack.c.b16 %v660, %v652
  %v733 = vpack.c.b16 %v669, %v661
  %v734 = vpack.c.b16 %v670, %v662
  %v735 = vpack.c.b16 %v671, %v663
  %v736 = vpack.c.b16 %v672, %v664
  %v737 = vpack.c.b16 %v673, %v665
  %v738 = vpack.c.b16 %v674, %v666
  %v739 = vpack.c.b16 %v675, %v667
  %v740 = vpack.c.b16 %v676, %v668
  %v1061 = vunpack.c.l.b16 %v229
  %v1062 = vunpack.c.h.b16 %v229
  %v1063 = vunpack.c.l.b16 %v230
  %v1064 = vunpack.c.h.b16 %v230
  %v1065 = vunpack.c.l.b16 %v231
  %v1066 = vunpack.c.h.b16 %v231
  %v1067 = vunpack.c.l.b16 %v232
  %v1068 = vunpack.c.h.b16 %v232
  %v1069 = vunpack.c.l.b16 %v233
  %v1070 = vunpack.c.h.b16 %v233
  %v1071 = vunpack.c.l.b16 %v234
  %v1072 = vunpack.c.h.b16 %v234
  %v1073 = vunpack.c.l.b16 %v235
  %v1074 = vunpack.c.h.b16 %v235
  %v1075 = vunpack.c.l.b16 %v236
  %v1076 = vunpack.c.h.b16 %v236
  %v1077 = vunpack.c.l.b16 %v237
  %v1078 = vunpack.c.h.b16 %v237
  %v1079 = vunpack.c.l.b16 %v238
  %v1080 = vunpack.c.h.b16 %v238
  %v1081 = vunpack.c.l.b16 %v239
  %v1082 = vunpack.c.h.b16 %v239
  %v1083 = vunpack.c.l.b16 %v240
  %v1084 = vunpack.c.h.b16 %v240
  %v1085 = vunpack.c.l.b16 %v241
  %v1086 = vunpack.c.h.b16 %v241
  %v1087 = vunpack.c.l.b16 %v242
  %v1088 = vunpack.c.h.b16 %v242
  %v1089 = vunpack.c.l.b16 %v243
  %v1090 = vunpack.c.h.b16 %v243
  %v1091 = vunpack.c.l.b16 %v244
  %v1092 = vunpack.c.h.b16 %v244
  %v1093 = vunpack.c.l.b16 %v245
  %v1094 = vunpack.c.h.b16 %v245
  %v1095 = vunpack.c.l.b16 %v246
  %v1096 = vunpack.c.h.b16 %v246
  %v1097 = vunpack.c.l.b16 %v247
  %v1098 = vunpack.c.h.b16 %v247
  %v1099 = vunpack.c.l.b16 %v248
  %v1100 = vunpack.c.h.b16 %v248
  %v1101 = vunpack.c.l.b16 %v249
  %v1102 = vunpack.c.h.b16 %v249
  %v1103 = vunpack.c.l.b16 %v250
  %v1104 = vunpack.c.h.b16 %v250
  %v1105 = vunpack.c.l.b16 %v251
  %v1106 = vunpack.c.h.b16 %v251
  %v1107 = vunpack.c.l.b16 %v252
  %v1108 = vunpack.c.h.b16 %v252
  %v1109 = vunpack.c.l.b16 %v253
  %v1110 = vunpack.c.h.b16 %v253
  %v1111 = vunpack.c.l.b16 %v254
  %v1112 = vunpack.c.h.b16 %v254
  %v1113 = vunpack.c.l.b16 %v255
  %v1114 = vunpack.c.h.b16 %v255
  %v1115 = vunpack.c.l.b16 %v256
  %v1116 = vunpack.c.h.b16 %v256
  %v1117 = vunpack.c.l.b16 %v257
  %v1118 = vunpack.c.h.b16 %v257
  %v1119 = vunpack.c.l.b16 %v258
  %v1120 = vunpack.c.h.b16 %v258
  %v1121 = vunpack.c.l.b16 %v259
  %v1122 = vunpack.c.h.b16 %v259
  %v1123 = vunpack.c.l.b16 %v260
  %v1124 = vunpack.c.h.b16 %v260
  %v1125 = vunpack.c.l.b16 %v261
  %v1126 = vunpack.c.h.b16 %v261
  %v1127 = vunpack.c.l.b16 %v262
  %v1128 = vunpack.c.h.b16 %v262
  %v1129 = vunpack.c.l.b16 %v263
  %v1130 = vunpack.c.h.b16 %v263
  %v1131 = vunpack.c.l.b16 %v264
  %v1132 = vunpack.c.h.b16 %v264
  %v1133 = vunpack.c.l.b16 %v265
  %v1134 = vunpack.c.h.b16 %v265
  %v1135 = vunpack.c.l.b16 %v266
  %v1136 = vunpack.c.h.b16 %v266
  %v1137 = vunpack.c.l.b16 %v267
  %v1138 = vunpack.c.h.b16 %v267
  %v1139 = vunpack.c.l.b16 %v268
  %v1140 = vunpack.c.h.b16 %v268
  %v1141 = vunpack.c.l.b16 %v269
  %v1142 = vunpack.c.h.b16 %v269
  %v1143 = vunpack.c.l.b16 %v270
  %v1144 = vunpack.c.h.b16 %v270
  %v1145 = vunpack.c.l.b16 %v271
  %v1146 = vunpack.c.h.b16 %v271
  %v1147 = vunpack.c.l.b16 %v272
  %v1148 = vunpack.c.h.b16 %v272
  %v1149 = vunpack.c.l.b16 %v273
  %v1150 = vunpack.c.h.b16 %v273
  %v1151 = vunpack.c.l.b16 %v274
  %v1152 = vunpack.c.h.b16 %v274
  %v1153 = vunpack.c.l.b16 %v275
  %v1154 = vunpack.c.h.b16 %v275
  %v1155 = vunpack.c.l.b16 %v276
  %v1156 = vunpack.c.h.b16 %v276
  %v1157 = vunpack.c.l.b16 %v277
  %v1158 = vunpack.c.h.b16 %v277
  %v1159 = vunpack.c.l.b16 %v278
  %v1160 = vunpack.c.h.b16 %v278
  %v1161 = vunpack.c.l.b16 %v279
  %v1162 = vunpack.c.h.b16 %v279
  %v1163 = vunpack.c.l.b16 %v280
  %v1164 = vunpack.c.h.b16 %v280
  %v1165 = vunpack.c.l.b16 %v281
  %v1166 = vunpack.c.h.b16 %v281
  %v1167 = vunpack.c.l.b16 %v282
  %v1168 = vunpack.c.h.b16 %v282
  %v1169 = vunpack.c.l.b16 %v283
  %v1170 = vunpack.c.h.b16 %v283
  %v1171 = vunpack.c.l.b16 %v284
  %v1172 = vunpack.c.h.b16 %v284
  %v1173 = vunpack.c.l.b16 %v285
  %v1174 = vunpack.c.h.b16 %v285
  %v1175 = vunpack.c.l.b16 %v286
  %v1176 = vunpack.c.h.b16 %v286
  %v1177 = vunpack.c.l.b16 %v287
  %v1178 = vunpack.c.h.b16 %v287
  %v1179 = vunpack.c.l.b16 %v288
  %v1180 = vunpack.c.h.b16 %v288
  %v1181 = vunpack.c.l.b16 %v289
  %v1182 = vunpack.c.h.b16 %v289
  %v1183 = vunpack.c.l.b16 %v290
  %v1184 = vunpack.c.h.b16 %v290
  %v1185 = vunpack.c.l.b16 %v291
  %v1186 = vunpack.c.h.b16 %v291
  %v1187 = vunpack.c.l.b16 %v292
  %v1188 = vunpack.c.h.b16 %v292
  %v1189 = vunpack.c.l.b16 %v293
  %v1190 = vunpack.c.h.b16 %v293
  %v1191 = vunpack.c.l.b16 %v294
  %v1192 = vunpack.c.h.b16 %v294
  %v1193 = vunpack.c.l.b16 %v295
  %v1194 = vunpack.c.h.b16 %v295
  %v1195 = vunpack.c.l.b16 %v296
  %v1196 = vunpack.c.h.b16 %v296
  %v1197 = vunpack.c.l.b16 %v297
  %v1198 = vunpack.c.h.b16 %v297
  %v1199 = vunpack.c.l.b16 %v298
  %v1200 = vunpack.c.h.b16 %v298
  %v1201 = vunpack.c.l.b16 %v299
  %v1202 = vunpack.c.h.b16 %v299
  %v1203 = vunpack.c.l.b16 %v300
  %v1204 = vunpack.c.h.b16 %v300
  %v1205 = vunpack.c.l.b16 %v301
  %v1206 = vunpack.c.h.b16 %v301
  %v1207 = vunpack.c.l.b16 %v302
  %v1208 = vunpack.c.h.b16 %v302
  %v1209 = vunpack.c.l.b16 %v303
  %v1210 = vunpack.c.h.b16 %v303
  %v1211 = vunpack.c.l.b16 %v304
  %v1212 = vunpack.c.h.b16 %v304
  %v1213 = vunpack.c.l.b16 %v305
  %v1214 = vunpack.c.h.b16 %v305
  %v1215 = vunpack.c.l.b16 %v306
  %v1216 = vunpack.c.h.b16 %v306
  %v1217 = vunpack.c.l.b16 %v307
  %v1218 = vunpack.c.h.b16 %v307
  %v1219 = vunpack.c.l.b16 %v308
  %v1220 = vunpack.c.h.b16 %v308
  %v1221 = vunpack.c.l.b16 %v309
  %v1222 = vunpack.c.h.b16 %v309
  %v1223 = vunpack.c.l.b16 %v310
  %v1224 = vunpack.c.h.b16 %v310
  %v1225 = vunpack.c.l.b16 %v311
  %v1226 = vunpack.c.h.b16 %v311
  %v1227 = vunpack.c.l.b16 %v312
  %v1228 = vunpack.c.h.b16 %v312
  %v1229 = vunpack.c.l.b16 %v313
  %v1230 = vunpack.c.h.b16 %v313
  %v1231 = vunpack.c.l.b16 %v314
  %v1232 = vunpack.c.h.b16 %v314
  %v1233 = vunpack.c.l.b16 %v315
  %v1234 = vunpack.c.h.b16 %v315
  %v1235 = vunpack.c.l.b16 %v316
  %v1236 = vunpack.c.h.b16 %v316
  %v1237 = vunpack.c.l.b16 %v317
  %v1238 = vunpack.c.h.b16 %v317
  %v1239 = vunpack.c.l.b16 %v318
  %v1240 = vunpack.c.h.b16 %v318
  %v1241 = vunpack.c.l.b16 %v319
  %v1242 = vunpack.c.h.b16 %v319
  %v1243 = vunpack.c.l.b16 %v320
  %v1244 = vunpack.c.h.b16 %v320
  %v1245 = vunpack.c.l.b16 %v321
  %v1246 = vunpack.c.h.b16 %v321
  %v1247 = vunpack.c.l.b16 %v322
  %v1248 = vunpack.c.h.b16 %v322
  %v1249 = vunpack.c.l.b16 %v323
  %v1250 = vunpack.c.h.b16 %v323
  %v1251 = vunpack.c.l.b16 %v324
  %v1252 = vunpack.c.h.b16 %v324
  %v1253 = vunpack.c.l.b16 %v325
  %v1254 = vunpack.c.h.b16 %v325
  %v1255 = vunpack.c.l.b16 %v326
  %v1256 = vunpack.c.h.b16 %v326
  %v1257 = vunpack.c.l.b16 %v327
  %v1258 = vunpack.c.h.b16 %v327
  %v1259 = vunpack.c.l.b16 %v328
  %v1260 = vunpack.c.h.b16 %v328
  %v1261 = vunpack.c.l.b16 %v329
  %v1262 = vunpack.c.h.b16 %v329
  %v1263 = vunpack.c.l.b16 %v330
  %v1264 = vunpack.c.h.b16 %v330
  %v1265 = vunpack.c.l.b16 %v331
  %v1266 = vunpack.c.h.b16 %v331
  %v1267 = vunpack.c.l.b16 %v332
  %v1268 = vunpack.c.h.b16 %v332
  %v1269 = vunpack.c.l.b16 %v333
  %v1270 = vunpack.c.h.b16 %v333
  %v1271 = vunpack.c.l.b16 %v334
  %v1272 = vunpack.c.h.b16 %v334
  %v1273 = vunpack.c.l.b16 %v335
  %v1274 = vunpack.c.h.b16 %v335
  %v1275 = vunpack.c.l.b16 %v336
  %v1276 = vunpack.c.h.b16 %v336
  %v1277 = vunpack.c.l.b16 %v337
  %v1278 = vunpack.c.h.b16 %v337
  %v1279 = vunpack.c.l.b16 %v338
  %v1280 = vunpack.c.h.b16 %v338
  %v1281 = vunpack.c.l.b16 %v339
  %v1282 = vunpack.c.h.b16 %v339
  %v1283 = vunpack.c.l.b16 %v340
  %v1284 = vunpack.c.h.b16 %v340
  %v1285 = vunpack.c.l.b16 %v341
  %v1286 = vunpack.c.h.b16 %v341
  %v1287 = vunpack.c.l.b16 %v342
  %v1288 = vunpack.c.h.b16 %v342
  %v1289 = vunpack.c.l.b16 %v343
  %v1290 = vunpack.c.h.b16 %v343
  %v1291 = vunpack.c.l.b16 %v344
  %v1292 = vunpack.c.h.b16 %v344
  %v1293 = vunpack.c.l.b16 %v345
  %v1294 = vunpack.c.h.b16 %v345
  %v1295 = vunpack.c.l.b16 %v346
  %v1296 = vunpack.c.h.b16 %v346
  %v1297 = vunpack.c.l.b16 %v347
  %v1298 = vunpack.c.h.b16 %v347
  %v1299 = vunpack.c.l.b16 %v348
  %v1300 = vunpack.c.h.b16 %v348
  %v1301 = vunpack.c.l.b16 %v349
  %v1302 = vunpack.c.h.b16 %v349
  %v1303 = vunpack.c.l.b16 %v350
  %v1304 = vunpack.c.h.b16 %v350
  %v1305 = vunpack.c.l.b16 %v351
  %v1306 = vunpack.c.h.b16 %v351
  %v1307 = vunpack.c.l.b16 %v352
  %v1308 = vunpack.c.h.b16 %v352
  %v1309 = vunpack.c.l.b16 %v353
  %v1310 = vunpack.c.h.b16 %v353
  %v1311 = vunpack.c.l.b16 %v354
  %v1312 = vunpack.c.h.b16 %v354
  %v1313 = vunpack.c.l.b16 %v355
  %v1314 = vunpack.c.h.b16 %v355
  %v1315 = vunpack.c.l.b16 %v356
  %v1316 = vunpack.c.h.b16 %v356
  %v1317 = vunpack.c.l.b16 %v357
  %v1318 = vunpack.c.h.b16 %v357
  %v1319 = vunpack.c.l.b16 %v358
  %v1320 = vunpack.c.h.b16 %v358
  %v1321 = vunpack.c.l.b16 %v359
  %v1322 = vunpack.c.h.b16 %v359
  %v1323 = vunpack.c.l.b16 %v360
  %v1324 = vunpack.c.h.b16 %v360
  %v1325 = vunpack.c.l.b16 %v361
  %v1326 = vunpack.c.h.b16 %v361
  %v1327 = vunpack.c.l.b16 %v362
  %v1328 = vunpack.c.h.b16 %v362
  %v1329 = vunpack.c.l.b16 %v363
  %v1330 = vunpack.c.h.b16 %v363
  %v1331 = vunpack.c.l.b16 %v364
  %v1332 = vunpack.c.h.b16 %v364
  %v1333 = vunpack.c.l.b16 %v365
  %v1334 = vunpack.c.h.b16 %v365
  %v1335 = vunpack.c.l.b16 %v366
  %v1336 = vunpack.c.h.b16 %v366
  %v1337 = vunpack.c.l.b16 %v367
  %v1338 = vunpack.c.h.b16 %v367
  %v1339 = vunpack.c.l.b16 %v368
  %v1340 = vunpack.c.h.b16 %v368
  %v1341 = vunpack.c.l.b16 %v369
  %v1342 = vunpack.c.h.b16 %v369
  %v1343 = vunpack.c.l.b16 %v370
  %v1344 = vunpack.c.h.b16 %v370
  %v1345 = vunpack.c.l.b16 %v371
  %v1346 = vunpack.c.h.b16 %v371
  %v1347 = vunpack.c.l.b16 %v372
  %v1348 = vunpack.c.h.b16 %v372
  %v1349 = vunpack.c.l.b16 %v373
  %v1350 = vunpack.c.h.b16 %v373
  %v1351 = vunpack.c.l.b16 %v374
  %v1352 = vunpack.c.h.b16 %v374
  %v1353 = vunpack.c.l.b16 %v375
  %v1354 = vunpack.c.h.b16 %v375
  %v1355 = vunpack.c.l.b16 %v376
  %v1356 = vunpack.c.h.b16 %v376
  %v1357 = vunpack.c.l.b16 %v377
  %v1358 = vunpack.c.h.b16 %v377
  %v1359 = vunpack.c.l.b16 %v378
  %v1360 = vunpack.c.h.b16 %v378
  %v1361 = vunpack.c.l.b16 %v379
  %v1362 = vunpack.c.h.b16 %v379
  %v1363 = vunpack.c.l.b16 %v380
  %v1364 = vunpack.c.h.b16 %v380
  %v1365 = vunpack.c.l.b16 %v381
  %v1366 = vunpack.c.h.b16 %v381
  %v1367 = vunpack.c.l.b16 %v382
  %v1368 = vunpack.c.h.b16 %v382
  %v1369 = vunpack.c.l.b16 %v383
  %v1370 = vunpack.c.h.b16 %v383
  %v1371 = vunpack.c.l.b16 %v384
  %v1372 = vunpack.c.h.b16 %v384
  %v1373 = vunpack.c.l.b16 %v385
  %v1374 = vunpack.c.h.b16 %v385
  %v1375 = vunpack.c.l.b16 %v386
  %v1376 = vunpack.c.h.b16 %v386
  %v1377 = vunpack.c.l.b16 %v387
  %v1378 = vunpack.c.h.b16 %v387
  %v1379 = vunpack.c.l.b16 %v388
  %v1380 = vunpack.c.h.b16 %v388
  %v1381 = vunpack.c.l.b16 %v389
  %v1382 = vunpack.c.h.b16 %v389
  %v1383 = vunpack.c.l.b16 %v390
  %v1384 = vunpack.c.h.b16 %v390
  %v1385 = vunpack.c.l.b16 %v391
  %v1386 = vunpack.c.h.b16 %v391
  %v1387 = vunpack.c.l.b16 %v392
  %v1388 = vunpack.c.h.b16 %v392
  %v1389 = vunpack.c.l.b16 %v393
  %v1390 = vunpack.c.h.b16 %v393
  %v1391 = vunpack.c.l.b16 %v394
  %v1392 = vunpack.c.h.b16 %v394
  %v1393 = vunpack.c.l.b16 %v395
  %v1394 = vunpack.c.h.b16 %v395
  %v1395 = vunpack.c.l.b16 %v396
  %v1396 = vunpack.c.h.b16 %v396
  %v1397 = vunpack.c.l.b16 %v397
  %v1398 = vunpack.c.h.b16 %v397
  %v1399 = vunpack.c.l.b16 %v398
  %v1400 = vunpack.c.h.b16 %v398
  %v1401 = vunpack.c.l.b16 %v399
  %v1402 = vunpack.c.h.b16 %v399
  %v1403 = vunpack.c.l.b16 %v400
  %v1404 = vunpack.c.h.b16 %v400
  %v1405 = vunpack.c.l.b16 %v401
  %v1406 = vunpack.c.h.b16 %v401
  %v1407 = vunpack.c.l.b16 %v402
  %v1408 = vunpack.c.h.b16 %v402
  %v1409 = vunpack.c.l.b16 %v403
  %v1410 = vunpack.c.h.b16 %v403
  %v1411 = vunpack.c.l.b16 %v404
  %v1412 = vunpack.c.h.b16 %v404
  %v1413 = vunpack.c.l.b16 %v405
  %v1414 = vunpack.c.h.b16 %v405
  %v1415 = vunpack.c.l.b16 %v406
  %v1416 = vunpack.c.h.b16 %v406
  %v1417 = vunpack.c.l.b16 %v407
  %v1418 = vunpack.c.h.b16 %v407
  %v1419 = vunpack.c.l.b16 %v408
  %v1420 = vunpack.c.h.b16 %v408
  %v1421 = vunpack.c.l.b16 %v409
  %v1422 = vunpack.c.h.b16 %v409
  %v1423 = vunpack.c.l.b16 %v410
  %v1424 = vunpack.c.h.b16 %v410
  %v1425 = vunpack.c.l.b16 %v411
  %v1426 = vunpack.c.h.b16 %v411
  %v1427 = vunpack.c.l.b16 %v412
  %v1428 = vunpack.c.h.b16 %v412
  %v1429 = vunpack.c.l.b16 %v413
  %v1430 = vunpack.c.h.b16 %v413
  %v1431 = vunpack.c.l.b16 %v414
  %v1432 = vunpack.c.h.b16 %v414
  %v1433 = vunpack.c.l.b16 %v415
  %v1434 = vunpack.c.h.b16 %v415
  %v1435 = vunpack.c.l.b16 %v416
  %v1436 = vunpack.c.h.b16 %v416
  %v1437 = vunpack.c.l.b16 %v417
  %v1438 = vunpack.c.h.b16 %v417
  %v1439 = vunpack.c.l.b16 %v418
  %v1440 = vunpack.c.h.b16 %v418
  %v1441 = vunpack.c.l.b16 %v419
  %v1442 = vunpack.c.h.b16 %v419
  %v1443 = vunpack.c.l.b16 %v420
  %v1444 = vunpack.c.h.b16 %v420
  %v1445 = vunpack.c.l.b16 %v421
  %v1446 = vunpack.c.h.b16 %v421
  %v1447 = vunpack.c.l.b16 %v422
  %v1448 = vunpack.c.h.b16 %v422
  %v1449 = vunpack.c.l.b16 %v423
  %v1450 = vunpack.c.h.b16 %v423
  %v1451 = vunpack.c.l.b16 %v424
  %v1452 = vunpack.c.h.b16 %v424
  %v1453 = vunpack.c.l.b16 %v425
  %v1454 = vunpack.c.h.b16 %v425
  %v1455 = vunpack.c.l.b16 %v426
  %v1456 = vunpack.c.h.b16 %v426
  %v1457 = vunpack.c.l.b16 %v427
  %v1458 = vunpack.c.h.b16 %v427
  %v1459 = vunpack.c.l.b16 %v428
  %v1460 = vunpack.c.h.b16 %v428
  %v1461 = vunpack.c.l.b16 %v429
  %v1462 = vunpack.c.h.b16 %v429
  %v1463 = vunpack.c.l.b16 %v430
  %v1464 = vunpack.c.h.b16 %v430
  %v1465 = vunpack.c.l.b16 %v431
  %v1466 = vunpack.c.h.b16 %v431
  %v1467 = vunpack.c.l.b16 %v432
  %v1468 = vunpack.c.h.b16 %v432
  %v1469 = vunpack.c.l.b16 %v433
  %v1470 = vunpack.c.h.b16 %v433
  %v1471 = vunpack.c.l.b16 %v434
  %v1472 = vunpack.c.h.b16 %v434
  %v1473 = vunpack.c.l.b16 %v435
  %v1474 = vunpack.c.h.b16 %v435
  %v1475 = vunpack.c.l.b16 %v436
  %v1476 = vunpack.c.h.b16 %v436
  %v1477 = vunpack.c.l.b16 %v437
  %v1478 = vunpack.c.h.b16 %v437
  %v1479 = vunpack.c.l.b16 %v438
  %v1480 = vunpack.c.h.b16 %v438
  %v1481 = vunpack.c.l.b16 %v439
  %v1482 = vunpack.c.h.b16 %v439
  %v1483 = vunpack.c.l.b16 %v440
  %v1484 = vunpack.c.h.b16 %v440
  %v1485 = vunpack.c.l.b16 %v441
  %v1486 = vunpack.c.h.b16 %v441
  %v1487 = vunpack.c.l.b16 %v442
  %v1488 = vunpack.c.h.b16 %v442
  %v1489 = vunpack.c.l.b16 %v443
  %v1490 = vunpack.c.h.b16 %v443
  %v1491 = vunpack.c.l.b16 %v444
  %v1492 = vunpack.c.h.b16 %v444
  %v1493 = vunpack.c.l.b16 %v445
  %v1494 = vunpack.c.h.b16 %v445
  %v1495 = vunpack.c.l.b16 %v446
  %v1496 = vunpack.c.h.b16 %v446
  %v1497 = vunpack.c.l.b16 %v447
  %v1498 = vunpack.c.h.b16 %v447
  %v1499 = vunpack.c.l.b16 %v448
  %v1500 = vunpack.c.h.b16 %v448
  %v1501 = vunpack.c.l.b16 %v449
  %v1502 = vunpack.c.h.b16 %v449
  %v1503 = vunpack.c.l.b16 %v450
  %v1504 = vunpack.c.h.b16 %v450
  %v1505 = vunpack.c.l.b16 %v451
  %v1506 = vunpack.c.h.b16 %v451
  %v1507 = vunpack.c.l.b16 %v452
  %v1508 = vunpack.c.h.b16 %v452
  %v1509 = vunpack.c.l.b16 %v453
  %v1510 = vunpack.c.h.b16 %v453
  %v1511 = vunpack.c.l.b16 %v454
  %v1512 = vunpack.c.h.b16 %v454
  %v1513 = vunpack.c.l.b16 %v455
  %v1514 = vunpack.c.h.b16 %v455
  %v1515 = vunpack.c.l.b16 %v456
  %v1516 = vunpack.c.h.b16 %v456
  %v1517 = vunpack.c.l.b16 %v457
  %v1518 = vunpack.c.h.b16 %v457
  %v1519 = vunpack.c.l.b16 %v458
  %v1520 = vunpack.c.h.b16 %v458
  %v1521 = vunpack.c.l.b16 %v459
  %v1522 = vunpack.c.h.b16 %v459
  %v1523 = vunpack.c.l.b16 %v460
  %v1524 = vunpack.c.h.b16 %v460
  %v1525 = vunpack.c.l.b16 %v461
  %v1526 = vunpack.c.h.b16 %v461
  %v1527 = vunpack.c.l.b16 %v462
  %v1528 = vunpack.c.h.b16 %v462
  %v1529 = vunpack.c.l.b16 %v463
  %v1530 = vunpack.c.h.b16 %v463
  %v1531 = vunpack.c.l.b16 %v464
  %v1532 = vunpack.c.h.b16 %v464
  %v1533 = vunpack.c.l.b16 %v465
  %v1534 = vunpack.c.h.b16 %v465
  %v1535 = vunpack.c.l.b16 %v466
  %v1536 = vunpack.c.h.b16 %v466
  %v1537 = vunpack.c.l.b16 %v467
  %v1538 = vunpack.c.h.b16 %v467
  %v1539 = vunpack.c.l.b16 %v468
  %v1540 = vunpack.c.h.b16 %v468
  %v1541 = vunpack.c.l.b16 %v469
  %v1542 = vunpack.c.h.b16 %v469
  %v1543 = vunpack.c.l.b16 %v470
  %v1544 = vunpack.c.h.b16 %v470
  %v1545 = vunpack.c.l.b16 %v471
  %v1546 = vunpack.c.h.b16 %v471
  %v1547 = vunpack.c.l.b16 %v472
  %v1548 = vunpack.c.h.b16 %v472
  %v1549 = vunpack.c.l.b16 %v473
  %v1550 = vunpack.c.h.b16 %v473
  %v1551 = vunpack.c.l.b16 %v474
  %v1552 = vunpack.c.h.b16 %v474
  %v1553 = vunpack.c.l.b16 %v475
  %v1554 = vunpack.c.h.b16 %v475
  %v1555 = vunpack.c.l.b16 %v476
  %v1556 = vunpack.c.h.b16 %v476
  %v1557 = vunpack.c.l.b16 %v477
  %v1558 = vunpack.c.h.b16 %v477
  %v1559 = vunpack.c.l.b16 %v478
  %v1560 = vunpack.c.h.b16 %v478
  %v1561 = vunpack.c.l.b16 %v479
  %v1562 = vunpack.c.h.b16 %v479
  %v1563 = vunpack.c.l.b16 %v480
  %v1564 = vunpack.c.h.b16 %v480
  %v1565 = vunpack.c.l.b16 %v481
  %v1566 = vunpack.c.h.b16 %v481
  %v1567 = vunpack.c.l.b16 %v482
  %v1568 = vunpack.c.h.b16 %v482
  %v1569 = vunpack.c.l.b16 %v483
  %v1570 = vunpack.c.h.b16 %v483
  %v1571 = vunpack.c.l.b16 %v484
  %v1572 = vunpack.c.h.b16 %v484
  %v1573 = vpack.c.b16 %v1065, %v1061
  %v1574 = vpack.c.b16 %v1066, %v1062
  %v1575 = vpack.c.b16 %v1067, %v1063
  %v1576 = vpack.c.b16 %v1068, %v1064
  %v1577 = vpack.c.b16 %v1073, %v1069
  %v1578 = vpack.c.b16 %v1074, %v1070
  %v1579 = vpack.c.b16 %v1075, %v1071
  %v1580 = vpack.c.b16 %v1076, %v1072
  %v1581 = vpack.c.b16 %v1081, %v1077
  %v1582 = vpack.c.b16 %v1082, %v1078
  %v1583 = vpack.c.b16 %v1083, %v1079
  %v1584 = vpack.c.b16 %v1084, %v1080
  %v1585 = vpack.c.b16 %v1089, %v1085
  %v1586 = vpack.c.b16 %v1090, %v1086
  %v1587 = vpack.c.b16 %v1091, %v1087
  %v1588 = vpack.c.b16 %v1092, %v1088
  %v1589 = vpack.c.b16 %v1097, %v1093
  %v1590 = vpack.c.b16 %v1098, %v1094
  %v1591 = vpack.c.b16 %v1099, %v1095
  %v1592 = vpack.c.b16 %v1100, %v1096
  %v1593 = vpack.c.b16 %v1105, %v1101
  %v1594 = vpack.c.b16 %v1106, %v1102
  %v1595 = vpack.c.b16 %v1107, %v1103
  %v1596 = vpack.c.b16 %v1108, %v1104
  %v1597 = vpack.c.b16 %v1113, %v1109
  %v1598 = vpack.c.b16 %v1114, %v1110
  %v1599 = vpack.c.b16 %v1115, %v1111
  %v1600 = vpack.c.b16 %v1116, %v1112
  %v1601 = vpack.c.b16 %v1121, %v1117
  %v1602 = vpack.c.b16 %v1122, %v1118
  %v1603 = vpack.c.b16 %v1123, %v1119
  %v1604 = vpack.c.b16 %v1124, %v1120
  %v1605 = vpack.c.b16 %v1129, %v1125
  %v1606 = vpack.c.b16 %v1130, %v1126
  %v1607 = vpack.c.b16 %v1131, %v1127
  %v1608 = vpack.c.b16 %v1132, %v1128
  %v1609 = vpack.c.b16 %v1137, %v1133
  %v1610 = vpack.c.b16 %v1138, %v1134
  %v1611 = vpack.c.b16 %v1139, %v1135
  %v1612 = vpack.c.b16 %v1140, %v1136
  %v1613 = vpack.c.b16 %v1145, %v1141
  %v1614 = vpack.c.b16 %v1146, %v1142
  %v1615 = vpack.c.b16 %v1147, %v1143
  %v1616 = vpack.c.b16 %v1148, %v1144
  %v1617 = vpack.c.b16 %v1153, %v1149
  %v1618 = vpack.c.b16 %v1154, %v1150
  %v1619 = vpack.c.b16 %v1155, %v1151
  %v1620 = vpack.c.b16 %v1156, %v1152
  %v1621 = vpack.c.b16 %v1161, %v1157
  %v1622 = vpack.c.b16 %v1162, %v1158
  %v1623 = vpack.c.b16 %v1163, %v1159
  %v1624 = vpack.c.b16 %v1164, %v1160
  %v1625 = vpack.c.b16 %v1169, %v1165
  %v1626 = vpack.c.b16 %v1170, %v1166
  %v1627 = vpack.c.b16 %v1171, %v1167
  %v1628 = vpack.c.b16 %v1172, %v1168
  %v1629 = vpack.c.b16 %v1177, %v1173
  %v1630 = vpack.c.b16 %v1178, %v1174
  %v1631 = vpack.c.b16 %v1179, %v1175
  %v1632 = vpack.c.b16 %v1180, %v1176
  %v1633 = vpack.c.b16 %v1185, %v1181
  %v1634 = vpack.c.b16 %v1186, %v1182
  %v1635 = vpack.c.b16 %v1187, %v1183
  %v1636 = vpack.c.b16 %v1188, %v1184
  %v1637 = vpack.c.b16 %v1193, %v1189
  %v1638 = vpack.c.b16 %v1194, %v1190
  %v1639 = vpack.c.b16 %v1195, %v1191
  %v1640 = vpack.c.b16 %v1196, %v1192
  %v1641 = vpack.c.b16 %v1201, %v1197
  %v1642 = vpack.c.b16 %v1202, %v1198
  %v1643 = vpack.c.b16 %v1203, %v1199
  %v1644 = vpack.c.b16 %v1204, %v1200
  %v1645 = vpack.c.b16 %v1209, %v1205
  %v1646 = vpack.c.b16 %v1210, %v1206
  %v1647 = vpack.c.b16 %v1211, %v1207
  %v1648 = vpack.c.b16 %v1212, %v1208
  %v1649 = vpack.c.b16 %v1217, %v1213
  %v1650 = vpack.c.b16 %v1218, %v1214
  %v1651 = vpack.c.b16 %v1219, %v1215
  %v1652 = vpack.c.b16 %v1220, %v1216
  %v1653 = vpack.c.b16 %v1225, %v1221
  %v1654 = vpack.c.b16 %v1226, %v1222
  %v1655 = vpack.c.b16 %v1227, %v1223
  %v1656 = vpack.c.b16 %v1228, %v1224
  %v1657 = vpack.c.b16 %v1233, %v1229
  %v1658 = vpack.c.b16 %v1234, %v1230
  %v1659 = vpack.c.b16 %v1235, %v1231
  %v1660 = vpack.c.b16 %v1236, %v1232
  %v1661 = vpack.c.b16 %v1241, %v1237
  %v1662 = vpack.c.b16 %v1242, %v1238
  %v1663 = vpack.c.b16 %v1243, %v1239
  %v1664 = vpack.c.b16 %v1244, %v1240
  %v1665 = vpack.c.b16 %v1249, %v1245
  %v1666 = vpack.c.b16 %v1250, %v1246
  %v1667 = vpack.c.b16 %v1251, %v1247
  %v1668 = vpack.c.b16 %v1252, %v1248
  %v1669 = vpack.c.b16 %v1257, %v1253
  %v1670 = vpack.c.b16 %v1258, %v1254
  %v1671 = vpack.c.b16 %v1259, %v1255
  %v1672 = vpack.c.b16 %v1260, %v1256
  %v1673 = vpack.c.b16 %v1265, %v1261
  %v1674 = vpack.c.b16 %v1266, %v1262
  %v1675 = vpack.c.b16 %v1267, %v1263
  %v1676 = vpack.c.b16 %v1268, %v1264
  %v1677 = vpack.c.b16 %v1273, %v1269
  %v1678 = vpack.c.b16 %v1274, %v1270
  %v1679 = vpack.c.b16 %v1275, %v1271
  %v1680 = vpack.c.b16 %v1276, %v1272
  %v1681 = vpack.c.b16 %v1281, %v1277
  %v1682 = vpack.c.b16 %v1282, %v1278
  %v1683 = vpack.c.b16 %v1283, %v1279
  %v1684 = vpack.c.b16 %v1284, %v1280
  %v1685 = vpack.c.b16 %v1289, %v1285
  %v1686 = vpack.c.b16 %v1290, %v1286
  %v1687 = vpack.c.b16 %v1291, %v1287
  %v1688 = vpack.c.b16 %v1292, %v1288
  %v1689 = vpack.c.b16 %v1297, %v1293
  %v1690 = vpack.c.b16 %v1298, %v1294
  %v1691 = vpack.c.b16 %v1299, %v1295
  %v1692 = vpack.c.b16 %v1300, %v1296
  %v1693 = vpack.c.b16 %v1305, %v1301
  %v1694 = vpack.c.b16 %v1306, %v1302
  %v1695 = vpack.c.b16 %v1307, %v1303
  %v1696 = vpack.c.b16 %v1308, %v1304
  %v1697 = vpack.c.b16 %v1313, %v1309
  %v1698 = vpack.c.b16 %v1314, %v1310
  %v1699 = vpack.c.b16 %v1315, %v1311
  %v1700 = vpack.c.b16 %v1316, %v1312
  %v1701 = vpack.c.b16 %v1321, %v1317
  %v1702 = vpack.c.b16 %v1322, %v1318
  %v1703 = vpack.c.b16 %v1323, %v1319
  %v1704 = vpack.c.b16 %v1324, %v1320
  %v1705 = vpack.c.b16 %v1329, %v1325
  %v1706 = vpack.c.b16 %v1330, %v1326
  %v1707 = vpack.c.b16 %v1331, %v1327
  %v1708 = vpack.c.b16 %v1332, %v1328
  %v1709 = vpack.c.b16 %v1337, %v1333
  %v1710 = vpack.c.b16 %v1338, %v1334
  %v1711 = vpack.c.b16 %v1339, %v1335
  %v1712 = vpack.c.b16 %v1340, %v1336
  %v1713 = vpack.c.b16 %v1345, %v1341
  %v1714 = vpack.c.b16 %v1346, %v1342
  %v1715 = vpack.c.b16 %v1347, %v1343
  %v1716 = vpack.c.b16 %v1348, %v1344
  %v1717 = vpack.c.b16 %v1353, %v1349
  %v1718 = vpack.c.b16 %v1354, %v1350
  %v1719 = vpack.c.b16 %v1355, %v1351
  %v1720 = vpack.c.b16 %v1356, %v1352
  %v1721 = vpack.c.b16 %v1361, %v1357
  %v1722 = vpack.c.b16 %v1362, %v1358
  %v1723 = vpack.c.b16 %v1363, %v1359
  %v1724 = vpack.c.b16 %v1364, %v1360
  %v1725 = vpack.c.b16 %v1369, %v1365
  %v1726 = vpack.c.b16 %v1370, %v1366
  %v1727 = vpack.c.b16 %v1371, %v1367
  %v1728 = vpack.c.b16 %v1372, %v1368
  %v1729 = vpack.c.b16 %v1377, %v1373
  %v1730 = vpack.c.b16 %v1378, %v1374
  %v1731 = vpack.c.b16 %v1379, %v1375
  %v1732 = vpack.c.b16 %v1380, %v1376
  %v1733 = vpack.c.b16 %v1385, %v1381
  %v1734 = vpack.c.b16 %v1386, %v1382
  %v1735 = vpack.c.b16 %v1387, %v1383
  %v1736 = vpack.c.b16 %v1388, %v1384
  %v1737 = vpack.c.b16 %v1393, %v1389
  %v1738 = vpack.c.b16 %v1394, %v1390
  %v1739 = vpack.c.b16 %v1395, %v1391
  %v1740 = vpack.c.b16 %v1396, %v1392
  %v1741 = vpack.c.b16 %v1401, %v1397
  %v1742 = vpack.c.b16 %v1402, %v1398
  %v1743 = vpack.c.b16 %v1403, %v1399
  %v1744 = vpack.c.b16 %v1404, %v1400
  %v1745 = vpack.c.b16 %v1409, %v1405
  %v1746 = vpack.c.b16 %v1410, %v1406
  %v1747 = vpack.c.b16 %v1411, %v1407
  %v1748 = vpack.c.b16 %v1412, %v1408
  %v1749 = vpack.c.b16 %v1417, %v1413
  %v1750 = vpack.c.b16 %v1418, %v1414
  %v1751 = vpack.c.b16 %v1419, %v1415
  %v1752 = vpack.c.b16 %v1420, %v1416
  %v1753 = vpack.c.b16 %v1425, %v1421
  %v1754 = vpack.c.b16 %v1426, %v1422
  %v1755 = vpack.c.b16 %v1427, %v1423
  %v1756 = vpack.c.b16 %v1428, %v1424
  %v1757 = vpack.c.b16 %v1433, %v1429
  %v1758 = vpack.c.b16 %v1434, %v1430
  %v1759 = vpack.c.b16 %v1435, %v1431
  %v1760 = vpack.c.b16 %v1436, %v1432
  %v1761 = vpack.c.b16 %v1441, %v1437
  %v1762 = vpack.c.b16 %v1442, %v1438
  %v1763 = vpack.c.b16 %v1443, %v1439
  %v1764 = vpack.c.b16 %v1444, %v1440
  %v1765 = vpack.c.b16 %v1449, %v1445
  %v1766 = vpack.c.b16 %v1450, %v1446
  %v1767 = vpack.c.b16 %v1451, %v1447
  %v1768 = vpack.c.b16 %v1452, %v1448
  %v1769 = vpack.c.b16 %v1457, %v1453
  %v1770 = vpack.c.b16 %v1458, %v1454
  %v1771 = vpack.c.b16 %v1459, %v1455
  %v1772 = vpack.c.b16 %v1460, %v1456
  %v1773 = vpack.c.b16 %v1465, %v1461
  %v1774 = vpack.c.b16 %v1466, %v1462
  %v1775 = vpack.c.b16 %v1467, %v1463
  %v1776 = vpack.c.b16 %v1468, %v1464
  %v1777 = vpack.c.b16 %v1473, %v1469
  %v1778 = vpack.c.b16 %v1474, %v1470
  %v1779 = vpack.c.b16 %v1475, %v1471
  %v1780 = vpack.c.b16 %v1476, %v1472
  %v1781 = vpack.c.b16 %v1481, %v1477
  %v1782 = vpack.c.b16 %v1482, %v1478
  %v1783 = vpack.c.b16 %v1483, %v1479
  %v1784 = vpack.c.b16 %v1484, %v1480
  %v1785 = vpack.c.b16 %v1489, %v1485
  %v1786 = vpack.c.b16 %v1490, %v1486
  %v1787 = vpack.c.b16 %v1491, %v1487
  %v1788 = vpack.c.b16 %v1492, %v1488
  %v1789 = vpack.c.b16 %v1497, %v1493
  %v1790 = vpack.c.b16 %v1498, %v1494
  %v1791 = vpack.c.b16 %v1499, %v1495
  %v1792 = vpack.c.b16 %v1500, %v1496
  %v1793 = vpack.c.b16 %v1505, %v1501
  %v1794 = vpack.c.b16 %v1506, %v1502
  %v1795 = vpack.c.b16 %v1507, %v1503
  %v1796 = vpack.c.b16 %v1508, %v1504
  %v1797 = vpack.c.b16 %v1513, %v1509
  %v1798 = vpack.c.b16 %v1514, %v1510
  %v1799 = vpack.c.b16 %v1515, %v1511
  %v1800 = vpack.c.b16 %v1516, %v1512
  %v1801 = vpack.c.b16 %v1521, %v1517
  %v1802 = vpack.c.b16 %v1522, %v1518
  %v1803 = vpack.c.b16 %v1523, %v1519
  %v1804 = vpack.c.b16 %v1524, %v1520
  %v1805 = vpack.c.b16 %v1529, %v1525
  %v1806 = vpack.c.b16 %v1530, %v1526
  %v1807 = vpack.c.b16 %v1531, %v1527
  %v1808 = vpack.c.b16 %v1532, %v1528
  %v1809 = vpack.c.b16 %v1537, %v1533
  %v1810 = vpack.c.b16 %v1538, %v1534
  %v1811 = vpack.c.b16 %v1539, %v1535
  %v1812 = vpack.c.b16 %v1540, %v1536
  %v1813 = vpack.c.b16 %v1545, %v1541
  %v1814 = vpack.c.b16 %v1546, %v1542
  %v1815 = vpack.c.b16 %v1547, %v1543
  %v1816 = vpack.c.b16 %v1548, %v1544
  %v1817 = vpack.c.b16 %v1553, %v1549
  %v1818 = vpack.c.b16 %v1554, %v1550
  %v1819 = vpack.c.b16 %v1555, %v1551
  %v1820 = vpack.c.b16 %v1556, %v1552
  %v1821 = vpack.c.b16 %v1561, %v1557
  %v1822 = vpack.c.b16 %v1562, %v1558
  %v1823 = vpack.c.b16 %v1563, %v1559
  %v1824 = vpack.c.b16 %v1564, %v1560
  %v1825 = vpack.c.b16 %v1569, %v1565
  %v1826 = vpack.c.b16 %v1570, %v1566
  %v1827 = vpack.c.b16 %v1571, %v1567
  %v1828 = vpack.c.b16 %v1572, %v1568
  %2085 = vmatpush.bf16.msra.mxu0 %v1601
  %2086 = vmatpush.bf16.msra.mxu0 %v1597
  %2087 = vmatpush.bf16.msra.mxu0 %v1593
  %2088 = vmatpush.bf16.msra.mxu0 %v1589
  %2089 = vmatpush.bf16.msra.mxu0 %v1585
  %2090 = vmatpush.bf16.msra.mxu0 %v1581
  %2091 = vmatpush.bf16.msra.mxu0 %v1577
  %2092 = vmatpush.bf16.msra.mxu0 %v1573
  %2093 = vmatmul.bf16.gmra.mxu0 %v677
  %v2094 = vpop.f32.mrf.mxu0
  %v2095 = vadd.f32 0.0, %v2094
  %v2096 = vpop.f32.mrf.mxu0
  %v2097 = vadd.f32 0.0, %v2096
  %2098 = vmatmul.bf16.gmra.mxu0 %v685
  %v2099 = vpop.f32.mrf.mxu0
  %v2100 = vadd.f32 0.0, %v2099
  %v2101 = vpop.f32.mrf.mxu0
  %v2102 = vadd.f32 0.0, %v2101
  %2103 = vmatmul.bf16.gmra.mxu0 %v693
  %v2104 = vpop.f32.mrf.mxu0
  %v2105 = vadd.f32 0.0, %v2104
  %v2106 = vpop.f32.mrf.mxu0
  %v2107 = vadd.f32 0.0, %v2106
  %2108 = vmatmul.bf16.gmra.mxu0 %v701
  %v2109 = vpop.f32.mrf.mxu0
  %v2110 = vadd.f32 0.0, %v2109
  %v2111 = vpop.f32.mrf.mxu0
  %v2112 = vadd.f32 0.0, %v2111
  %2113 = vmatmul.bf16.gmra.mxu0 %v709
  %v2114 = vpop.f32.mrf.mxu0
  %v2115 = vadd.f32 0.0, %v2114
  %v2116 = vpop.f32.mrf.mxu0
  %v2117 = vadd.f32 0.0, %v2116
  %2118 = vmatmul.bf16.gmra.mxu0 %v717
  %v2119 = vpop.f32.mrf.mxu0
  %v2120 = vadd.f32 0.0, %v2119
  %v2121 = vpop.f32.mrf.mxu0
  %v2122 = vadd.f32 0.0, %v2121
  %2123 = vmatmul.bf16.gmra.mxu0 %v725
  %v2124 = vpop.f32.mrf.mxu0
  %v2125 = vadd.f32 0.0, %v2124
  %v2126 = vpop.f32.mrf.mxu0
  %v2127 = vadd.f32 0.0, %v2126
  %2128 = vmatmul.bf16.gmra.mxu0 %v733
  %v2129 = vpop.f32.mrf.mxu0
  %v2130 = vadd.f32 0.0, %v2129
  %v2131 = vpop.f32.mrf.mxu0
  %v2132 = vadd.f32 0.0, %v2131
  %2133 = vdwg.mxu0
  %2134 = vmatpush.bf16.msra.mxu0 %v1633
  %2135 = vmatpush.bf16.msra.mxu0 %v1629
  %2136 = vmatpush.bf16.msra.mxu0 %v1625
  %2137 = vmatpush.bf16.msra.mxu0 %v1621
  %2138 = vmatpush.bf16.msra.mxu0 %v1617
  %2139 = vmatpush.bf16.msra.mxu0 %v1613
  %2140 = vmatpush.bf16.msra.mxu0 %v1609
  %2141 = vmatpush.bf16.msra.mxu0 %v1605
  %2142 = vmatmul.bf16.gmra.mxu0 %v678
  %v2143 = vpop.f32.mrf.mxu0
  %v2144 = vadd.f32 %v2095, %v2143
  %v2145 = vpop.f32.mrf.mxu0
  %v2146 = vadd.f32 %v2097, %v2145
  %2147 = vmatmul.bf16.gmra.mxu0 %v686
  %v2148 = vpop.f32.mrf.mxu0
  %v2149 = vadd.f32 %v2100, %v2148
  %v2150 = vpop.f32.mrf.mxu0
  %v2151 = vadd.f32 %v2102, %v2150
  %2152 = vmatmul.bf16.gmra.mxu0 %v694
  %v2153 = vpop.f32.mrf.mxu0
  %v2154 = vadd.f32 %v2105, %v2153
  %v2155 = vpop.f32.mrf.mxu0
  %v2156 = vadd.f32 %v2107, %v2155
  %2157 = vmatmul.bf16.gmra.mxu0 %v702
  %v2158 = vpop.f32.mrf.mxu0
  %v2159 = vadd.f32 %v2110, %v2158
  %v2160 = vpop.f32.mrf.mxu0
  %v2161 = vadd.f32 %v2112, %v2160
  %2162 = vmatmul.bf16.gmra.mxu0 %v710
  %v2163 = vpop.f32.mrf.mxu0
  %v2164 = vadd.f32 %v2115, %v2163
  %v2165 = vpop.f32.mrf.mxu0
  %v2166 = vadd.f32 %v2117, %v2165
  %2167 = vmatmul.bf16.gmra.mxu0 %v718
  %v2168 = vpop.f32.mrf.mxu0
  %v2169 = vadd.f32 %v2120, %v2168
  %v2170 = vpop.f32.mrf.mxu0
  %v2171 = vadd.f32 %v2122, %v2170
  %2172 = vmatmul.bf16.gmra.mxu0 %v726
  %v2173 = vpop.f32.mrf.mxu0
  %v2174 = vadd.f32 %v2125, %v2173
  %v2175 = vpop.f32.mrf.mxu0
  %v2176 = vadd.f32 %v2127, %v2175
  %2177 = vmatmul.bf16.gmra.mxu0 %v734
  %v2178 = vpop.f32.mrf.mxu0
  %v2179 = vadd.f32 %v2130, %v2178
  %v2180 = vpop.f32.mrf.mxu0
  %v2181 = vadd.f32 %v2132, %v2180
  %2182 = vdwg.mxu0
  %2183 = vmatpush.bf16.msra.mxu0 %v1665
  %2184 = vmatpush.bf16.msra.mxu0 %v1661
  %2185 = vmatpush.bf16.msra.mxu0 %v1657
  %2186 = vmatpush.bf16.msra.mxu0 %v1653
  %2187 = vmatpush.bf16.msra.mxu0 %v1649
  %2188 = vmatpush.bf16.msra.mxu0 %v1645
  %2189 = vmatpush.bf16.msra.mxu0 %v1641
  %2190 = vmatpush.bf16.msra.mxu0 %v1637
  %2191 = vmatmul.bf16.gmra.mxu0 %v679
  %v2192 = vpop.f32.mrf.mxu0
  %v2193 = vadd.f32 %v2144, %v2192
  %v2194 = vpop.f32.mrf.mxu0
  %v2195 = vadd.f32 %v2146, %v2194
  %2196 = vmatmul.bf16.gmra.mxu0 %v687
  %v2197 = vpop.f32.mrf.mxu0
  %v2198 = vadd.f32 %v2149, %v2197
  %v2199 = vpop.f32.mrf.mxu0
  %v2200 = vadd.f32 %v2151, %v2199
  %2201 = vmatmul.bf16.gmra.mxu0 %v695
  %v2202 = vpop.f32.mrf.mxu0
  %v2203 = vadd.f32 %v2154, %v2202
  %v2204 = vpop.f32.mrf.mxu0
  %v2205 = vadd.f32 %v2156, %v2204
  %2206 = vmatmul.bf16.gmra.mxu0 %v703
  %v2207 = vpop.f32.mrf.mxu0
  %v2208 = vadd.f32 %v2159, %v2207
  %v2209 = vpop.f32.mrf.mxu0
  %v2210 = vadd.f32 %v2161, %v2209
  %2211 = vmatmul.bf16.gmra.mxu0 %v711
  %v2212 = vpop.f32.mrf.mxu0
  %v2213 = vadd.f32 %v2164, %v2212
  %v2214 = vpop.f32.mrf.mxu0
  %v2215 = vadd.f32 %v2166, %v2214
  %2216 = vmatmul.bf16.gmra.mxu0 %v719
  %v2217 = vpop.f32.mrf.mxu0
  %v2218 = vadd.f32 %v2169, %v2217
  %v2219 = vpop.f32.mrf.mxu0
  %v2220 = vadd.f32 %v2171, %v2219
  %2221 = vmatmul.bf16.gmra.mxu0 %v727
  %v2222 = vpop.f32.mrf.mxu0
  %v2223 = vadd.f32 %v2174, %v2222
  %v2224 = vpop.f32.mrf.mxu0
  %v2225 = vadd.f32 %v2176, %v2224
  %2226 = vmatmul.bf16.gmra.mxu0 %v735
  %v2227 = vpop.f32.mrf.mxu0
  %v2228 = vadd.f32 %v2179, %v2227
  %v2229 = vpop.f32.mrf.mxu0
  %v2230 = vadd.f32 %v2181, %v2229
  %2231 = vdwg.mxu0
  %2232 = vmatpush.bf16.msra.mxu0 %v1697
  %2233 = vmatpush.bf16.msra.mxu0 %v1693
  %2234 = vmatpush.bf16.msra.mxu0 %v1689
  %2235 = vmatpush.bf16.msra.mxu0 %v1685
  %2236 = vmatpush.bf16.msra.mxu0 %v1681
  %2237 = vmatpush.bf16.msra.mxu0 %v1677
  %2238 = vmatpush.bf16.msra.mxu0 %v1673
  %2239 = vmatpush.bf16.msra.mxu0 %v1669
  %2240 = vmatmul.bf16.gmra.mxu0 %v680
  %v2241 = vpop.f32.mrf.mxu0
  %v2242 = vadd.f32 %v2193, %v2241
  %v2243 = vpop.f32.mrf.mxu0
  %v2244 = vadd.f32 %v2195, %v2243
  %2245 = vmatmul.bf16.gmra.mxu0 %v688
  %v2246 = vpop.f32.mrf.mxu0
  %v2247 = vadd.f32 %v2198, %v2246
  %v2248 = vpop.f32.mrf.mxu0
  %v2249 = vadd.f32 %v2200, %v2248
  %2250 = vmatmul.bf16.gmra.mxu0 %v696
  %v2251 = vpop.f32.mrf.mxu0
  %v2252 = vadd.f32 %v2203, %v2251
  %v2253 = vpop.f32.mrf.mxu0
  %v2254 = vadd.f32 %v2205, %v2253
  %2255 = vmatmul.bf16.gmra.mxu0 %v704
  %v2256 = vpop.f32.mrf.mxu0
  %v2257 = vadd.f32 %v2208, %v2256
  %v2258 = vpop.f32.mrf.mxu0
  %v2259 = vadd.f32 %v2210, %v2258
  %2260 = vmatmul.bf16.gmra.mxu0 %v712
  %v2261 = vpop.f32.mrf.mxu0
  %v2262 = vadd.f32 %v2213, %v2261
  %v2263 = vpop.f32.mrf.mxu0
  %v2264 = vadd.f32 %v2215, %v2263
  %2265 = vmatmul.bf16.gmra.mxu0 %v720
  %v2266 = vpop.f32.mrf.mxu0
  %v2267 = vadd.f32 %v2218, %v2266
  %v2268 = vpop.f32.mrf.mxu0
  %v2269 = vadd.f32 %v2220, %v2268
  %2270 = vmatmul.bf16.gmra.mxu0 %v728
  %v2271 = vpop.f32.mrf.mxu0
  %v2272 = vadd.f32 %v2223, %v2271
  %v2273 = vpop.f32.mrf.mxu0
  %v2274 = vadd.f32 %v2225, %v2273
  %2275 = vmatmul.bf16.gmra.mxu0 %v736
  %v2276 = vpop.f32.mrf.mxu0
  %v2277 = vadd.f32 %v2228, %v2276
  %v2278 = vpop.f32.mrf.mxu0
  %v2279 = vadd.f32 %v2230, %v2278
  %2280 = vdwg.mxu0
  %2281 = vmatpush.bf16.msra.mxu0 %v1729
  %2282 = vmatpush.bf16.msra.mxu0 %v1725
  %2283 = vmatpush.bf16.msra.mxu0 %v1721
  %2284 = vmatpush.bf16.msra.mxu0 %v1717
  %2285 = vmatpush.bf16.msra.mxu0 %v1713
  %2286 = vmatpush.bf16.msra.mxu0 %v1709
  %2287 = vmatpush.bf16.msra.mxu0 %v1705
  %2288 = vmatpush.bf16.msra.mxu0 %v1701
  %2289 = vmatmul.bf16.gmra.mxu0 %v681
  %v2290 = vpop.f32.mrf.mxu0
  %v2291 = vadd.f32 %v2242, %v2290
  %v2292 = vpop.f32.mrf.mxu0
  %v2293 = vadd.f32 %v2244, %v2292
  %2294 = vmatmul.bf16.gmra.mxu0 %v689
  %v2295 = vpop.f32.mrf.mxu0
  %v2296 = vadd.f32 %v2247, %v2295
  %v2297 = vpop.f32.mrf.mxu0
  %v2298 = vadd.f32 %v2249, %v2297
  %2299 = vmatmul.bf16.gmra.mxu0 %v697
  %v2300 = vpop.f32.mrf.mxu0
  %v2301 = vadd.f32 %v2252, %v2300
  %v2302 = vpop.f32.mrf.mxu0
  %v2303 = vadd.f32 %v2254, %v2302
  %2304 = vmatmul.bf16.gmra.mxu0 %v705
  %v2305 = vpop.f32.mrf.mxu0
  %v2306 = vadd.f32 %v2257, %v2305
  %v2307 = vpop.f32.mrf.mxu0
  %v2308 = vadd.f32 %v2259, %v2307
  %2309 = vmatmul.bf16.gmra.mxu0 %v713
  %v2310 = vpop.f32.mrf.mxu0
  %v2311 = vadd.f32 %v2262, %v2310
  %v2312 = vpop.f32.mrf.mxu0
  %v2313 = vadd.f32 %v2264, %v2312
  %2314 = vmatmul.bf16.gmra.mxu0 %v721
  %v2315 = vpop.f32.mrf.mxu0
  %v2316 = vadd.f32 %v2267, %v2315
  %v2317 = vpop.f32.mrf.mxu0
  %v2318 = vadd.f32 %v2269, %v2317
  %2319 = vmatmul.bf16.gmra.mxu0 %v729
  %v2320 = vpop.f32.mrf.mxu0
  %v2321 = vadd.f32 %v2272, %v2320
  %v2322 = vpop.f32.mrf.mxu0
  %v2323 = vadd.f32 %v2274, %v2322
  %2324 = vmatmul.bf16.gmra.mxu0 %v737
  %v2325 = vpop.f32.mrf.mxu0
  %v2326 = vadd.f32 %v2277, %v2325
  %v2327 = vpop.f32.mrf.mxu0
  %v2328 = vadd.f32 %v2279, %v2327
  %2329 = vdwg.mxu0
  %2330 = vmatpush.bf16.msra.mxu0 %v1761
  %2331 = vmatpush.bf16.msra.mxu0 %v1757
  %2332 = vmatpush.bf16.msra.mxu0 %v1753
  %2333 = vmatpush.bf16.msra.mxu0 %v1749
  %2334 = vmatpush.bf16.msra.mxu0 %v1745
  %2335 = vmatpush.bf16.msra.mxu0 %v1741
  %2336 = vmatpush.bf16.msra.mxu0 %v1737
  %2337 = vmatpush.bf16.msra.mxu0 %v1733
  %2338 = vmatmul.bf16.gmra.mxu0 %v682
  %v2339 = vpop.f32.mrf.mxu0
  %v2340 = vadd.f32 %v2291, %v2339
  %v2341 = vpop.f32.mrf.mxu0
  %v2342 = vadd.f32 %v2293, %v2341
  %2343 = vmatmul.bf16.gmra.mxu0 %v690
  %v2344 = vpop.f32.mrf.mxu0
  %v2345 = vadd.f32 %v2296, %v2344
  %v2346 = vpop.f32.mrf.mxu0
  %v2347 = vadd.f32 %v2298, %v2346
  %2348 = vmatmul.bf16.gmra.mxu0 %v698
  %v2349 = vpop.f32.mrf.mxu0
  %v2350 = vadd.f32 %v2301, %v2349
  %v2351 = vpop.f32.mrf.mxu0
  %v2352 = vadd.f32 %v2303, %v2351
  %2353 = vmatmul.bf16.gmra.mxu0 %v706
  %v2354 = vpop.f32.mrf.mxu0
  %v2355 = vadd.f32 %v2306, %v2354
  %v2356 = vpop.f32.mrf.mxu0
  %v2357 = vadd.f32 %v2308, %v2356
  %2358 = vmatmul.bf16.gmra.mxu0 %v714
  %v2359 = vpop.f32.mrf.mxu0
  %v2360 = vadd.f32 %v2311, %v2359
  %v2361 = vpop.f32.mrf.mxu0
  %v2362 = vadd.f32 %v2313, %v2361
  %2363 = vmatmul.bf16.gmra.mxu0 %v722
  %v2364 = vpop.f32.mrf.mxu0
  %v2365 = vadd.f32 %v2316, %v2364
  %v2366 = vpop.f32.mrf.mxu0
  %v2367 = vadd.f32 %v2318, %v2366
  %2368 = vmatmul.bf16.gmra.mxu0 %v730
  %v2369 = vpop.f32.mrf.mxu0
  %v2370 = vadd.f32 %v2321, %v2369
  %v2371 = vpop.f32.mrf.mxu0
  %v2372 = vadd.f32 %v2323, %v2371
  %2373 = vmatmul.bf16.gmra.mxu0 %v738
  %v2374 = vpop.f32.mrf.mxu0
  %v2375 = vadd.f32 %v2326, %v2374
  %v2376 = vpop.f32.mrf.mxu0
  %v2377 = vadd.f32 %v2328, %v2376
  %2378 = vdwg.mxu0
  %2379 = vmatpush.bf16.msra.mxu0 %v1793
  %2380 = vmatpush.bf16.msra.mxu0 %v1789
  %2381 = vmatpush.bf16.msra.mxu0 %v1785
  %2382 = vmatpush.bf16.msra.mxu0 %v1781
  %2383 = vmatpush.bf16.msra.mxu0 %v1777
  %2384 = vmatpush.bf16.msra.mxu0 %v1773
  %2385 = vmatpush.bf16.msra.mxu0 %v1769
  %2386 = vmatpush.bf16.msra.mxu0 %v1765
  %2387 = vmatmul.bf16.gmra.mxu0 %v683
  %v2388 = vpop.f32.mrf.mxu0
  %v2389 = vadd.f32 %v2340, %v2388
  %v2390 = vpop.f32.mrf.mxu0
  %v2391 = vadd.f32 %v2342, %v2390
  %2392 = vmatmul.bf16.gmra.mxu0 %v691
  %v2393 = vpop.f32.mrf.mxu0
  %v2394 = vadd.f32 %v2345, %v2393
  %v2395 = vpop.f32.mrf.mxu0
  %v2396 = vadd.f32 %v2347, %v2395
  %2397 = vmatmul.bf16.gmra.mxu0 %v699
  %v2398 = vpop.f32.mrf.mxu0
  %v2399 = vadd.f32 %v2350, %v2398
  %v2400 = vpop.f32.mrf.mxu0
  %v2401 = vadd.f32 %v2352, %v2400
  %2402 = vmatmul.bf16.gmra.mxu0 %v707
  %v2403 = vpop.f32.mrf.mxu0
  %v2404 = vadd.f32 %v2355, %v2403
  %v2405 = vpop.f32.mrf.mxu0
  %v2406 = vadd.f32 %v2357, %v2405
  %2407 = vmatmul.bf16.gmra.mxu0 %v715
  %v2408 = vpop.f32.mrf.mxu0
  %v2409 = vadd.f32 %v2360, %v2408
  %v2410 = vpop.f32.mrf.mxu0
  %v2411 = vadd.f32 %v2362, %v2410
  %2412 = vmatmul.bf16.gmra.mxu0 %v723
  %v2413 = vpop.f32.mrf.mxu0
  %v2414 = vadd.f32 %v2365, %v2413
  %v2415 = vpop.f32.mrf.mxu0
  %v2416 = vadd.f32 %v2367, %v2415
  %2417 = vmatmul.bf16.gmra.mxu0 %v731
  %v2418 = vpop.f32.mrf.mxu0
  %v2419 = vadd.f32 %v2370, %v2418
  %v2420 = vpop.f32.mrf.mxu0
  %v2421 = vadd.f32 %v2372, %v2420
  %2422 = vmatmul.bf16.gmra.mxu0 %v739
  %v2423 = vpop.f32.mrf.mxu0
  %v2424 = vadd.f32 %v2375, %v2423
  %v2425 = vpop.f32.mrf.mxu0
  %v2426 = vadd.f32 %v2377, %v2425
  %2427 = vdwg.mxu0
  %2428 = vmatpush.bf16.msra.mxu0 %v1825
  %2429 = vmatpush.bf16.msra.mxu0 %v1821
  %2430 = vmatpush.bf16.msra.mxu0 %v1817
  %2431 = vmatpush.bf16.msra.mxu0 %v1813
  %2432 = vmatpush.bf16.msra.mxu0 %v1809
  %2433 = vmatpush.bf16.msra.mxu0 %v1805
  %2434 = vmatpush.bf16.msra.mxu0 %v1801
  %2435 = vmatpush.bf16.msra.mxu0 %v1797
  %2436 = vmatmul.bf16.gmra.mxu0 %v684
  %v2437 = vpop.f32.mrf.mxu0
  %v2438 = vadd.f32 %v2389, %v2437
  %v2439 = vpop.f32.mrf.mxu0
  %v2440 = vadd.f32 %v2391, %v2439
  %2441 = vmatmul.bf16.gmra.mxu0 %v692
  %v2442 = vpop.f32.mrf.mxu0
  %v2443 = vadd.f32 %v2394, %v2442
  %v2444 = vpop.f32.mrf.mxu0
  %v2445 = vadd.f32 %v2396, %v2444
  %2446 = vmatmul.bf16.gmra.mxu0 %v700
  %v2447 = vpop.f32.mrf.mxu0
  %v2448 = vadd.f32 %v2399, %v2447
  %v2449 = vpop.f32.mrf.mxu0
  %v2450 = vadd.f32 %v2401, %v2449
  %2451 = vmatmul.bf16.gmra.mxu0 %v708
  %v2452 = vpop.f32.mrf.mxu0
  %v2453 = vadd.f32 %v2404, %v2452
  %v2454 = vpop.f32.mrf.mxu0
  %v2455 = vadd.f32 %v2406, %v2454
  %2456 = vmatmul.bf16.gmra.mxu0 %v716
  %v2457 = vpop.f32.mrf.mxu0
  %v2458 = vadd.f32 %v2409, %v2457
  %v2459 = vpop.f32.mrf.mxu0
  %v2460 = vadd.f32 %v2411, %v2459
  %2461 = vmatmul.bf16.gmra.mxu0 %v724
  %v2462 = vpop.f32.mrf.mxu0
  %v2463 = vadd.f32 %v2414, %v2462
  %v2464 = vpop.f32.mrf.mxu0
  %v2465 = vadd.f32 %v2416, %v2464
  %2466 = vmatmul.bf16.gmra.mxu0 %v732
  %v2467 = vpop.f32.mrf.mxu0
  %v2468 = vadd.f32 %v2419, %v2467
  %v2469 = vpop.f32.mrf.mxu0
  %v2470 = vadd.f32 %v2421, %v2469
  %2471 = vmatmul.bf16.gmra.mxu0 %v740
  %v2472 = vpop.f32.mrf.mxu0
  %v2473 = vadd.f32 %v2424, %v2472
  %v2474 = vpop.f32.mrf.mxu0
  %v2475 = vadd.f32 %v2426, %v2474
  %2476 = vdwg.mxu0
  %2477 = vmatpush.bf16.msra.mxu0 %v1602
  %2478 = vmatpush.bf16.msra.mxu0 %v1598
  %2479 = vmatpush.bf16.msra.mxu0 %v1594
  %2480 = vmatpush.bf16.msra.mxu0 %v1590
  %2481 = vmatpush.bf16.msra.mxu0 %v1586
  %2482 = vmatpush.bf16.msra.mxu0 %v1582
  %2483 = vmatpush.bf16.msra.mxu0 %v1578
  %2484 = vmatpush.bf16.msra.mxu0 %v1574
  %2485 = vmatmul.bf16.gmra.mxu0 %v677
  %v2486 = vpop.f32.mrf.mxu0
  %v2487 = vadd.f32 0.0, %v2486
  %v2488 = vpop.f32.mrf.mxu0
  %v2489 = vadd.f32 0.0, %v2488
  %2490 = vmatmul.bf16.gmra.mxu0 %v685
  %v2491 = vpop.f32.mrf.mxu0
  %v2492 = vadd.f32 0.0, %v2491
  %v2493 = vpop.f32.mrf.mxu0
  %v2494 = vadd.f32 0.0, %v2493
  %2495 = vmatmul.bf16.gmra.mxu0 %v693
  %v2496 = vpop.f32.mrf.mxu0
  %v2497 = vadd.f32 0.0, %v2496
  %v2498 = vpop.f32.mrf.mxu0
  %v2499 = vadd.f32 0.0, %v2498
  %2500 = vmatmul.bf16.gmra.mxu0 %v701
  %v2501 = vpop.f32.mrf.mxu0
  %v2502 = vadd.f32 0.0, %v2501
  %v2503 = vpop.f32.mrf.mxu0
  %v2504 = vadd.f32 0.0, %v2503
  %2505 = vmatmul.bf16.gmra.mxu0 %v709
  %v2506 = vpop.f32.mrf.mxu0
  %v2507 = vadd.f32 0.0, %v2506
  %v2508 = vpop.f32.mrf.mxu0
  %v2509 = vadd.f32 0.0, %v2508
  %2510 = vmatmul.bf16.gmra.mxu0 %v717
  %v2511 = vpop.f32.mrf.mxu0
  %v2512 = vadd.f32 0.0, %v2511
  %v2513 = vpop.f32.mrf.mxu0
  %v2514 = vadd.f32 0.0, %v2513
  %2515 = vmatmul.bf16.gmra.mxu0 %v725
  %v2516 = vpop.f32.mrf.mxu0
  %v2517 = vadd.f32 0.0, %v2516
  %v2518 = vpop.f32.mrf.mxu0
  %v2519 = vadd.f32 0.0, %v2518
  %2520 = vmatmul.bf16.gmra.mxu0 %v733
  %v2521 = vpop.f32.mrf.mxu0
  %v2522 = vadd.f32 0.0, %v2521
  %v2523 = vpop.f32.mrf.mxu0
  %v2524 = vadd.f32 0.0, %v2523
  %2525 = vdwg.mxu0
  %2526 = vmatpush.bf16.msra.mxu0 %v1634
  %2527 = vmatpush.bf16.msra.mxu0 %v1630
  %2528 = vmatpush.bf16.msra.mxu0 %v1626
  %2529 = vmatpush.bf16.msra.mxu0 %v1622
  %2530 = vmatpush.bf16.msra.mxu0 %v1618
  %2531 = vmatpush.bf16.msra.mxu0 %v1614
  %2532 = vmatpush.bf16.msra.mxu0 %v1610
  %2533 = vmatpush.bf16.msra.mxu0 %v1606
  %2534 = vmatmul.bf16.gmra.mxu0 %v678
  %v2535 = vpop.f32.mrf.mxu0
  %v2536 = vadd.f32 %v2487, %v2535
  %v2537 = vpop.f32.mrf.mxu0
  %v2538 = vadd.f32 %v2489, %v2537
  %2539 = vmatmul.bf16.gmra.mxu0 %v686
  %v2540 = vpop.f32.mrf.mxu0
  %v2541 = vadd.f32 %v2492, %v2540
  %v2542 = vpop.f32.mrf.mxu0
  %v2543 = vadd.f32 %v2494, %v2542
  %2544 = vmatmul.bf16.gmra.mxu0 %v694
  %v2545 = vpop.f32.mrf.mxu0
  %v2546 = vadd.f32 %v2497, %v2545
  %v2547 = vpop.f32.mrf.mxu0
  %v2548 = vadd.f32 %v2499, %v2547
  %2549 = vmatmul.bf16.gmra.mxu0 %v702
  %v2550 = vpop.f32.mrf.mxu0
  %v2551 = vadd.f32 %v2502, %v2550
  %v2552 = vpop.f32.mrf.mxu0
  %v2553 = vadd.f32 %v2504, %v2552
  %2554 = vmatmul.bf16.gmra.mxu0 %v710
  %v2555 = vpop.f32.mrf.mxu0
  %v2556 = vadd.f32 %v2507, %v2555
  %v2557 = vpop.f32.mrf.mxu0
  %v2558 = vadd.f32 %v2509, %v2557
  %2559 = vmatmul.bf16.gmra.mxu0 %v718
  %v2560 = vpop.f32.mrf.mxu0
  %v2561 = vadd.f32 %v2512, %v2560
  %v2562 = vpop.f32.mrf.mxu0
  %v2563 = vadd.f32 %v2514, %v2562
  %2564 = vmatmul.bf16.gmra.mxu0 %v726
  %v2565 = vpop.f32.mrf.mxu0
  %v2566 = vadd.f32 %v2517, %v2565
  %v2567 = vpop.f32.mrf.mxu0
  %v2568 = vadd.f32 %v2519, %v2567
  %2569 = vmatmul.bf16.gmra.mxu0 %v734
  %v2570 = vpop.f32.mrf.mxu0
  %v2571 = vadd.f32 %v2522, %v2570
  %v2572 = vpop.f32.mrf.mxu0
  %v2573 = vadd.f32 %v2524, %v2572
  %2574 = vdwg.mxu0
  %2575 = vmatpush.bf16.msra.mxu0 %v1666
  %2576 = vmatpush.bf16.msra.mxu0 %v1662
  %2577 = vmatpush.bf16.msra.mxu0 %v1658
  %2578 = vmatpush.bf16.msra.mxu0 %v1654
  %2579 = vmatpush.bf16.msra.mxu0 %v1650
  %2580 = vmatpush.bf16.msra.mxu0 %v1646
  %2581 = vmatpush.bf16.msra.mxu0 %v1642
  %2582 = vmatpush.bf16.msra.mxu0 %v1638
  %2583 = vmatmul.bf16.gmra.mxu0 %v679
  %v2584 = vpop.f32.mrf.mxu0
  %v2585 = vadd.f32 %v2536, %v2584
  %v2586 = vpop.f32.mrf.mxu0
  %v2587 = vadd.f32 %v2538, %v2586
  %2588 = vmatmul.bf16.gmra.mxu0 %v687
  %v2589 = vpop.f32.mrf.mxu0
  %v2590 = vadd.f32 %v2541, %v2589
  %v2591 = vpop.f32.mrf.mxu0
  %v2592 = vadd.f32 %v2543, %v2591
  %2593 = vmatmul.bf16.gmra.mxu0 %v695
  %v2594 = vpop.f32.mrf.mxu0
  %v2595 = vadd.f32 %v2546, %v2594
  %v2596 = vpop.f32.mrf.mxu0
  %v2597 = vadd.f32 %v2548, %v2596
  %2598 = vmatmul.bf16.gmra.mxu0 %v703
  %v2599 = vpop.f32.mrf.mxu0
  %v2600 = vadd.f32 %v2551, %v2599
  %v2601 = vpop.f32.mrf.mxu0
  %v2602 = vadd.f32 %v2553, %v2601
  %2603 = vmatmul.bf16.gmra.mxu0 %v711
  %v2604 = vpop.f32.mrf.mxu0
  %v2605 = vadd.f32 %v2556, %v2604
  %v2606 = vpop.f32.mrf.mxu0
  %v2607 = vadd.f32 %v2558, %v2606
  %2608 = vmatmul.bf16.gmra.mxu0 %v719
  %v2609 = vpop.f32.mrf.mxu0
  %v2610 = vadd.f32 %v2561, %v2609
  %v2611 = vpop.f32.mrf.mxu0
  %v2612 = vadd.f32 %v2563, %v2611
  %2613 = vmatmul.bf16.gmra.mxu0 %v727
  %v2614 = vpop.f32.mrf.mxu0
  %v2615 = vadd.f32 %v2566, %v2614
  %v2616 = vpop.f32.mrf.mxu0
  %v2617 = vadd.f32 %v2568, %v2616
  %2618 = vmatmul.bf16.gmra.mxu0 %v735
  %v2619 = vpop.f32.mrf.mxu0
  %v2620 = vadd.f32 %v2571, %v2619
  %v2621 = vpop.f32.mrf.mxu0
  %v2622 = vadd.f32 %v2573, %v2621
  %2623 = vdwg.mxu0
  %2624 = vmatpush.bf16.msra.mxu0 %v1698
  %2625 = vmatpush.bf16.msra.mxu0 %v1694
  %2626 = vmatpush.bf16.msra.mxu0 %v1690
  %2627 = vmatpush.bf16.msra.mxu0 %v1686
  %2628 = vmatpush.bf16.msra.mxu0 %v1682
  %2629 = vmatpush.bf16.msra.mxu0 %v1678
  %2630 = vmatpush.bf16.msra.mxu0 %v1674
  %2631 = vmatpush.bf16.msra.mxu0 %v1670
  %2632 = vmatmul.bf16.gmra.mxu0 %v680
  %v2633 = vpop.f32.mrf.mxu0
  %v2634 = vadd.f32 %v2585, %v2633
  %v2635 = vpop.f32.mrf.mxu0
  %v2636 = vadd.f32 %v2587, %v2635
  %2637 = vmatmul.bf16.gmra.mxu0 %v688
  %v2638 = vpop.f32.mrf.mxu0
  %v2639 = vadd.f32 %v2590, %v2638
  %v2640 = vpop.f32.mrf.mxu0
  %v2641 = vadd.f32 %v2592, %v2640
  %2642 = vmatmul.bf16.gmra.mxu0 %v696
  %v2643 = vpop.f32.mrf.mxu0
  %v2644 = vadd.f32 %v2595, %v2643
  %v2645 = vpop.f32.mrf.mxu0
  %v2646 = vadd.f32 %v2597, %v2645
  %2647 = vmatmul.bf16.gmra.mxu0 %v704
  %v2648 = vpop.f32.mrf.mxu0
  %v2649 = vadd.f32 %v2600, %v2648
  %v2650 = vpop.f32.mrf.mxu0
  %v2651 = vadd.f32 %v2602, %v2650
  %2652 = vmatmul.bf16.gmra.mxu0 %v712
  %v2653 = vpop.f32.mrf.mxu0
  %v2654 = vadd.f32 %v2605, %v2653
  %v2655 = vpop.f32.mrf.mxu0
  %v2656 = vadd.f32 %v2607, %v2655
  %2657 = vmatmul.bf16.gmra.mxu0 %v720
  %v2658 = vpop.f32.mrf.mxu0
  %v2659 = vadd.f32 %v2610, %v2658
  %v2660 = vpop.f32.mrf.mxu0
  %v2661 = vadd.f32 %v2612, %v2660
  %2662 = vmatmul.bf16.gmra.mxu0 %v728
  %v2663 = vpop.f32.mrf.mxu0
  %v2664 = vadd.f32 %v2615, %v2663
  %v2665 = vpop.f32.mrf.mxu0
  %v2666 = vadd.f32 %v2617, %v2665
  %2667 = vmatmul.bf16.gmra.mxu0 %v736
  %v2668 = vpop.f32.mrf.mxu0
  %v2669 = vadd.f32 %v2620, %v2668
  %v2670 = vpop.f32.mrf.mxu0
  %v2671 = vadd.f32 %v2622, %v2670
  %2672 = vdwg.mxu0
  %2673 = vmatpush.bf16.msra.mxu0 %v1730
  %2674 = vmatpush.bf16.msra.mxu0 %v1726
  %2675 = vmatpush.bf16.msra.mxu0 %v1722
  %2676 = vmatpush.bf16.msra.mxu0 %v1718
  %2677 = vmatpush.bf16.msra.mxu0 %v1714
  %2678 = vmatpush.bf16.msra.mxu0 %v1710
  %2679 = vmatpush.bf16.msra.mxu0 %v1706
  %2680 = vmatpush.bf16.msra.mxu0 %v1702
  %2681 = vmatmul.bf16.gmra.mxu0 %v681
  %v2682 = vpop.f32.mrf.mxu0
  %v2683 = vadd.f32 %v2634, %v2682
  %v2684 = vpop.f32.mrf.mxu0
  %v2685 = vadd.f32 %v2636, %v2684
  %2686 = vmatmul.bf16.gmra.mxu0 %v689
  %v2687 = vpop.f32.mrf.mxu0
  %v2688 = vadd.f32 %v2639, %v2687
  %v2689 = vpop.f32.mrf.mxu0
  %v2690 = vadd.f32 %v2641, %v2689
  %2691 = vmatmul.bf16.gmra.mxu0 %v697
  %v2692 = vpop.f32.mrf.mxu0
  %v2693 = vadd.f32 %v2644, %v2692
  %v2694 = vpop.f32.mrf.mxu0
  %v2695 = vadd.f32 %v2646, %v2694
  %2696 = vmatmul.bf16.gmra.mxu0 %v705
  %v2697 = vpop.f32.mrf.mxu0
  %v2698 = vadd.f32 %v2649, %v2697
  %v2699 = vpop.f32.mrf.mxu0
  %v2700 = vadd.f32 %v2651, %v2699
  %2701 = vmatmul.bf16.gmra.mxu0 %v713
  %v2702 = vpop.f32.mrf.mxu0
  %v2703 = vadd.f32 %v2654, %v2702
  %v2704 = vpop.f32.mrf.mxu0
  %v2705 = vadd.f32 %v2656, %v2704
  %2706 = vmatmul.bf16.gmra.mxu0 %v721
  %v2707 = vpop.f32.mrf.mxu0
  %v2708 = vadd.f32 %v2659, %v2707
  %v2709 = vpop.f32.mrf.mxu0
  %v2710 = vadd.f32 %v2661, %v2709
  %2711 = vmatmul.bf16.gmra.mxu0 %v729
  %v2712 = vpop.f32.mrf.mxu0
  %v2713 = vadd.f32 %v2664, %v2712
  %v2714 = vpop.f32.mrf.mxu0
  %v2715 = vadd.f32 %v2666, %v2714
  %2716 = vmatmul.bf16.gmra.mxu0 %v737
  %v2717 = vpop.f32.mrf.mxu0
  %v2718 = vadd.f32 %v2669, %v2717
  %v2719 = vpop.f32.mrf.mxu0
  %v2720 = vadd.f32 %v2671, %v2719
  %2721 = vdwg.mxu0
  %2722 = vmatpush.bf16.msra.mxu0 %v1762
  %2723 = vmatpush.bf16.msra.mxu0 %v1758
  %2724 = vmatpush.bf16.msra.mxu0 %v1754
  %2725 = vmatpush.bf16.msra.mxu0 %v1750
  %2726 = vmatpush.bf16.msra.mxu0 %v1746
  %2727 = vmatpush.bf16.msra.mxu0 %v1742
  %2728 = vmatpush.bf16.msra.mxu0 %v1738
  %2729 = vmatpush.bf16.msra.mxu0 %v1734
  %2730 = vmatmul.bf16.gmra.mxu0 %v682
  %v2731 = vpop.f32.mrf.mxu0
  %v2732 = vadd.f32 %v2683, %v2731
  %v2733 = vpop.f32.mrf.mxu0
  %v2734 = vadd.f32 %v2685, %v2733
  %2735 = vmatmul.bf16.gmra.mxu0 %v690
  %v2736 = vpop.f32.mrf.mxu0
  %v2737 = vadd.f32 %v2688, %v2736
  %v2738 = vpop.f32.mrf.mxu0
  %v2739 = vadd.f32 %v2690, %v2738
  %2740 = vmatmul.bf16.gmra.mxu0 %v698
  %v2741 = vpop.f32.mrf.mxu0
  %v2742 = vadd.f32 %v2693, %v2741
  %v2743 = vpop.f32.mrf.mxu0
  %v2744 = vadd.f32 %v2695, %v2743
  %2745 = vmatmul.bf16.gmra.mxu0 %v706
  %v2746 = vpop.f32.mrf.mxu0
  %v2747 = vadd.f32 %v2698, %v2746
  %v2748 = vpop.f32.mrf.mxu0
  %v2749 = vadd.f32 %v2700, %v2748
  %2750 = vmatmul.bf16.gmra.mxu0 %v714
  %v2751 = vpop.f32.mrf.mxu0
  %v2752 = vadd.f32 %v2703, %v2751
  %v2753 = vpop.f32.mrf.mxu0
  %v2754 = vadd.f32 %v2705, %v2753
  %2755 = vmatmul.bf16.gmra.mxu0 %v722
  %v2756 = vpop.f32.mrf.mxu0
  %v2757 = vadd.f32 %v2708, %v2756
  %v2758 = vpop.f32.mrf.mxu0
  %v2759 = vadd.f32 %v2710, %v2758
  %2760 = vmatmul.bf16.gmra.mxu0 %v730
  %v2761 = vpop.f32.mrf.mxu0
  %v2762 = vadd.f32 %v2713, %v2761
  %v2763 = vpop.f32.mrf.mxu0
  %v2764 = vadd.f32 %v2715, %v2763
  %2765 = vmatmul.bf16.gmra.mxu0 %v738
  %v2766 = vpop.f32.mrf.mxu0
  %v2767 = vadd.f32 %v2718, %v2766
  %v2768 = vpop.f32.mrf.mxu0
  %v2769 = vadd.f32 %v2720, %v2768
  %2770 = vdwg.mxu0
  %2771 = vmatpush.bf16.msra.mxu0 %v1794
  %2772 = vmatpush.bf16.msra.mxu0 %v1790
  %2773 = vmatpush.bf16.msra.mxu0 %v1786
  %2774 = vmatpush.bf16.msra.mxu0 %v1782
  %2775 = vmatpush.bf16.msra.mxu0 %v1778
  %2776 = vmatpush.bf16.msra.mxu0 %v1774
  %2777 = vmatpush.bf16.msra.mxu0 %v1770
  %2778 = vmatpush.bf16.msra.mxu0 %v1766
  %2779 = vmatmul.bf16.gmra.mxu0 %v683
  %v2780 = vpop.f32.mrf.mxu0
  %v2781 = vadd.f32 %v2732, %v2780
  %v2782 = vpop.f32.mrf.mxu0
  %v2783 = vadd.f32 %v2734, %v2782
  %2784 = vmatmul.bf16.gmra.mxu0 %v691
  %v2785 = vpop.f32.mrf.mxu0
  %v2786 = vadd.f32 %v2737, %v2785
  %v2787 = vpop.f32.mrf.mxu0
  %v2788 = vadd.f32 %v2739, %v2787
  %2789 = vmatmul.bf16.gmra.mxu0 %v699
  %v2790 = vpop.f32.mrf.mxu0
  %v2791 = vadd.f32 %v2742, %v2790
  %v2792 = vpop.f32.mrf.mxu0
  %v2793 = vadd.f32 %v2744, %v2792
  %2794 = vmatmul.bf16.gmra.mxu0 %v707
  %v2795 = vpop.f32.mrf.mxu0
  %v2796 = vadd.f32 %v2747, %v2795
  %v2797 = vpop.f32.mrf.mxu0
  %v2798 = vadd.f32 %v2749, %v2797
  %2799 = vmatmul.bf16.gmra.mxu0 %v715
  %v2800 = vpop.f32.mrf.mxu0
  %v2801 = vadd.f32 %v2752, %v2800
  %v2802 = vpop.f32.mrf.mxu0
  %v2803 = vadd.f32 %v2754, %v2802
  %2804 = vmatmul.bf16.gmra.mxu0 %v723
  %v2805 = vpop.f32.mrf.mxu0
  %v2806 = vadd.f32 %v2757, %v2805
  %v2807 = vpop.f32.mrf.mxu0
  %v2808 = vadd.f32 %v2759, %v2807
  %2809 = vmatmul.bf16.gmra.mxu0 %v731
  %v2810 = vpop.f32.mrf.mxu0
  %v2811 = vadd.f32 %v2762, %v2810
  %v2812 = vpop.f32.mrf.mxu0
  %v2813 = vadd.f32 %v2764, %v2812
  %2814 = vmatmul.bf16.gmra.mxu0 %v739
  %v2815 = vpop.f32.mrf.mxu0
  %v2816 = vadd.f32 %v2767, %v2815
  %v2817 = vpop.f32.mrf.mxu0
  %v2818 = vadd.f32 %v2769, %v2817
  %2819 = vdwg.mxu0
  %2820 = vmatpush.bf16.msra.mxu0 %v1826
  %2821 = vmatpush.bf16.msra.mxu0 %v1822
  %2822 = vmatpush.bf16.msra.mxu0 %v1818
  %2823 = vmatpush.bf16.msra.mxu0 %v1814
  %2824 = vmatpush.bf16.msra.mxu0 %v1810
  %2825 = vmatpush.bf16.msra.mxu0 %v1806
  %2826 = vmatpush.bf16.msra.mxu0 %v1802
  %2827 = vmatpush.bf16.msra.mxu0 %v1798
  %2828 = vmatmul.bf16.gmra.mxu0 %v684
  %v2829 = vpop.f32.mrf.mxu0
  %v2830 = vadd.f32 %v2781, %v2829
  %v2831 = vpop.f32.mrf.mxu0
  %v2832 = vadd.f32 %v2783, %v2831
  %2833 = vmatmul.bf16.gmra.mxu0 %v692
  %v2834 = vpop.f32.mrf.mxu0
  %v2835 = vadd.f32 %v2786, %v2834
  %v2836 = vpop.f32.mrf.mxu0
  %v2837 = vadd.f32 %v2788, %v2836
  %2838 = vmatmul.bf16.gmra.mxu0 %v700
  %v2839 = vpop.f32.mrf.mxu0
  %v2840 = vadd.f32 %v2791, %v2839
  %v2841 = vpop.f32.mrf.mxu0
  %v2842 = vadd.f32 %v2793, %v2841
  %2843 = vmatmul.bf16.gmra.mxu0 %v708
  %v2844 = vpop.f32.mrf.mxu0
  %v2845 = vadd.f32 %v2796, %v2844
  %v2846 = vpop.f32.mrf.mxu0
  %v2847 = vadd.f32 %v2798, %v2846
  %2848 = vmatmul.bf16.gmra.mxu0 %v716
  %v2849 = vpop.f32.mrf.mxu0
  %v2850 = vadd.f32 %v2801, %v2849
  %v2851 = vpop.f32.mrf.mxu0
  %v2852 = vadd.f32 %v2803, %v2851
  %2853 = vmatmul.bf16.gmra.mxu0 %v724
  %v2854 = vpop.f32.mrf.mxu0
  %v2855 = vadd.f32 %v2806, %v2854
  %v2856 = vpop.f32.mrf.mxu0
  %v2857 = vadd.f32 %v2808, %v2856
  %2858 = vmatmul.bf16.gmra.mxu0 %v732
  %v2859 = vpop.f32.mrf.mxu0
  %v2860 = vadd.f32 %v2811, %v2859
  %v2861 = vpop.f32.mrf.mxu0
  %v2862 = vadd.f32 %v2813, %v2861
  %2863 = vmatmul.bf16.gmra.mxu0 %v740
  %v2864 = vpop.f32.mrf.mxu0
  %v2865 = vadd.f32 %v2816, %v2864
  %v2866 = vpop.f32.mrf.mxu0
  %v2867 = vadd.f32 %v2818, %v2866
  %2868 = vdwg.mxu0
  %2869 = vmatpush.bf16.msra.mxu0 %v1603
  %2870 = vmatpush.bf16.msra.mxu0 %v1599
  %2871 = vmatpush.bf16.msra.mxu0 %v1595
  %2872 = vmatpush.bf16.msra.mxu0 %v1591
  %2873 = vmatpush.bf16.msra.mxu0 %v1587
  %2874 = vmatpush.bf16.msra.mxu0 %v1583
  %2875 = vmatpush.bf16.msra.mxu0 %v1579
  %2876 = vmatpush.bf16.msra.mxu0 %v1575
  %2877 = vmatmul.bf16.gmra.mxu0 %v677
  %v2878 = vpop.f32.mrf.mxu0
  %v2879 = vadd.f32 0.0, %v2878
  %v2880 = vpop.f32.mrf.mxu0
  %v2881 = vadd.f32 0.0, %v2880
  %2882 = vmatmul.bf16.gmra.mxu0 %v685
  %v2883 = vpop.f32.mrf.mxu0
  %v2884 = vadd.f32 0.0, %v2883
  %v2885 = vpop.f32.mrf.mxu0
  %v2886 = vadd.f32 0.0, %v2885
  %2887 = vmatmul.bf16.gmra.mxu0 %v693
  %v2888 = vpop.f32.mrf.mxu0
  %v2889 = vadd.f32 0.0, %v2888
  %v2890 = vpop.f32.mrf.mxu0
  %v2891 = vadd.f32 0.0, %v2890
  %2892 = vmatmul.bf16.gmra.mxu0 %v701
  %v2893 = vpop.f32.mrf.mxu0
  %v2894 = vadd.f32 0.0, %v2893
  %v2895 = vpop.f32.mrf.mxu0
  %v2896 = vadd.f32 0.0, %v2895
  %2897 = vmatmul.bf16.gmra.mxu0 %v709
  %v2898 = vpop.f32.mrf.mxu0
  %v2899 = vadd.f32 0.0, %v2898
  %v2900 = vpop.f32.mrf.mxu0
  %v2901 = vadd.f32 0.0, %v2900
  %2902 = vmatmul.bf16.gmra.mxu0 %v717
  %v2903 = vpop.f32.mrf.mxu0
  %v2904 = vadd.f32 0.0, %v2903
  %v2905 = vpop.f32.mrf.mxu0
  %v2906 = vadd.f32 0.0, %v2905
  %2907 = vmatmul.bf16.gmra.mxu0 %v725
  %v2908 = vpop.f32.mrf.mxu0
  %v2909 = vadd.f32 0.0, %v2908
  %v2910 = vpop.f32.mrf.mxu0
  %v2911 = vadd.f32 0.0, %v2910
  %2912 = vmatmul.bf16.gmra.mxu0 %v733
  %v2913 = vpop.f32.mrf.mxu0
  %v2914 = vadd.f32 0.0, %v2913
  %v2915 = vpop.f32.mrf.mxu0
  %v2916 = vadd.f32 0.0, %v2915
  %2917 = vdwg.mxu0
  %2918 = vmatpush.bf16.msra.mxu0 %v1635
  %2919 = vmatpush.bf16.msra.mxu0 %v1631
  %2920 = vmatpush.bf16.msra.mxu0 %v1627
  %2921 = vmatpush.bf16.msra.mxu0 %v1623
  %2922 = vmatpush.bf16.msra.mxu0 %v1619
  %2923 = vmatpush.bf16.msra.mxu0 %v1615
  %2924 = vmatpush.bf16.msra.mxu0 %v1611
  %2925 = vmatpush.bf16.msra.mxu0 %v1607
  %2926 = vmatmul.bf16.gmra.mxu0 %v678
  %v2927 = vpop.f32.mrf.mxu0
  %v2928 = vadd.f32 %v2879, %v2927
  %v2929 = vpop.f32.mrf.mxu0
  %v2930 = vadd.f32 %v2881, %v2929
  %2931 = vmatmul.bf16.gmra.mxu0 %v686
  %v2932 = vpop.f32.mrf.mxu0
  %v2933 = vadd.f32 %v2884, %v2932
  %v2934 = vpop.f32.mrf.mxu0
  %v2935 = vadd.f32 %v2886, %v2934
  %2936 = vmatmul.bf16.gmra.mxu0 %v694
  %v2937 = vpop.f32.mrf.mxu0
  %v2938 = vadd.f32 %v2889, %v2937
  %v2939 = vpop.f32.mrf.mxu0
  %v2940 = vadd.f32 %v2891, %v2939
  %2941 = vmatmul.bf16.gmra.mxu0 %v702
  %v2942 = vpop.f32.mrf.mxu0
  %v2943 = vadd.f32 %v2894, %v2942
  %v2944 = vpop.f32.mrf.mxu0
  %v2945 = vadd.f32 %v2896, %v2944
  %2946 = vmatmul.bf16.gmra.mxu0 %v710
  %v2947 = vpop.f32.mrf.mxu0
  %v2948 = vadd.f32 %v2899, %v2947
  %v2949 = vpop.f32.mrf.mxu0
  %v2950 = vadd.f32 %v2901, %v2949
  %2951 = vmatmul.bf16.gmra.mxu0 %v718
  %v2952 = vpop.f32.mrf.mxu0
  %v2953 = vadd.f32 %v2904, %v2952
  %v2954 = vpop.f32.mrf.mxu0
  %v2955 = vadd.f32 %v2906, %v2954
  %2956 = vmatmul.bf16.gmra.mxu0 %v726
  %v2957 = vpop.f32.mrf.mxu0
  %v2958 = vadd.f32 %v2909, %v2957
  %v2959 = vpop.f32.mrf.mxu0
  %v2960 = vadd.f32 %v2911, %v2959
  %2961 = vmatmul.bf16.gmra.mxu0 %v734
  %v2962 = vpop.f32.mrf.mxu0
  %v2963 = vadd.f32 %v2914, %v2962
  %v2964 = vpop.f32.mrf.mxu0
  %v2965 = vadd.f32 %v2916, %v2964
  %2966 = vdwg.mxu0
  %2967 = vmatpush.bf16.msra.mxu0 %v1667
  %2968 = vmatpush.bf16.msra.mxu0 %v1663
  %2969 = vmatpush.bf16.msra.mxu0 %v1659
  %2970 = vmatpush.bf16.msra.mxu0 %v1655
  %2971 = vmatpush.bf16.msra.mxu0 %v1651
  %2972 = vmatpush.bf16.msra.mxu0 %v1647
  %2973 = vmatpush.bf16.msra.mxu0 %v1643
  %2974 = vmatpush.bf16.msra.mxu0 %v1639
  %2975 = vmatmul.bf16.gmra.mxu0 %v679
  %v2976 = vpop.f32.mrf.mxu0
  %v2977 = vadd.f32 %v2928, %v2976
  %v2978 = vpop.f32.mrf.mxu0
  %v2979 = vadd.f32 %v2930, %v2978
  %2980 = vmatmul.bf16.gmra.mxu0 %v687
  %v2981 = vpop.f32.mrf.mxu0
  %v2982 = vadd.f32 %v2933, %v2981
  %v2983 = vpop.f32.mrf.mxu0
  %v2984 = vadd.f32 %v2935, %v2983
  %2985 = vmatmul.bf16.gmra.mxu0 %v695
  %v2986 = vpop.f32.mrf.mxu0
  %v2987 = vadd.f32 %v2938, %v2986
  %v2988 = vpop.f32.mrf.mxu0
  %v2989 = vadd.f32 %v2940, %v2988
  %2990 = vmatmul.bf16.gmra.mxu0 %v703
  %v2991 = vpop.f32.mrf.mxu0
  %v2992 = vadd.f32 %v2943, %v2991
  %v2993 = vpop.f32.mrf.mxu0
  %v2994 = vadd.f32 %v2945, %v2993
  %2995 = vmatmul.bf16.gmra.mxu0 %v711
  %v2996 = vpop.f32.mrf.mxu0
  %v2997 = vadd.f32 %v2948, %v2996
  %v2998 = vpop.f32.mrf.mxu0
  %v2999 = vadd.f32 %v2950, %v2998
  %3000 = vmatmul.bf16.gmra.mxu0 %v719
  %v3001 = vpop.f32.mrf.mxu0
  %v3002 = vadd.f32 %v2953, %v3001
  %v3003 = vpop.f32.mrf.mxu0
  %v3004 = vadd.f32 %v2955, %v3003
  %3005 = vmatmul.bf16.gmra.mxu0 %v727
  %v3006 = vpop.f32.mrf.mxu0
  %v3007 = vadd.f32 %v2958, %v3006
  %v3008 = vpop.f32.mrf.mxu0
  %v3009 = vadd.f32 %v2960, %v3008
  %3010 = vmatmul.bf16.gmra.mxu0 %v735
  %v3011 = vpop.f32.mrf.mxu0
  %v3012 = vadd.f32 %v2963, %v3011
  %v3013 = vpop.f32.mrf.mxu0
  %v3014 = vadd.f32 %v2965, %v3013
  %3015 = vdwg.mxu0
  %3016 = vmatpush.bf16.msra.mxu0 %v1699
  %3017 = vmatpush.bf16.msra.mxu0 %v1695
  %3018 = vmatpush.bf16.msra.mxu0 %v1691
  %3019 = vmatpush.bf16.msra.mxu0 %v1687
  %3020 = vmatpush.bf16.msra.mxu0 %v1683
  %3021 = vmatpush.bf16.msra.mxu0 %v1679
  %3022 = vmatpush.bf16.msra.mxu0 %v1675
  %3023 = vmatpush.bf16.msra.mxu0 %v1671
  %3024 = vmatmul.bf16.gmra.mxu0 %v680
  %v3025 = vpop.f32.mrf.mxu0
  %v3026 = vadd.f32 %v2977, %v3025
  %v3027 = vpop.f32.mrf.mxu0
  %v3028 = vadd.f32 %v2979, %v3027
  %3029 = vmatmul.bf16.gmra.mxu0 %v688
  %v3030 = vpop.f32.mrf.mxu0
  %v3031 = vadd.f32 %v2982, %v3030
  %v3032 = vpop.f32.mrf.mxu0
  %v3033 = vadd.f32 %v2984, %v3032
  %3034 = vmatmul.bf16.gmra.mxu0 %v696
  %v3035 = vpop.f32.mrf.mxu0
  %v3036 = vadd.f32 %v2987, %v3035
  %v3037 = vpop.f32.mrf.mxu0
  %v3038 = vadd.f32 %v2989, %v3037
  %3039 = vmatmul.bf16.gmra.mxu0 %v704
  %v3040 = vpop.f32.mrf.mxu0
  %v3041 = vadd.f32 %v2992, %v3040
  %v3042 = vpop.f32.mrf.mxu0
  %v3043 = vadd.f32 %v2994, %v3042
  %3044 = vmatmul.bf16.gmra.mxu0 %v712
  %v3045 = vpop.f32.mrf.mxu0
  %v3046 = vadd.f32 %v2997, %v3045
  %v3047 = vpop.f32.mrf.mxu0
  %v3048 = vadd.f32 %v2999, %v3047
  %3049 = vmatmul.bf16.gmra.mxu0 %v720
  %v3050 = vpop.f32.mrf.mxu0
  %v3051 = vadd.f32 %v3002, %v3050
  %v3052 = vpop.f32.mrf.mxu0
  %v3053 = vadd.f32 %v3004, %v3052
  %3054 = vmatmul.bf16.gmra.mxu0 %v728
  %v3055 = vpop.f32.mrf.mxu0
  %v3056 = vadd.f32 %v3007, %v3055
  %v3057 = vpop.f32.mrf.mxu0
  %v3058 = vadd.f32 %v3009, %v3057
  %3059 = vmatmul.bf16.gmra.mxu0 %v736
  %v3060 = vpop.f32.mrf.mxu0
  %v3061 = vadd.f32 %v3012, %v3060
  %v3062 = vpop.f32.mrf.mxu0
  %v3063 = vadd.f32 %v3014, %v3062
  %3064 = vdwg.mxu0
  %3065 = vmatpush.bf16.msra.mxu0 %v1731
  %3066 = vmatpush.bf16.msra.mxu0 %v1727
  %3067 = vmatpush.bf16.msra.mxu0 %v1723
  %3068 = vmatpush.bf16.msra.mxu0 %v1719
  %3069 = vmatpush.bf16.msra.mxu0 %v1715
  %3070 = vmatpush.bf16.msra.mxu0 %v1711
  %3071 = vmatpush.bf16.msra.mxu0 %v1707
  %3072 = vmatpush.bf16.msra.mxu0 %v1703
  %3073 = vmatmul.bf16.gmra.mxu0 %v681
  %v3074 = vpop.f32.mrf.mxu0
  %v3075 = vadd.f32 %v3026, %v3074
  %v3076 = vpop.f32.mrf.mxu0
  %v3077 = vadd.f32 %v3028, %v3076
  %3078 = vmatmul.bf16.gmra.mxu0 %v689
  %v3079 = vpop.f32.mrf.mxu0
  %v3080 = vadd.f32 %v3031, %v3079
  %v3081 = vpop.f32.mrf.mxu0
  %v3082 = vadd.f32 %v3033, %v3081
  %3083 = vmatmul.bf16.gmra.mxu0 %v697
  %v3084 = vpop.f32.mrf.mxu0
  %v3085 = vadd.f32 %v3036, %v3084
  %v3086 = vpop.f32.mrf.mxu0
  %v3087 = vadd.f32 %v3038, %v3086
  %3088 = vmatmul.bf16.gmra.mxu0 %v705
  %v3089 = vpop.f32.mrf.mxu0
  %v3090 = vadd.f32 %v3041, %v3089
  %v3091 = vpop.f32.mrf.mxu0
  %v3092 = vadd.f32 %v3043, %v3091
  %3093 = vmatmul.bf16.gmra.mxu0 %v713
  %v3094 = vpop.f32.mrf.mxu0
  %v3095 = vadd.f32 %v3046, %v3094
  %v3096 = vpop.f32.mrf.mxu0
  %v3097 = vadd.f32 %v3048, %v3096
  %3098 = vmatmul.bf16.gmra.mxu0 %v721
  %v3099 = vpop.f32.mrf.mxu0
  %v3100 = vadd.f32 %v3051, %v3099
  %v3101 = vpop.f32.mrf.mxu0
  %v3102 = vadd.f32 %v3053, %v3101
  %3103 = vmatmul.bf16.gmra.mxu0 %v729
  %v3104 = vpop.f32.mrf.mxu0
  %v3105 = vadd.f32 %v3056, %v3104
  %v3106 = vpop.f32.mrf.mxu0
  %v3107 = vadd.f32 %v3058, %v3106
  %3108 = vmatmul.bf16.gmra.mxu0 %v737
  %v3109 = vpop.f32.mrf.mxu0
  %v3110 = vadd.f32 %v3061, %v3109
  %v3111 = vpop.f32.mrf.mxu0
  %v3112 = vadd.f32 %v3063, %v3111
  %3113 = vdwg.mxu0
  %3114 = vmatpush.bf16.msra.mxu0 %v1763
  %3115 = vmatpush.bf16.msra.mxu0 %v1759
  %3116 = vmatpush.bf16.msra.mxu0 %v1755
  %3117 = vmatpush.bf16.msra.mxu0 %v1751
  %3118 = vmatpush.bf16.msra.mxu0 %v1747
  %3119 = vmatpush.bf16.msra.mxu0 %v1743
  %3120 = vmatpush.bf16.msra.mxu0 %v1739
  %3121 = vmatpush.bf16.msra.mxu0 %v1735
  %3122 = vmatmul.bf16.gmra.mxu0 %v682
  %v3123 = vpop.f32.mrf.mxu0
  %v3124 = vadd.f32 %v3075, %v3123
  %v3125 = vpop.f32.mrf.mxu0
  %v3126 = vadd.f32 %v3077, %v3125
  %3127 = vmatmul.bf16.gmra.mxu0 %v690
  %v3128 = vpop.f32.mrf.mxu0
  %v3129 = vadd.f32 %v3080, %v3128
  %v3130 = vpop.f32.mrf.mxu0
  %v3131 = vadd.f32 %v3082, %v3130
  %3132 = vmatmul.bf16.gmra.mxu0 %v698
  %v3133 = vpop.f32.mrf.mxu0
  %v3134 = vadd.f32 %v3085, %v3133
  %v3135 = vpop.f32.mrf.mxu0
  %v3136 = vadd.f32 %v3087, %v3135
  %3137 = vmatmul.bf16.gmra.mxu0 %v706
  %v3138 = vpop.f32.mrf.mxu0
  %v3139 = vadd.f32 %v3090, %v3138
  %v3140 = vpop.f32.mrf.mxu0
  %v3141 = vadd.f32 %v3092, %v3140
  %3142 = vmatmul.bf16.gmra.mxu0 %v714
  %v3143 = vpop.f32.mrf.mxu0
  %v3144 = vadd.f32 %v3095, %v3143
  %v3145 = vpop.f32.mrf.mxu0
  %v3146 = vadd.f32 %v3097, %v3145
  %3147 = vmatmul.bf16.gmra.mxu0 %v722
  %v3148 = vpop.f32.mrf.mxu0
  %v3149 = vadd.f32 %v3100, %v3148
  %v3150 = vpop.f32.mrf.mxu0
  %v3151 = vadd.f32 %v3102, %v3150
  %3152 = vmatmul.bf16.gmra.mxu0 %v730
  %v3153 = vpop.f32.mrf.mxu0
  %v3154 = vadd.f32 %v3105, %v3153
  %v3155 = vpop.f32.mrf.mxu0
  %v3156 = vadd.f32 %v3107, %v3155
  %3157 = vmatmul.bf16.gmra.mxu0 %v738
  %v3158 = vpop.f32.mrf.mxu0
  %v3159 = vadd.f32 %v3110, %v3158
  %v3160 = vpop.f32.mrf.mxu0
  %v3161 = vadd.f32 %v3112, %v3160
  %3162 = vdwg.mxu0
  %3163 = vmatpush.bf16.msra.mxu0 %v1795
  %3164 = vmatpush.bf16.msra.mxu0 %v1791
  %3165 = vmatpush.bf16.msra.mxu0 %v1787
  %3166 = vmatpush.bf16.msra.mxu0 %v1783
  %3167 = vmatpush.bf16.msra.mxu0 %v1779
  %3168 = vmatpush.bf16.msra.mxu0 %v1775
  %3169 = vmatpush.bf16.msra.mxu0 %v1771
  %3170 = vmatpush.bf16.msra.mxu0 %v1767
  %3171 = vmatmul.bf16.gmra.mxu0 %v683
  %v3172 = vpop.f32.mrf.mxu0
  %v3173 = vadd.f32 %v3124, %v3172
  %v3174 = vpop.f32.mrf.mxu0
  %v3175 = vadd.f32 %v3126, %v3174
  %3176 = vmatmul.bf16.gmra.mxu0 %v691
  %v3177 = vpop.f32.mrf.mxu0
  %v3178 = vadd.f32 %v3129, %v3177
  %v3179 = vpop.f32.mrf.mxu0
  %v3180 = vadd.f32 %v3131, %v3179
  %3181 = vmatmul.bf16.gmra.mxu0 %v699
  %v3182 = vpop.f32.mrf.mxu0
  %v3183 = vadd.f32 %v3134, %v3182
  %v3184 = vpop.f32.mrf.mxu0
  %v3185 = vadd.f32 %v3136, %v3184
  %3186 = vmatmul.bf16.gmra.mxu0 %v707
  %v3187 = vpop.f32.mrf.mxu0
  %v3188 = vadd.f32 %v3139, %v3187
  %v3189 = vpop.f32.mrf.mxu0
  %v3190 = vadd.f32 %v3141, %v3189
  %3191 = vmatmul.bf16.gmra.mxu0 %v715
  %v3192 = vpop.f32.mrf.mxu0
  %v3193 = vadd.f32 %v3144, %v3192
  %v3194 = vpop.f32.mrf.mxu0
  %v3195 = vadd.f32 %v3146, %v3194
  %3196 = vmatmul.bf16.gmra.mxu0 %v723
  %v3197 = vpop.f32.mrf.mxu0
  %v3198 = vadd.f32 %v3149, %v3197
  %v3199 = vpop.f32.mrf.mxu0
  %v3200 = vadd.f32 %v3151, %v3199
  %3201 = vmatmul.bf16.gmra.mxu0 %v731
  %v3202 = vpop.f32.mrf.mxu0
  %v3203 = vadd.f32 %v3154, %v3202
  %v3204 = vpop.f32.mrf.mxu0
  %v3205 = vadd.f32 %v3156, %v3204
  %3206 = vmatmul.bf16.gmra.mxu0 %v739
  %v3207 = vpop.f32.mrf.mxu0
  %v3208 = vadd.f32 %v3159, %v3207
  %v3209 = vpop.f32.mrf.mxu0
  %v3210 = vadd.f32 %v3161, %v3209
  %3211 = vdwg.mxu0
  %3212 = vmatpush.bf16.msra.mxu0 %v1827
  %3213 = vmatpush.bf16.msra.mxu0 %v1823
  %3214 = vmatpush.bf16.msra.mxu0 %v1819
  %3215 = vmatpush.bf16.msra.mxu0 %v1815
  %3216 = vmatpush.bf16.msra.mxu0 %v1811
  %3217 = vmatpush.bf16.msra.mxu0 %v1807
  %3218 = vmatpush.bf16.msra.mxu0 %v1803
  %3219 = vmatpush.bf16.msra.mxu0 %v1799
  %3220 = vmatmul.bf16.gmra.mxu0 %v684
  %v3221 = vpop.f32.mrf.mxu0
  %v3222 = vadd.f32 %v3173, %v3221
  %v3223 = vpop.f32.mrf.mxu0
  %v3224 = vadd.f32 %v3175, %v3223
  %3225 = vmatmul.bf16.gmra.mxu0 %v692
  %v3226 = vpop.f32.mrf.mxu0
  %v3227 = vadd.f32 %v3178, %v3226
  %v3228 = vpop.f32.mrf.mxu0
  %v3229 = vadd.f32 %v3180, %v3228
  %3230 = vmatmul.bf16.gmra.mxu0 %v700
  %v3231 = vpop.f32.mrf.mxu0
  %v3232 = vadd.f32 %v3183, %v3231
  %v3233 = vpop.f32.mrf.mxu0
  %v3234 = vadd.f32 %v3185, %v3233
  %3235 = vmatmul.bf16.gmra.mxu0 %v708
  %v3236 = vpop.f32.mrf.mxu0
  %v3237 = vadd.f32 %v3188, %v3236
  %v3238 = vpop.f32.mrf.mxu0
  %v3239 = vadd.f32 %v3190, %v3238
  %3240 = vmatmul.bf16.gmra.mxu0 %v716
  %v3241 = vpop.f32.mrf.mxu0
  %v3242 = vadd.f32 %v3193, %v3241
  %v3243 = vpop.f32.mrf.mxu0
  %v3244 = vadd.f32 %v3195, %v3243
  %3245 = vmatmul.bf16.gmra.mxu0 %v724
  %v3246 = vpop.f32.mrf.mxu0
  %v3247 = vadd.f32 %v3198, %v3246
  %v3248 = vpop.f32.mrf.mxu0
  %v3249 = vadd.f32 %v3200, %v3248
  %3250 = vmatmul.bf16.gmra.mxu0 %v732
  %v3251 = vpop.f32.mrf.mxu0
  %v3252 = vadd.f32 %v3203, %v3251
  %v3253 = vpop.f32.mrf.mxu0
  %v3254 = vadd.f32 %v3205, %v3253
  %3255 = vmatmul.bf16.gmra.mxu0 %v740
  %v3256 = vpop.f32.mrf.mxu0
  %v3257 = vadd.f32 %v3208, %v3256
  %v3258 = vpop.f32.mrf.mxu0
  %v3259 = vadd.f32 %v3210, %v3258
  %3260 = vdwg.mxu0
  %3261 = vmatpush.bf16.msra.mxu0 %v1604
  %3262 = vmatpush.bf16.msra.mxu0 %v1600
  %3263 = vmatpush.bf16.msra.mxu0 %v1596
  %3264 = vmatpush.bf16.msra.mxu0 %v1592
  %3265 = vmatpush.bf16.msra.mxu0 %v1588
  %3266 = vmatpush.bf16.msra.mxu0 %v1584
  %3267 = vmatpush.bf16.msra.mxu0 %v1580
  %3268 = vmatpush.bf16.msra.mxu0 %v1576
  %3269 = vmatmul.bf16.gmra.mxu0 %v677
  %v3270 = vpop.f32.mrf.mxu0
  %v3271 = vadd.f32 0.0, %v3270
  %v3272 = vpop.f32.mrf.mxu0
  %v3273 = vadd.f32 0.0, %v3272
  %3274 = vmatmul.bf16.gmra.mxu0 %v685
  %v3275 = vpop.f32.mrf.mxu0
  %v3276 = vadd.f32 0.0, %v3275
  %v3277 = vpop.f32.mrf.mxu0
  %v3278 = vadd.f32 0.0, %v3277
  %3279 = vmatmul.bf16.gmra.mxu0 %v693
  %v3280 = vpop.f32.mrf.mxu0
  %v3281 = vadd.f32 0.0, %v3280
  %v3282 = vpop.f32.mrf.mxu0
  %v3283 = vadd.f32 0.0, %v3282
  %3284 = vmatmul.bf16.gmra.mxu0 %v701
  %v3285 = vpop.f32.mrf.mxu0
  %v3286 = vadd.f32 0.0, %v3285
  %v3287 = vpop.f32.mrf.mxu0
  %v3288 = vadd.f32 0.0, %v3287
  %3289 = vmatmul.bf16.gmra.mxu0 %v709
  %v3290 = vpop.f32.mrf.mxu0
  %v3291 = vadd.f32 0.0, %v3290
  %v3292 = vpop.f32.mrf.mxu0
  %v3293 = vadd.f32 0.0, %v3292
  %3294 = vmatmul.bf16.gmra.mxu0 %v717
  %v3295 = vpop.f32.mrf.mxu0
  %v3296 = vadd.f32 0.0, %v3295
  %v3297 = vpop.f32.mrf.mxu0
  %v3298 = vadd.f32 0.0, %v3297
  %3299 = vmatmul.bf16.gmra.mxu0 %v725
  %v3300 = vpop.f32.mrf.mxu0
  %v3301 = vadd.f32 0.0, %v3300
  %v3302 = vpop.f32.mrf.mxu0
  %v3303 = vadd.f32 0.0, %v3302
  %3304 = vmatmul.bf16.gmra.mxu0 %v733
  %v3305 = vpop.f32.mrf.mxu0
  %v3306 = vadd.f32 0.0, %v3305
  %v3307 = vpop.f32.mrf.mxu0
  %v3308 = vadd.f32 0.0, %v3307
  %3309 = vdwg.mxu0
  %3310 = vmatpush.bf16.msra.mxu0 %v1636
  %3311 = vmatpush.bf16.msra.mxu0 %v1632
  %3312 = vmatpush.bf16.msra.mxu0 %v1628
  %3313 = vmatpush.bf16.msra.mxu0 %v1624
  %3314 = vmatpush.bf16.msra.mxu0 %v1620
  %3315 = vmatpush.bf16.msra.mxu0 %v1616
  %3316 = vmatpush.bf16.msra.mxu0 %v1612
  %3317 = vmatpush.bf16.msra.mxu0 %v1608
  %3318 = vmatmul.bf16.gmra.mxu0 %v678
  %v3319 = vpop.f32.mrf.mxu0
  %v3320 = vadd.f32 %v3271, %v3319
  %v3321 = vpop.f32.mrf.mxu0
  %v3322 = vadd.f32 %v3273, %v3321
  %3323 = vmatmul.bf16.gmra.mxu0 %v686
  %v3324 = vpop.f32.mrf.mxu0
  %v3325 = vadd.f32 %v3276, %v3324
  %v3326 = vpop.f32.mrf.mxu0
  %v3327 = vadd.f32 %v3278, %v3326
  %3328 = vmatmul.bf16.gmra.mxu0 %v694
  %v3329 = vpop.f32.mrf.mxu0
  %v3330 = vadd.f32 %v3281, %v3329
  %v3331 = vpop.f32.mrf.mxu0
  %v3332 = vadd.f32 %v3283, %v3331
  %3333 = vmatmul.bf16.gmra.mxu0 %v702
  %v3334 = vpop.f32.mrf.mxu0
  %v3335 = vadd.f32 %v3286, %v3334
  %v3336 = vpop.f32.mrf.mxu0
  %v3337 = vadd.f32 %v3288, %v3336
  %3338 = vmatmul.bf16.gmra.mxu0 %v710
  %v3339 = vpop.f32.mrf.mxu0
  %v3340 = vadd.f32 %v3291, %v3339
  %v3341 = vpop.f32.mrf.mxu0
  %v3342 = vadd.f32 %v3293, %v3341
  %3343 = vmatmul.bf16.gmra.mxu0 %v718
  %v3344 = vpop.f32.mrf.mxu0
  %v3345 = vadd.f32 %v3296, %v3344
  %v3346 = vpop.f32.mrf.mxu0
  %v3347 = vadd.f32 %v3298, %v3346
  %3348 = vmatmul.bf16.gmra.mxu0 %v726
  %v3349 = vpop.f32.mrf.mxu0
  %v3350 = vadd.f32 %v3301, %v3349
  %v3351 = vpop.f32.mrf.mxu0
  %v3352 = vadd.f32 %v3303, %v3351
  %3353 = vmatmul.bf16.gmra.mxu0 %v734
  %v3354 = vpop.f32.mrf.mxu0
  %v3355 = vadd.f32 %v3306, %v3354
  %v3356 = vpop.f32.mrf.mxu0
  %v3357 = vadd.f32 %v3308, %v3356
  %3358 = vdwg.mxu0
  %3359 = vmatpush.bf16.msra.mxu0 %v1668
  %3360 = vmatpush.bf16.msra.mxu0 %v1664
  %3361 = vmatpush.bf16.msra.mxu0 %v1660
  %3362 = vmatpush.bf16.msra.mxu0 %v1656
  %3363 = vmatpush.bf16.msra.mxu0 %v1652
  %3364 = vmatpush.bf16.msra.mxu0 %v1648
  %3365 = vmatpush.bf16.msra.mxu0 %v1644
  %3366 = vmatpush.bf16.msra.mxu0 %v1640
  %3367 = vmatmul.bf16.gmra.mxu0 %v679
  %v3368 = vpop.f32.mrf.mxu0
  %v3369 = vadd.f32 %v3320, %v3368
  %v3370 = vpop.f32.mrf.mxu0
  %v3371 = vadd.f32 %v3322, %v3370
  %3372 = vmatmul.bf16.gmra.mxu0 %v687
  %v3373 = vpop.f32.mrf.mxu0
  %v3374 = vadd.f32 %v3325, %v3373
  %v3375 = vpop.f32.mrf.mxu0
  %v3376 = vadd.f32 %v3327, %v3375
  %3377 = vmatmul.bf16.gmra.mxu0 %v695
  %v3378 = vpop.f32.mrf.mxu0
  %v3379 = vadd.f32 %v3330, %v3378
  %v3380 = vpop.f32.mrf.mxu0
  %v3381 = vadd.f32 %v3332, %v3380
  %3382 = vmatmul.bf16.gmra.mxu0 %v703
  %v3383 = vpop.f32.mrf.mxu0
  %v3384 = vadd.f32 %v3335, %v3383
  %v3385 = vpop.f32.mrf.mxu0
  %v3386 = vadd.f32 %v3337, %v3385
  %3387 = vmatmul.bf16.gmra.mxu0 %v711
  %v3388 = vpop.f32.mrf.mxu0
  %v3389 = vadd.f32 %v3340, %v3388
  %v3390 = vpop.f32.mrf.mxu0
  %v3391 = vadd.f32 %v3342, %v3390
  %3392 = vmatmul.bf16.gmra.mxu0 %v719
  %v3393 = vpop.f32.mrf.mxu0
  %v3394 = vadd.f32 %v3345, %v3393
  %v3395 = vpop.f32.mrf.mxu0
  %v3396 = vadd.f32 %v3347, %v3395
  %3397 = vmatmul.bf16.gmra.mxu0 %v727
  %v3398 = vpop.f32.mrf.mxu0
  %v3399 = vadd.f32 %v3350, %v3398
  %v3400 = vpop.f32.mrf.mxu0
  %v3401 = vadd.f32 %v3352, %v3400
  %3402 = vmatmul.bf16.gmra.mxu0 %v735
  %v3403 = vpop.f32.mrf.mxu0
  %v3404 = vadd.f32 %v3355, %v3403
  %v3405 = vpop.f32.mrf.mxu0
  %v3406 = vadd.f32 %v3357, %v3405
  %3407 = vdwg.mxu0
  %3408 = vmatpush.bf16.msra.mxu0 %v1700
  %3409 = vmatpush.bf16.msra.mxu0 %v1696
  %3410 = vmatpush.bf16.msra.mxu0 %v1692
  %3411 = vmatpush.bf16.msra.mxu0 %v1688
  %3412 = vmatpush.bf16.msra.mxu0 %v1684
  %3413 = vmatpush.bf16.msra.mxu0 %v1680
  %3414 = vmatpush.bf16.msra.mxu0 %v1676
  %3415 = vmatpush.bf16.msra.mxu0 %v1672
  %3416 = vmatmul.bf16.gmra.mxu0 %v680
  %v3417 = vpop.f32.mrf.mxu0
  %v3418 = vadd.f32 %v3369, %v3417
  %v3419 = vpop.f32.mrf.mxu0
  %v3420 = vadd.f32 %v3371, %v3419
  %3421 = vmatmul.bf16.gmra.mxu0 %v688
  %v3422 = vpop.f32.mrf.mxu0
  %v3423 = vadd.f32 %v3374, %v3422
  %v3424 = vpop.f32.mrf.mxu0
  %v3425 = vadd.f32 %v3376, %v3424
  %3426 = vmatmul.bf16.gmra.mxu0 %v696
  %v3427 = vpop.f32.mrf.mxu0
  %v3428 = vadd.f32 %v3379, %v3427
  %v3429 = vpop.f32.mrf.mxu0
  %v3430 = vadd.f32 %v3381, %v3429
  %3431 = vmatmul.bf16.gmra.mxu0 %v704
  %v3432 = vpop.f32.mrf.mxu0
  %v3433 = vadd.f32 %v3384, %v3432
  %v3434 = vpop.f32.mrf.mxu0
  %v3435 = vadd.f32 %v3386, %v3434
  %3436 = vmatmul.bf16.gmra.mxu0 %v712
  %v3437 = vpop.f32.mrf.mxu0
  %v3438 = vadd.f32 %v3389, %v3437
  %v3439 = vpop.f32.mrf.mxu0
  %v3440 = vadd.f32 %v3391, %v3439
  %3441 = vmatmul.bf16.gmra.mxu0 %v720
  %v3442 = vpop.f32.mrf.mxu0
  %v3443 = vadd.f32 %v3394, %v3442
  %v3444 = vpop.f32.mrf.mxu0
  %v3445 = vadd.f32 %v3396, %v3444
  %3446 = vmatmul.bf16.gmra.mxu0 %v728
  %v3447 = vpop.f32.mrf.mxu0
  %v3448 = vadd.f32 %v3399, %v3447
  %v3449 = vpop.f32.mrf.mxu0
  %v3450 = vadd.f32 %v3401, %v3449
  %3451 = vmatmul.bf16.gmra.mxu0 %v736
  %v3452 = vpop.f32.mrf.mxu0
  %v3453 = vadd.f32 %v3404, %v3452
  %v3454 = vpop.f32.mrf.mxu0
  %v3455 = vadd.f32 %v3406, %v3454
  %3456 = vdwg.mxu0
  %3457 = vmatpush.bf16.msra.mxu0 %v1732
  %3458 = vmatpush.bf16.msra.mxu0 %v1728
  %3459 = vmatpush.bf16.msra.mxu0 %v1724
  %3460 = vmatpush.bf16.msra.mxu0 %v1720
  %3461 = vmatpush.bf16.msra.mxu0 %v1716
  %3462 = vmatpush.bf16.msra.mxu0 %v1712
  %3463 = vmatpush.bf16.msra.mxu0 %v1708
  %3464 = vmatpush.bf16.msra.mxu0 %v1704
  %3465 = vmatmul.bf16.gmra.mxu0 %v681
  %v3466 = vpop.f32.mrf.mxu0
  %v3467 = vadd.f32 %v3418, %v3466
  %v3468 = vpop.f32.mrf.mxu0
  %v3469 = vadd.f32 %v3420, %v3468
  %3470 = vmatmul.bf16.gmra.mxu0 %v689
  %v3471 = vpop.f32.mrf.mxu0
  %v3472 = vadd.f32 %v3423, %v3471
  %v3473 = vpop.f32.mrf.mxu0
  %v3474 = vadd.f32 %v3425, %v3473
  %3475 = vmatmul.bf16.gmra.mxu0 %v697
  %v3476 = vpop.f32.mrf.mxu0
  %v3477 = vadd.f32 %v3428, %v3476
  %v3478 = vpop.f32.mrf.mxu0
  %v3479 = vadd.f32 %v3430, %v3478
  %3480 = vmatmul.bf16.gmra.mxu0 %v705
  %v3481 = vpop.f32.mrf.mxu0
  %v3482 = vadd.f32 %v3433, %v3481
  %v3483 = vpop.f32.mrf.mxu0
  %v3484 = vadd.f32 %v3435, %v3483
  %3485 = vmatmul.bf16.gmra.mxu0 %v713
  %v3486 = vpop.f32.mrf.mxu0
  %v3487 = vadd.f32 %v3438, %v3486
  %v3488 = vpop.f32.mrf.mxu0
  %v3489 = vadd.f32 %v3440, %v3488
  %3490 = vmatmul.bf16.gmra.mxu0 %v721
  %v3491 = vpop.f32.mrf.mxu0
  %v3492 = vadd.f32 %v3443, %v3491
  %v3493 = vpop.f32.mrf.mxu0
  %v3494 = vadd.f32 %v3445, %v3493
  %3495 = vmatmul.bf16.gmra.mxu0 %v729
  %v3496 = vpop.f32.mrf.mxu0
  %v3497 = vadd.f32 %v3448, %v3496
  %v3498 = vpop.f32.mrf.mxu0
  %v3499 = vadd.f32 %v3450, %v3498
  %3500 = vmatmul.bf16.gmra.mxu0 %v737
  %v3501 = vpop.f32.mrf.mxu0
  %v3502 = vadd.f32 %v3453, %v3501
  %v3503 = vpop.f32.mrf.mxu0
  %v3504 = vadd.f32 %v3455, %v3503
  %3505 = vdwg.mxu0
  %3506 = vmatpush.bf16.msra.mxu0 %v1764
  %3507 = vmatpush.bf16.msra.mxu0 %v1760
  %3508 = vmatpush.bf16.msra.mxu0 %v1756
  %3509 = vmatpush.bf16.msra.mxu0 %v1752
  %3510 = vmatpush.bf16.msra.mxu0 %v1748
  %3511 = vmatpush.bf16.msra.mxu0 %v1744
  %3512 = vmatpush.bf16.msra.mxu0 %v1740
  %3513 = vmatpush.bf16.msra.mxu0 %v1736
  %3514 = vmatmul.bf16.gmra.mxu0 %v682
  %v3515 = vpop.f32.mrf.mxu0
  %v3516 = vadd.f32 %v3467, %v3515
  %v3517 = vpop.f32.mrf.mxu0
  %v3518 = vadd.f32 %v3469, %v3517
  %3519 = vmatmul.bf16.gmra.mxu0 %v690
  %v3520 = vpop.f32.mrf.mxu0
  %v3521 = vadd.f32 %v3472, %v3520
  %v3522 = vpop.f32.mrf.mxu0
  %v3523 = vadd.f32 %v3474, %v3522
  %3524 = vmatmul.bf16.gmra.mxu0 %v698
  %v3525 = vpop.f32.mrf.mxu0
  %v3526 = vadd.f32 %v3477, %v3525
  %v3527 = vpop.f32.mrf.mxu0
  %v3528 = vadd.f32 %v3479, %v3527
  %3529 = vmatmul.bf16.gmra.mxu0 %v706
  %v3530 = vpop.f32.mrf.mxu0
  %v3531 = vadd.f32 %v3482, %v3530
  %v3532 = vpop.f32.mrf.mxu0
  %v3533 = vadd.f32 %v3484, %v3532
  %3534 = vmatmul.bf16.gmra.mxu0 %v714
  %v3535 = vpop.f32.mrf.mxu0
  %v3536 = vadd.f32 %v3487, %v3535
  %v3537 = vpop.f32.mrf.mxu0
  %v3538 = vadd.f32 %v3489, %v3537
  %3539 = vmatmul.bf16.gmra.mxu0 %v722
  %v3540 = vpop.f32.mrf.mxu0
  %v3541 = vadd.f32 %v3492, %v3540
  %v3542 = vpop.f32.mrf.mxu0
  %v3543 = vadd.f32 %v3494, %v3542
  %3544 = vmatmul.bf16.gmra.mxu0 %v730
  %v3545 = vpop.f32.mrf.mxu0
  %v3546 = vadd.f32 %v3497, %v3545
  %v3547 = vpop.f32.mrf.mxu0
  %v3548 = vadd.f32 %v3499, %v3547
  %3549 = vmatmul.bf16.gmra.mxu0 %v738
  %v3550 = vpop.f32.mrf.mxu0
  %v3551 = vadd.f32 %v3502, %v3550
  %v3552 = vpop.f32.mrf.mxu0
  %v3553 = vadd.f32 %v3504, %v3552
  %3554 = vdwg.mxu0
  %3555 = vmatpush.bf16.msra.mxu0 %v1796
  %3556 = vmatpush.bf16.msra.mxu0 %v1792
  %3557 = vmatpush.bf16.msra.mxu0 %v1788
  %3558 = vmatpush.bf16.msra.mxu0 %v1784
  %3559 = vmatpush.bf16.msra.mxu0 %v1780
  %3560 = vmatpush.bf16.msra.mxu0 %v1776
  %3561 = vmatpush.bf16.msra.mxu0 %v1772
  %3562 = vmatpush.bf16.msra.mxu0 %v1768
  %3563 = vmatmul.bf16.gmra.mxu0 %v683
  %v3564 = vpop.f32.mrf.mxu0
  %v3565 = vadd.f32 %v3516, %v3564
  %v3566 = vpop.f32.mrf.mxu0
  %v3567 = vadd.f32 %v3518, %v3566
  %3568 = vmatmul.bf16.gmra.mxu0 %v691
  %v3569 = vpop.f32.mrf.mxu0
  %v3570 = vadd.f32 %v3521, %v3569
  %v3571 = vpop.f32.mrf.mxu0
  %v3572 = vadd.f32 %v3523, %v3571
  %3573 = vmatmul.bf16.gmra.mxu0 %v699
  %v3574 = vpop.f32.mrf.mxu0
  %v3575 = vadd.f32 %v3526, %v3574
  %v3576 = vpop.f32.mrf.mxu0
  %v3577 = vadd.f32 %v3528, %v3576
  %3578 = vmatmul.bf16.gmra.mxu0 %v707
  %v3579 = vpop.f32.mrf.mxu0
  %v3580 = vadd.f32 %v3531, %v3579
  %v3581 = vpop.f32.mrf.mxu0
  %v3582 = vadd.f32 %v3533, %v3581
  %3583 = vmatmul.bf16.gmra.mxu0 %v715
  %v3584 = vpop.f32.mrf.mxu0
  %v3585 = vadd.f32 %v3536, %v3584
  %v3586 = vpop.f32.mrf.mxu0
  %v3587 = vadd.f32 %v3538, %v3586
  %3588 = vmatmul.bf16.gmra.mxu0 %v723
  %v3589 = vpop.f32.mrf.mxu0
  %v3590 = vadd.f32 %v3541, %v3589
  %v3591 = vpop.f32.mrf.mxu0
  %v3592 = vadd.f32 %v3543, %v3591
  %3593 = vmatmul.bf16.gmra.mxu0 %v731
  %v3594 = vpop.f32.mrf.mxu0
  %v3595 = vadd.f32 %v3546, %v3594
  %v3596 = vpop.f32.mrf.mxu0
  %v3597 = vadd.f32 %v3548, %v3596
  %3598 = vmatmul.bf16.gmra.mxu0 %v739
  %v3599 = vpop.f32.mrf.mxu0
  %v3600 = vadd.f32 %v3551, %v3599
  %v3601 = vpop.f32.mrf.mxu0
  %v3602 = vadd.f32 %v3553, %v3601
  %3603 = vdwg.mxu0
  %3604 = vmatpush.bf16.msra.mxu0 %v1828
  %3605 = vmatpush.bf16.msra.mxu0 %v1824
  %3606 = vmatpush.bf16.msra.mxu0 %v1820
  %3607 = vmatpush.bf16.msra.mxu0 %v1816
  %3608 = vmatpush.bf16.msra.mxu0 %v1812
  %3609 = vmatpush.bf16.msra.mxu0 %v1808
  %3610 = vmatpush.bf16.msra.mxu0 %v1804
  %3611 = vmatpush.bf16.msra.mxu0 %v1800
  %3612 = vmatmul.bf16.gmra.mxu0 %v684
  %v3613 = vpop.f32.mrf.mxu0
  %v3614 = vadd.f32 %v3565, %v3613
  %v3615 = vpop.f32.mrf.mxu0
  %v3616 = vadd.f32 %v3567, %v3615
  %3617 = vmatmul.bf16.gmra.mxu0 %v692
  %v3618 = vpop.f32.mrf.mxu0
  %v3619 = vadd.f32 %v3570, %v3618
  %v3620 = vpop.f32.mrf.mxu0
  %v3621 = vadd.f32 %v3572, %v3620
  %3622 = vmatmul.bf16.gmra.mxu0 %v700
  %v3623 = vpop.f32.mrf.mxu0
  %v3624 = vadd.f32 %v3575, %v3623
  %v3625 = vpop.f32.mrf.mxu0
  %v3626 = vadd.f32 %v3577, %v3625
  %3627 = vmatmul.bf16.gmra.mxu0 %v708
  %v3628 = vpop.f32.mrf.mxu0
  %v3629 = vadd.f32 %v3580, %v3628
  %v3630 = vpop.f32.mrf.mxu0
  %v3631 = vadd.f32 %v3582, %v3630
  %3632 = vmatmul.bf16.gmra.mxu0 %v716
  %v3633 = vpop.f32.mrf.mxu0
  %v3634 = vadd.f32 %v3585, %v3633
  %v3635 = vpop.f32.mrf.mxu0
  %v3636 = vadd.f32 %v3587, %v3635
  %3637 = vmatmul.bf16.gmra.mxu0 %v724
  %v3638 = vpop.f32.mrf.mxu0
  %v3639 = vadd.f32 %v3590, %v3638
  %v3640 = vpop.f32.mrf.mxu0
  %v3641 = vadd.f32 %v3592, %v3640
  %3642 = vmatmul.bf16.gmra.mxu0 %v732
  %v3643 = vpop.f32.mrf.mxu0
  %v3644 = vadd.f32 %v3595, %v3643
  %v3645 = vpop.f32.mrf.mxu0
  %v3646 = vadd.f32 %v3597, %v3645
  %3647 = vmatmul.bf16.gmra.mxu0 %v740
  %v3648 = vpop.f32.mrf.mxu0
  %v3649 = vadd.f32 %v3600, %v3648
  %v3650 = vpop.f32.mrf.mxu0
  %v3651 = vadd.f32 %v3602, %v3650
  %3652 = vdwg.mxu0
  %v3653 = vadd.f32 %v101, %v2438
  %v3654 = vadd.f32 %v102, %v2830
  %v3655 = vadd.f32 %v103, %v3222
  %v3656 = vadd.f32 %v104, %v3614
  %v3657 = vadd.f32 %v105, %v2440
  %v3658 = vadd.f32 %v106, %v2832
  %v3659 = vadd.f32 %v107, %v3224
  %v3660 = vadd.f32 %v108, %v3616
  %v3661 = vadd.f32 %v109, %v2443
  %v3662 = vadd.f32 %v110, %v2835
  %v3663 = vadd.f32 %v111, %v3227
  %v3664 = vadd.f32 %v112, %v3619
  %v3665 = vadd.f32 %v113, %v2445
  %v3666 = vadd.f32 %v114, %v2837
  %v3667 = vadd.f32 %v115, %v3229
  %v3668 = vadd.f32 %v116, %v3621
  %v3669 = vadd.f32 %v117, %v2448
  %v3670 = vadd.f32 %v118, %v2840
  %v3671 = vadd.f32 %v119, %v3232
  %v3672 = vadd.f32 %v120, %v3624
  %v3673 = vadd.f32 %v121, %v2450
  %v3674 = vadd.f32 %v122, %v2842
  %v3675 = vadd.f32 %v123, %v3234
  %v3676 = vadd.f32 %v124, %v3626
  %v3677 = vadd.f32 %v125, %v2453
  %v3678 = vadd.f32 %v126, %v2845
  %v3679 = vadd.f32 %v127, %v3237
  %v3680 = vadd.f32 %v128, %v3629
  %v3681 = vadd.f32 %v129, %v2455
  %v3682 = vadd.f32 %v130, %v2847
  %v3683 = vadd.f32 %v131, %v3239
  %v3684 = vadd.f32 %v132, %v3631
  %v3685 = vadd.f32 %v133, %v2458
  %v3686 = vadd.f32 %v134, %v2850
  %v3687 = vadd.f32 %v135, %v3242
  %v3688 = vadd.f32 %v136, %v3634
  %v3689 = vadd.f32 %v137, %v2460
  %v3690 = vadd.f32 %v138, %v2852
  %v3691 = vadd.f32 %v139, %v3244
  %v3692 = vadd.f32 %v140, %v3636
  %v3693 = vadd.f32 %v141, %v2463
  %v3694 = vadd.f32 %v142, %v2855
  %v3695 = vadd.f32 %v143, %v3247
  %v3696 = vadd.f32 %v144, %v3639
  %v3697 = vadd.f32 %v145, %v2465
  %v3698 = vadd.f32 %v146, %v2857
  %v3699 = vadd.f32 %v147, %v3249
  %v3700 = vadd.f32 %v148, %v3641
  %v3701 = vadd.f32 %v149, %v2468
  %v3702 = vadd.f32 %v150, %v2860
  %v3703 = vadd.f32 %v151, %v3252
  %v3704 = vadd.f32 %v152, %v3644
  %v3705 = vadd.f32 %v153, %v2470
  %v3706 = vadd.f32 %v154, %v2862
  %v3707 = vadd.f32 %v155, %v3254
  %v3708 = vadd.f32 %v156, %v3646
  %v3709 = vadd.f32 %v157, %v2473
  %v3710 = vadd.f32 %v158, %v2865
  %v3711 = vadd.f32 %v159, %v3257
  %v3712 = vadd.f32 %v160, %v3649
  %v3713 = vadd.f32 %v161, %v2475
  %v3714 = vadd.f32 %v162, %v2867
  %v3715 = vadd.f32 %v163, %v3259
  %v3716 = vadd.f32 %v164, %v3651
  %3717 = vst [vmem:[#allocation2] sm:$0xff] %v3653
  %3718 = vst [vmem:[#allocation2 + $0x8] sm:$0xff] %v3654
  %3719 = vst [vmem:[#allocation2 + $0x10] sm:$0xff] %v3655
  %3720 = vst [vmem:[#allocation2 + $0x18] sm:$0xff] %v3656
  %3721 = vst [vmem:[#allocation2 + $0x20] sm:$0xff] %v3657
  %3722 = vst [vmem:[#allocation2 + $0x28] sm:$0xff] %v3658
  %3723 = vst [vmem:[#allocation2 + $0x30] sm:$0xff] %v3659
  %3724 = vst [vmem:[#allocation2 + $0x38] sm:$0xff] %v3660
  %3725 = vst [vmem:[#allocation2 + $0x40] sm:$0xff] %v3661
  %3726 = vst [vmem:[#allocation2 + $0x48] sm:$0xff] %v3662
  %3727 = vst [vmem:[#allocation2 + $0x50] sm:$0xff] %v3663
  %3728 = vst [vmem:[#allocation2 + $0x58] sm:$0xff] %v3664
  %3729 = vst [vmem:[#allocation2 + $0x60] sm:$0xff] %v3665
  %3730 = vst [vmem:[#allocation2 + $0x68] sm:$0xff] %v3666
  %3731 = vst [vmem:[#allocation2 + $0x70] sm:$0xff] %v3667
  %3732 = vst [vmem:[#allocation2 + $0x78] sm:$0xff] %v3668
  %3733 = vst [vmem:[#allocation2 + $0x80] sm:$0xff] %v3669
  %3734 = vst [vmem:[#allocation2 + $0x88] sm:$0xff] %v3670
  %3735 = vst [vmem:[#allocation2 + $0x90] sm:$0xff] %v3671
  %3736 = vst [vmem:[#allocation2 + $0x98] sm:$0xff] %v3672
  %3737 = vst [vmem:[#allocation2 + $0xa0] sm:$0xff] %v3673
  %3738 = vst [vmem:[#allocation2 + $0xa8] sm:$0xff] %v3674
  %3739 = vst [vmem:[#allocation2 + $0xb0] sm:$0xff] %v3675
  %3740 = vst [vmem:[#allocation2 + $0xb8] sm:$0xff] %v3676
  %3741 = vst [vmem:[#allocation2 + $0xc0] sm:$0xff] %v3677
  %3742 = vst [vmem:[#allocation2 + $0xc8] sm:$0xff] %v3678
  %3743 = vst [vmem:[#allocation2 + $0xd0] sm:$0xff] %v3679
  %3744 = vst [vmem:[#allocation2 + $0xd8] sm:$0xff] %v3680
  %3745 = vst [vmem:[#allocation2 + $0xe0] sm:$0xff] %v3681
  %3746 = vst [vmem:[#allocation2 + $0xe8] sm:$0xff] %v3682
  %3747 = vst [vmem:[#allocation2 + $0xf0] sm:$0xff] %v3683
  %3748 = vst [vmem:[#allocation2 + $0xf8] sm:$0xff] %v3684
  %3749 = vst [vmem:[#allocation2 + $0x100] sm:$0xff] %v3685
  %3750 = vst [vmem:[#allocation2 + $0x108] sm:$0xff] %v3686
  %3751 = vst [vmem:[#allocation2 + $0x110] sm:$0xff] %v3687
  %3752 = vst [vmem:[#allocation2 + $0x118] sm:$0xff] %v3688
  %3753 = vst [vmem:[#allocation2 + $0x120] sm:$0xff] %v3689
  %3754 = vst [vmem:[#allocation2 + $0x128] sm:$0xff] %v3690
  %3755 = vst [vmem:[#allocation2 + $0x130] sm:$0xff] %v3691
  %3756 = vst [vmem:[#allocation2 + $0x138] sm:$0xff] %v3692
  %3757 = vst [vmem:[#allocation2 + $0x140] sm:$0xff] %v3693
  %3758 = vst [vmem:[#allocation2 + $0x148] sm:$0xff] %v3694
  %3759 = vst [vmem:[#allocation2 + $0x150] sm:$0xff] %v3695
  %3760 = vst [vmem:[#allocation2 + $0x158] sm:$0xff] %v3696
  %3761 = vst [vmem:[#allocation2 + $0x160] sm:$0xff] %v3697
  %3762 = vst [vmem:[#allocation2 + $0x168] sm:$0xff] %v3698
  %3763 = vst [vmem:[#allocation2 + $0x170] sm:$0xff] %v3699
  %3764 = vst [vmem:[#allocation2 + $0x178] sm:$0xff] %v3700
  %3765 = vst [vmem:[#allocation2 + $0x180] sm:$0xff] %v3701
  %3766 = vst [vmem:[#allocation2 + $0x188] sm:$0xff] %v3702
  %3767 = vst [vmem:[#allocation2 + $0x190] sm:$0xff] %v3703
  %3768 = vst [vmem:[#allocation2 + $0x198] sm:$0xff] %v3704
  %3769 = vst [vmem:[#allocation2 + $0x1a0] sm:$0xff] %v3705
  %3770 = vst [vmem:[#allocation2 + $0x1a8] sm:$0xff] %v3706
  %3771 = vst [vmem:[#allocation2 + $0x1b0] sm:$0xff] %v3707
  %3772 = vst [vmem:[#allocation2 + $0x1b8] sm:$0xff] %v3708
  %3773 = vst [vmem:[#allocation2 + $0x1c0] sm:$0xff] %v3709
  %3774 = vst [vmem:[#allocation2 + $0x1c8] sm:$0xff] %v3710
  %3775 = vst [vmem:[#allocation2 + $0x1d0] sm:$0xff] %v3711
  %3776 = vst [vmem:[#allocation2 + $0x1d8] sm:$0xff] %v3712
  %3777 = vst [vmem:[#allocation2 + $0x1e0] sm:$0xff] %v3713
  %3778 = vst [vmem:[#allocation2 + $0x1e8] sm:$0xff] %v3714
  %3779 = vst [vmem:[#allocation2 + $0x1f0] sm:$0xff] %v3715
  %3780 = vst [vmem:[#allocation2 + $0x1f8] sm:$0xff] %v3716
  // Predicated region
  $region42: #{fc_critic_forward.1} parent=0 // pred_check
    %p3781 = pneg %p33
  $region43: #{fc_critic_forward.1} parent=0 // pred_check_branch
    %3783 = sbr.rel (%p3781) target = $region45
  $region44: #{fc_critic_forward.1} parent=0 // pred_region
    %v3784 = vld [vmem:[#allocation2] sm:$0xff]
    %v3785 = vld [vmem:[#allocation2 + $0x8] sm:$0xff]
    %v3786 = vld [vmem:[#allocation2 + $0x10] sm:$0xff]
    %v3787 = vld [vmem:[#allocation2 + $0x18] sm:$0xff]
    %v3788 = vld [vmem:[#allocation2 + $0x20] sm:$0xff]
    %v3789 = vld [vmem:[#allocation2 + $0x28] sm:$0xff]
    %v3790 = vld [vmem:[#allocation2 + $0x30] sm:$0xff]
    %v3791 = vld [vmem:[#allocation2 + $0x38] sm:$0xff]
    %v3792 = vld [vmem:[#allocation2 + $0x40] sm:$0xff]
    %v3793 = vld [vmem:[#allocation2 + $0x48] sm:$0xff]
    %v3794 = vld [vmem:[#allocation2 + $0x50] sm:$0xff]
    %v3795 = vld [vmem:[#allocation2 + $0x58] sm:$0xff]
    %v3796 = vld [vmem:[#allocation2 + $0x60] sm:$0xff]
    %v3797 = vld [vmem:[#allocation2 + $0x68] sm:$0xff]
    %v3798 = vld [vmem:[#allocation2 + $0x70] sm:$0xff]
    %v3799 = vld [vmem:[#allocation2 + $0x78] sm:$0xff]
    %v3800 = vld [vmem:[#allocation2 + $0x80] sm:$0xff]
    %v3801 = vld [vmem:[#allocation2 + $0x88] sm:$0xff]
    %v3802 = vld [vmem:[#allocation2 + $0x90] sm:$0xff]
    %v3803 = vld [vmem:[#allocation2 + $0x98] sm:$0xff]
    %v3804 = vld [vmem:[#allocation2 + $0xa0] sm:$0xff]
    %v3805 = vld [vmem:[#allocation2 + $0xa8] sm:$0xff]
    %v3806 = vld [vmem:[#allocation2 + $0xb0] sm:$0xff]
    %v3807 = vld [vmem:[#allocation2 + $0xb8] sm:$0xff]
    %v3808 = vld [vmem:[#allocation2 + $0xc0] sm:$0xff]
    %v3809 = vld [vmem:[#allocation2 + $0xc8] sm:$0xff]
    %v3810 = vld [vmem:[#allocation2 + $0xd0] sm:$0xff]
    %v3811 = vld [vmem:[#allocation2 + $0xd8] sm:$0xff]
    %v3812 = vld [vmem:[#allocation2 + $0xe0] sm:$0xff]
    %v3813 = vld [vmem:[#allocation2 + $0xe8] sm:$0xff]
    %v3814 = vld [vmem:[#allocation2 + $0xf0] sm:$0xff]
    %v3815 = vld [vmem:[#allocation2 + $0xf8] sm:$0xff]
    %v3816 = vld [vmem:[#allocation2 + $0x100] sm:$0xff]
    %v3817 = vld [vmem:[#allocation2 + $0x108] sm:$0xff]
    %v3818 = vld [vmem:[#allocation2 + $0x110] sm:$0xff]
    %v3819 = vld [vmem:[#allocation2 + $0x118] sm:$0xff]
    %v3820 = vld [vmem:[#allocation2 + $0x120] sm:$0xff]
    %v3821 = vld [vmem:[#allocation2 + $0x128] sm:$0xff]
    %v3822 = vld [vmem:[#allocation2 + $0x130] sm:$0xff]
    %v3823 = vld [vmem:[#allocation2 + $0x138] sm:$0xff]
    %v3824 = vld [vmem:[#allocation2 + $0x140] sm:$0xff]
    %v3825 = vld [vmem:[#allocation2 + $0x148] sm:$0xff]
    %v3826 = vld [vmem:[#allocation2 + $0x150] sm:$0xff]
    %v3827 = vld [vmem:[#allocation2 + $0x158] sm:$0xff]
    %v3828 = vld [vmem:[#allocation2 + $0x160] sm:$0xff]
    %v3829 = vld [vmem:[#allocation2 + $0x168] sm:$0xff]
    %v3830 = vld [vmem:[#allocation2 + $0x170] sm:$0xff]
    %v3831 = vld [vmem:[#allocation2 + $0x178] sm:$0xff]
    %v3832 = vld [vmem:[#allocation2 + $0x180] sm:$0xff]
    %v3833 = vld [vmem:[#allocation2 + $0x188] sm:$0xff]
    %v3834 = vld [vmem:[#allocation2 + $0x190] sm:$0xff]
    %v3835 = vld [vmem:[#allocation2 + $0x198] sm:$0xff]
    %v3836 = vld [vmem:[#allocation2 + $0x1a0] sm:$0xff]
    %v3837 = vld [vmem:[#allocation2 + $0x1a8] sm:$0xff]
    %v3838 = vld [vmem:[#allocation2 + $0x1b0] sm:$0xff]
    %v3839 = vld [vmem:[#allocation2 + $0x1b8] sm:$0xff]
    %v3840 = vld [vmem:[#allocation2 + $0x1c0] sm:$0xff]
    %v3841 = vld [vmem:[#allocation2 + $0x1c8] sm:$0xff]
    %v3842 = vld [vmem:[#allocation2 + $0x1d0] sm:$0xff]
    %v3843 = vld [vmem:[#allocation2 + $0x1d8] sm:$0xff]
    %v3844 = vld [vmem:[#allocation2 + $0x1e0] sm:$0xff]
    %v3845 = vld [vmem:[#allocation2 + $0x1e8] sm:$0xff]
    %v3846 = vld [vmem:[#allocation2 + $0x1f0] sm:$0xff]
    %v3847 = vld [vmem:[#allocation2 + $0x1f8] sm:$0xff]
    %v3848 = vld [vmem:[%s2] sm:$0xf]
    %v3850 = vperm.slane %v3848, 0
    %v3851 = vperm.slane %v3848, 1
    %v3852 = vperm.slane %v3848, 2
    %v3853 = vperm.slane %v3848, 3
    %v3858 = vadd.f32 %v3784, %v3850
    %v3859 = vadd.f32 %v3785, %v3851
    %v3860 = vadd.f32 %v3786, %v3852
    %v3861 = vadd.f32 %v3787, %v3853
    %v3862 = vadd.f32 %v3788, %v3850
    %v3863 = vadd.f32 %v3789, %v3851
    %v3864 = vadd.f32 %v3790, %v3852
    %v3865 = vadd.f32 %v3791, %v3853
    %v3866 = vadd.f32 %v3792, %v3850
    %v3867 = vadd.f32 %v3793, %v3851
    %v3868 = vadd.f32 %v3794, %v3852
    %v3869 = vadd.f32 %v3795, %v3853
    %v3870 = vadd.f32 %v3796, %v3850
    %v3871 = vadd.f32 %v3797, %v3851
    %v3872 = vadd.f32 %v3798, %v3852
    %v3873 = vadd.f32 %v3799, %v3853
    %v3874 = vadd.f32 %v3800, %v3850
    %v3875 = vadd.f32 %v3801, %v3851
    %v3876 = vadd.f32 %v3802, %v3852
    %v3877 = vadd.f32 %v3803, %v3853
    %v3878 = vadd.f32 %v3804, %v3850
    %v3879 = vadd.f32 %v3805, %v3851
    %v3880 = vadd.f32 %v3806, %v3852
    %v3881 = vadd.f32 %v3807, %v3853
    %v3882 = vadd.f32 %v3808, %v3850
    %v3883 = vadd.f32 %v3809, %v3851
    %v3884 = vadd.f32 %v3810, %v3852
    %v3885 = vadd.f32 %v3811, %v3853
    %v3886 = vadd.f32 %v3812, %v3850
    %v3887 = vadd.f32 %v3813, %v3851
    %v3888 = vadd.f32 %v3814, %v3852
    %v3889 = vadd.f32 %v3815, %v3853
    %v3890 = vadd.f32 %v3816, %v3850
    %v3891 = vadd.f32 %v3817, %v3851
    %v3892 = vadd.f32 %v3818, %v3852
    %v3893 = vadd.f32 %v3819, %v3853
    %v3894 = vadd.f32 %v3820, %v3850
    %v3895 = vadd.f32 %v3821, %v3851
    %v3896 = vadd.f32 %v3822, %v3852
    %v3897 = vadd.f32 %v3823, %v3853
    %v3898 = vadd.f32 %v3824, %v3850
    %v3899 = vadd.f32 %v3825, %v3851
    %v3900 = vadd.f32 %v3826, %v3852
    %v3901 = vadd.f32 %v3827, %v3853
    %v3902 = vadd.f32 %v3828, %v3850
    %v3903 = vadd.f32 %v3829, %v3851
    %v3904 = vadd.f32 %v3830, %v3852
    %v3905 = vadd.f32 %v3831, %v3853
    %v3906 = vadd.f32 %v3832, %v3850
    %v3907 = vadd.f32 %v3833, %v3851
    %v3908 = vadd.f32 %v3834, %v3852
    %v3909 = vadd.f32 %v3835, %v3853
    %v3910 = vadd.f32 %v3836, %v3850
    %v3911 = vadd.f32 %v3837, %v3851
    %v3912 = vadd.f32 %v3838, %v3852
    %v3913 = vadd.f32 %v3839, %v3853
    %v3914 = vadd.f32 %v3840, %v3850
    %v3915 = vadd.f32 %v3841, %v3851
    %v3916 = vadd.f32 %v3842, %v3852
    %v3917 = vadd.f32 %v3843, %v3853
    %v3918 = vadd.f32 %v3844, %v3850
    %v3919 = vadd.f32 %v3845, %v3851
    %v3920 = vadd.f32 %v3846, %v3852
    %v3921 = vadd.f32 %v3847, %v3853
    %v3922 = vmax.f32 %v3858, 0.0
    %v3923 = vmax.f32 %v3859, 0.0
    %v3924 = vmax.f32 %v3860, 0.0
    %v3925 = vmax.f32 %v3861, 0.0
    %v3926 = vmax.f32 %v3862, 0.0
    %v3927 = vmax.f32 %v3863, 0.0
    %v3928 = vmax.f32 %v3864, 0.0
    %v3929 = vmax.f32 %v3865, 0.0
    %v3930 = vmax.f32 %v3866, 0.0
    %v3931 = vmax.f32 %v3867, 0.0
    %v3932 = vmax.f32 %v3868, 0.0
    %v3933 = vmax.f32 %v3869, 0.0
    %v3934 = vmax.f32 %v3870, 0.0
    %v3935 = vmax.f32 %v3871, 0.0
    %v3936 = vmax.f32 %v3872, 0.0
    %v3937 = vmax.f32 %v3873, 0.0
    %v3938 = vmax.f32 %v3874, 0.0
    %v3939 = vmax.f32 %v3875, 0.0
    %v3940 = vmax.f32 %v3876, 0.0
    %v3941 = vmax.f32 %v3877, 0.0
    %v3942 = vmax.f32 %v3878, 0.0
    %v3943 = vmax.f32 %v3879, 0.0
    %v3944 = vmax.f32 %v3880, 0.0
    %v3945 = vmax.f32 %v3881, 0.0
    %v3946 = vmax.f32 %v3882, 0.0
    %v3947 = vmax.f32 %v3883, 0.0
    %v3948 = vmax.f32 %v3884, 0.0
    %v3949 = vmax.f32 %v3885, 0.0
    %v3950 = vmax.f32 %v3886, 0.0
    %v3951 = vmax.f32 %v3887, 0.0
    %v3952 = vmax.f32 %v3888, 0.0
    %v3953 = vmax.f32 %v3889, 0.0
    %v3954 = vmax.f32 %v3890, 0.0
    %v3955 = vmax.f32 %v3891, 0.0
    %v3956 = vmax.f32 %v3892, 0.0
    %v3957 = vmax.f32 %v3893, 0.0
    %v3958 = vmax.f32 %v3894, 0.0
    %v3959 = vmax.f32 %v3895, 0.0
    %v3960 = vmax.f32 %v3896, 0.0
    %v3961 = vmax.f32 %v3897, 0.0
    %v3962 = vmax.f32 %v3898, 0.0
    %v3963 = vmax.f32 %v3899, 0.0
    %v3964 = vmax.f32 %v3900, 0.0
    %v3965 = vmax.f32 %v3901, 0.0
    %v3966 = vmax.f32 %v3902, 0.0
    %v3967 = vmax.f32 %v3903, 0.0
    %v3968 = vmax.f32 %v3904, 0.0
    %v3969 = vmax.f32 %v3905, 0.0
    %v3970 = vmax.f32 %v3906, 0.0
    %v3971 = vmax.f32 %v3907, 0.0
    %v3972 = vmax.f32 %v3908, 0.0
    %v3973 = vmax.f32 %v3909, 0.0
    %v3974 = vmax.f32 %v3910, 0.0
    %v3975 = vmax.f32 %v3911, 0.0
    %v3976 = vmax.f32 %v3912, 0.0
    %v3977 = vmax.f32 %v3913, 0.0
    %v3978 = vmax.f32 %v3914, 0.0
    %v3979 = vmax.f32 %v3915, 0.0
    %v3980 = vmax.f32 %v3916, 0.0
    %v3981 = vmax.f32 %v3917, 0.0
    %v3982 = vmax.f32 %v3918, 0.0
    %v3983 = vmax.f32 %v3919, 0.0
    %v3984 = vmax.f32 %v3920, 0.0
    %v3985 = vmax.f32 %v3921, 0.0
    %v3986 = vpack.c.bf16 %v3926, %v3922
    %v3987 = vpack.c.bf16 %v3927, %v3923
    %v3988 = vpack.c.bf16 %v3928, %v3924
    %v3989 = vpack.c.bf16 %v3929, %v3925
    %v3990 = vpack.c.bf16 %v3934, %v3930
    %v3991 = vpack.c.bf16 %v3935, %v3931
    %v3992 = vpack.c.bf16 %v3936, %v3932
    %v3993 = vpack.c.bf16 %v3937, %v3933
    %v3994 = vpack.c.bf16 %v3942, %v3938
    %v3995 = vpack.c.bf16 %v3943, %v3939
    %v3996 = vpack.c.bf16 %v3944, %v3940
    %v3997 = vpack.c.bf16 %v3945, %v3941
    %v3998 = vpack.c.bf16 %v3950, %v3946
    %v3999 = vpack.c.bf16 %v3951, %v3947
    %v4000 = vpack.c.bf16 %v3952, %v3948
    %v4001 = vpack.c.bf16 %v3953, %v3949
    %v4002 = vpack.c.bf16 %v3958, %v3954
    %v4003 = vpack.c.bf16 %v3959, %v3955
    %v4004 = vpack.c.bf16 %v3960, %v3956
    %v4005 = vpack.c.bf16 %v3961, %v3957
    %v4006 = vpack.c.bf16 %v3966, %v3962
    %v4007 = vpack.c.bf16 %v3967, %v3963
    %v4008 = vpack.c.bf16 %v3968, %v3964
    %v4009 = vpack.c.bf16 %v3969, %v3965
    %v4010 = vpack.c.bf16 %v3974, %v3970
    %v4011 = vpack.c.bf16 %v3975, %v3971
    %v4012 = vpack.c.bf16 %v3976, %v3972
    %v4013 = vpack.c.bf16 %v3977, %v3973
    %v4014 = vpack.c.bf16 %v3982, %v3978
    %v4015 = vpack.c.bf16 %v3983, %v3979
    %v4016 = vpack.c.bf16 %v3984, %v3980
    %v4017 = vpack.c.bf16 %v3985, %v3981
    %v4018 = vld [vmem:[%s3] sm:$0xff]
    %v4019 = vld [vmem:[%s3 + $0x8] sm:$0xff]
    %v4020 = vld [vmem:[%s3 + $0x10] sm:$0xff]
    %v4021 = vld [vmem:[%s3 + $0x18] sm:$0xff]
    %v4022 = vld [vmem:[%s3 + $0x20] sm:$0xff]
    %v4023 = vld [vmem:[%s3 + $0x28] sm:$0xff]
    %v4024 = vld [vmem:[%s3 + $0x30] sm:$0xff]
    %v4025 = vld [vmem:[%s3 + $0x38] sm:$0xff]
    %v4026 = vld [vmem:[%s3 + $0x40] sm:$0xff]
    %v4027 = vld [vmem:[%s3 + $0x48] sm:$0xff]
    %v4028 = vld [vmem:[%s3 + $0x50] sm:$0xff]
    %v4029 = vld [vmem:[%s3 + $0x58] sm:$0xff]
    %v4030 = vld [vmem:[%s3 + $0x60] sm:$0xff]
    %v4031 = vld [vmem:[%s3 + $0x68] sm:$0xff]
    %v4032 = vld [vmem:[%s3 + $0x70] sm:$0xff]
    %v4033 = vld [vmem:[%s3 + $0x78] sm:$0xff]
    %v4034 = vld [vmem:[%s3 + $0x80] sm:$0xff]
    %v4035 = vld [vmem:[%s3 + $0x88] sm:$0xff]
    %v4036 = vld [vmem:[%s3 + $0x90] sm:$0xff]
    %v4037 = vld [vmem:[%s3 + $0x98] sm:$0xff]
    %v4038 = vld [vmem:[%s3 + $0xa0] sm:$0xff]
    %v4039 = vld [vmem:[%s3 + $0xa8] sm:$0xff]
    %v4040 = vld [vmem:[%s3 + $0xb0] sm:$0xff]
    %v4041 = vld [vmem:[%s3 + $0xb8] sm:$0xff]
    %v4042 = vld [vmem:[%s3 + $0xc0] sm:$0xff]
    %v4043 = vld [vmem:[%s3 + $0xc8] sm:$0xff]
    %v4044 = vld [vmem:[%s3 + $0xd0] sm:$0xff]
    %v4045 = vld [vmem:[%s3 + $0xd8] sm:$0xff]
    %v4046 = vld [vmem:[%s3 + $0xe0] sm:$0xff]
    %v4047 = vld [vmem:[%s3 + $0xe8] sm:$0xff]
    %v4048 = vld [vmem:[%s3 + $0xf0] sm:$0xff]
    %v4049 = vld [vmem:[%s3 + $0xf8] sm:$0xff]
    %v4050 = vld [vmem:[%s3 + $0x100] sm:$0xff]
    %v4051 = vld [vmem:[%s3 + $0x108] sm:$0xff]
    %v4052 = vld [vmem:[%s3 + $0x110] sm:$0xff]
    %v4053 = vld [vmem:[%s3 + $0x118] sm:$0xff]
    %v4054 = vld [vmem:[%s3 + $0x120] sm:$0xff]
    %v4055 = vld [vmem:[%s3 + $0x128] sm:$0xff]
    %v4056 = vld [vmem:[%s3 + $0x130] sm:$0xff]
    %v4057 = vld [vmem:[%s3 + $0x138] sm:$0xff]
    %v4058 = vld [vmem:[%s3 + $0x140] sm:$0xff]
    %v4059 = vld [vmem:[%s3 + $0x148] sm:$0xff]
    %v4060 = vld [vmem:[%s3 + $0x150] sm:$0xff]
    %v4061 = vld [vmem:[%s3 + $0x158] sm:$0xff]
    %v4062 = vld [vmem:[%s3 + $0x160] sm:$0xff]
    %v4063 = vld [vmem:[%s3 + $0x168] sm:$0xff]
    %v4064 = vld [vmem:[%s3 + $0x170] sm:$0xff]
    %v4065 = vld [vmem:[%s3 + $0x178] sm:$0xff]
    %v4066 = vld [vmem:[%s3 + $0x180] sm:$0xff]
    %v4067 = vld [vmem:[%s3 + $0x188] sm:$0xff]
    %v4068 = vld [vmem:[%s3 + $0x190] sm:$0xff]
    %v4069 = vld [vmem:[%s3 + $0x198] sm:$0xff]
    %v4070 = vld [vmem:[%s3 + $0x1a0] sm:$0xff]
    %v4071 = vld [vmem:[%s3 + $0x1a8] sm:$0xff]
    %v4072 = vld [vmem:[%s3 + $0x1b0] sm:$0xff]
    %v4073 = vld [vmem:[%s3 + $0x1b8] sm:$0xff]
    %v4074 = vld [vmem:[%s3 + $0x1c0] sm:$0xff]
    %v4075 = vld [vmem:[%s3 + $0x1c8] sm:$0xff]
    %v4076 = vld [vmem:[%s3 + $0x1d0] sm:$0xff]
    %v4077 = vld [vmem:[%s3 + $0x1d8] sm:$0xff]
    %v4078 = vld [vmem:[%s3 + $0x1e0] sm:$0xff]
    %v4079 = vld [vmem:[%s3 + $0x1e8] sm:$0xff]
    %v4080 = vld [vmem:[%s3 + $0x1f0] sm:$0xff]
    %v4081 = vld [vmem:[%s3 + $0x1f8] sm:$0xff]
    %v4082 = vld [vmem:[%s4] sm:$0x3]
    %v4084 = vperm.slane %v4082, 0
    %v4085 = vperm.slane %v4082, 1
    %v4152 = vunpack.c.l.b16 %v4018
    %v4153 = vunpack.c.h.b16 %v4018
    %v4154 = vunpack.c.l.b16 %v4019
    %v4155 = vunpack.c.h.b16 %v4019
    %v4156 = vunpack.c.l.b16 %v4020
    %v4157 = vunpack.c.h.b16 %v4020
    %v4158 = vunpack.c.l.b16 %v4021
    %v4159 = vunpack.c.h.b16 %v4021
    %v4160 = vunpack.c.l.b16 %v4022
    %v4161 = vunpack.c.h.b16 %v4022
    %v4162 = vunpack.c.l.b16 %v4023
    %v4163 = vunpack.c.h.b16 %v4023
    %v4164 = vunpack.c.l.b16 %v4024
    %v4165 = vunpack.c.h.b16 %v4024
    %v4166 = vunpack.c.l.b16 %v4025
    %v4167 = vunpack.c.h.b16 %v4025
    %v4168 = vunpack.c.l.b16 %v4026
    %v4169 = vunpack.c.h.b16 %v4026
    %v4170 = vunpack.c.l.b16 %v4027
    %v4171 = vunpack.c.h.b16 %v4027
    %v4172 = vunpack.c.l.b16 %v4028
    %v4173 = vunpack.c.h.b16 %v4028
    %v4174 = vunpack.c.l.b16 %v4029
    %v4175 = vunpack.c.h.b16 %v4029
    %v4176 = vunpack.c.l.b16 %v4030
    %v4177 = vunpack.c.h.b16 %v4030
    %v4178 = vunpack.c.l.b16 %v4031
    %v4179 = vunpack.c.h.b16 %v4031
    %v4180 = vunpack.c.l.b16 %v4032
    %v4181 = vunpack.c.h.b16 %v4032
    %v4182 = vunpack.c.l.b16 %v4033
    %v4183 = vunpack.c.h.b16 %v4033
    %v4184 = vunpack.c.l.b16 %v4034
    %v4185 = vunpack.c.h.b16 %v4034
    %v4186 = vunpack.c.l.b16 %v4035
    %v4187 = vunpack.c.h.b16 %v4035
    %v4188 = vunpack.c.l.b16 %v4036
    %v4189 = vunpack.c.h.b16 %v4036
    %v4190 = vunpack.c.l.b16 %v4037
    %v4191 = vunpack.c.h.b16 %v4037
    %v4192 = vunpack.c.l.b16 %v4038
    %v4193 = vunpack.c.h.b16 %v4038
    %v4194 = vunpack.c.l.b16 %v4039
    %v4195 = vunpack.c.h.b16 %v4039
    %v4196 = vunpack.c.l.b16 %v4040
    %v4197 = vunpack.c.h.b16 %v4040
    %v4198 = vunpack.c.l.b16 %v4041
    %v4199 = vunpack.c.h.b16 %v4041
    %v4200 = vunpack.c.l.b16 %v4042
    %v4201 = vunpack.c.h.b16 %v4042
    %v4202 = vunpack.c.l.b16 %v4043
    %v4203 = vunpack.c.h.b16 %v4043
    %v4204 = vunpack.c.l.b16 %v4044
    %v4205 = vunpack.c.h.b16 %v4044
    %v4206 = vunpack.c.l.b16 %v4045
    %v4207 = vunpack.c.h.b16 %v4045
    %v4208 = vunpack.c.l.b16 %v4046
    %v4209 = vunpack.c.h.b16 %v4046
    %v4210 = vunpack.c.l.b16 %v4047
    %v4211 = vunpack.c.h.b16 %v4047
    %v4212 = vunpack.c.l.b16 %v4048
    %v4213 = vunpack.c.h.b16 %v4048
    %v4214 = vunpack.c.l.b16 %v4049
    %v4215 = vunpack.c.h.b16 %v4049
    %v4216 = vunpack.c.l.b16 %v4050
    %v4217 = vunpack.c.h.b16 %v4050
    %v4218 = vunpack.c.l.b16 %v4051
    %v4219 = vunpack.c.h.b16 %v4051
    %v4220 = vunpack.c.l.b16 %v4052
    %v4221 = vunpack.c.h.b16 %v4052
    %v4222 = vunpack.c.l.b16 %v4053
    %v4223 = vunpack.c.h.b16 %v4053
    %v4224 = vunpack.c.l.b16 %v4054
    %v4225 = vunpack.c.h.b16 %v4054
    %v4226 = vunpack.c.l.b16 %v4055
    %v4227 = vunpack.c.h.b16 %v4055
    %v4228 = vunpack.c.l.b16 %v4056
    %v4229 = vunpack.c.h.b16 %v4056
    %v4230 = vunpack.c.l.b16 %v4057
    %v4231 = vunpack.c.h.b16 %v4057
    %v4232 = vunpack.c.l.b16 %v4058
    %v4233 = vunpack.c.h.b16 %v4058
    %v4234 = vunpack.c.l.b16 %v4059
    %v4235 = vunpack.c.h.b16 %v4059
    %v4236 = vunpack.c.l.b16 %v4060
    %v4237 = vunpack.c.h.b16 %v4060
    %v4238 = vunpack.c.l.b16 %v4061
    %v4239 = vunpack.c.h.b16 %v4061
    %v4240 = vunpack.c.l.b16 %v4062
    %v4241 = vunpack.c.h.b16 %v4062
    %v4242 = vunpack.c.l.b16 %v4063
    %v4243 = vunpack.c.h.b16 %v4063
    %v4244 = vunpack.c.l.b16 %v4064
    %v4245 = vunpack.c.h.b16 %v4064
    %v4246 = vunpack.c.l.b16 %v4065
    %v4247 = vunpack.c.h.b16 %v4065
    %v4248 = vunpack.c.l.b16 %v4066
    %v4249 = vunpack.c.h.b16 %v4066
    %v4250 = vunpack.c.l.b16 %v4067
    %v4251 = vunpack.c.h.b16 %v4067
    %v4252 = vunpack.c.l.b16 %v4068
    %v4253 = vunpack.c.h.b16 %v4068
    %v4254 = vunpack.c.l.b16 %v4069
    %v4255 = vunpack.c.h.b16 %v4069
    %v4256 = vunpack.c.l.b16 %v4070
    %v4257 = vunpack.c.h.b16 %v4070
    %v4258 = vunpack.c.l.b16 %v4071
    %v4259 = vunpack.c.h.b16 %v4071
    %v4260 = vunpack.c.l.b16 %v4072
    %v4261 = vunpack.c.h.b16 %v4072
    %v4262 = vunpack.c.l.b16 %v4073
    %v4263 = vunpack.c.h.b16 %v4073
    %v4264 = vunpack.c.l.b16 %v4074
    %v4265 = vunpack.c.h.b16 %v4074
    %v4266 = vunpack.c.l.b16 %v4075
    %v4267 = vunpack.c.h.b16 %v4075
    %v4268 = vunpack.c.l.b16 %v4076
    %v4269 = vunpack.c.h.b16 %v4076
    %v4270 = vunpack.c.l.b16 %v4077
    %v4271 = vunpack.c.h.b16 %v4077
    %v4272 = vunpack.c.l.b16 %v4078
    %v4273 = vunpack.c.h.b16 %v4078
    %v4274 = vunpack.c.l.b16 %v4079
    %v4275 = vunpack.c.h.b16 %v4079
    %v4276 = vunpack.c.l.b16 %v4080
    %v4277 = vunpack.c.h.b16 %v4080
    %v4278 = vunpack.c.l.b16 %v4081
    %v4279 = vunpack.c.h.b16 %v4081
    %v4280 = vpack.c.b16 %v4154, %v4152
    %v4281 = vpack.c.b16 %v4155, %v4153
    %v4282 = vpack.c.b16 %v4158, %v4156
    %v4283 = vpack.c.b16 %v4159, %v4157
    %v4284 = vpack.c.b16 %v4162, %v4160
    %v4285 = vpack.c.b16 %v4163, %v4161
    %v4286 = vpack.c.b16 %v4166, %v4164
    %v4287 = vpack.c.b16 %v4167, %v4165
    %v4288 = vpack.c.b16 %v4170, %v4168
    %v4289 = vpack.c.b16 %v4171, %v4169
    %v4290 = vpack.c.b16 %v4174, %v4172
    %v4291 = vpack.c.b16 %v4175, %v4173
    %v4292 = vpack.c.b16 %v4178, %v4176
    %v4293 = vpack.c.b16 %v4179, %v4177
    %v4294 = vpack.c.b16 %v4182, %v4180
    %v4295 = vpack.c.b16 %v4183, %v4181
    %v4296 = vpack.c.b16 %v4186, %v4184
    %v4297 = vpack.c.b16 %v4187, %v4185
    %v4298 = vpack.c.b16 %v4190, %v4188
    %v4299 = vpack.c.b16 %v4191, %v4189
    %v4300 = vpack.c.b16 %v4194, %v4192
    %v4301 = vpack.c.b16 %v4195, %v4193
    %v4302 = vpack.c.b16 %v4198, %v4196
    %v4303 = vpack.c.b16 %v4199, %v4197
    %v4304 = vpack.c.b16 %v4202, %v4200
    %v4305 = vpack.c.b16 %v4203, %v4201
    %v4306 = vpack.c.b16 %v4206, %v4204
    %v4307 = vpack.c.b16 %v4207, %v4205
    %v4308 = vpack.c.b16 %v4210, %v4208
    %v4309 = vpack.c.b16 %v4211, %v4209
    %v4310 = vpack.c.b16 %v4214, %v4212
    %v4311 = vpack.c.b16 %v4215, %v4213
    %v4312 = vpack.c.b16 %v4218, %v4216
    %v4313 = vpack.c.b16 %v4219, %v4217
    %v4314 = vpack.c.b16 %v4222, %v4220
    %v4315 = vpack.c.b16 %v4223, %v4221
    %v4316 = vpack.c.b16 %v4226, %v4224
    %v4317 = vpack.c.b16 %v4227, %v4225
    %v4318 = vpack.c.b16 %v4230, %v4228
    %v4319 = vpack.c.b16 %v4231, %v4229
    %v4320 = vpack.c.b16 %v4234, %v4232
    %v4321 = vpack.c.b16 %v4235, %v4233
    %v4322 = vpack.c.b16 %v4238, %v4236
    %v4323 = vpack.c.b16 %v4239, %v4237
    %v4324 = vpack.c.b16 %v4242, %v4240
    %v4325 = vpack.c.b16 %v4243, %v4241
    %v4326 = vpack.c.b16 %v4246, %v4244
    %v4327 = vpack.c.b16 %v4247, %v4245
    %v4328 = vpack.c.b16 %v4250, %v4248
    %v4329 = vpack.c.b16 %v4251, %v4249
    %v4330 = vpack.c.b16 %v4254, %v4252
    %v4331 = vpack.c.b16 %v4255, %v4253
    %v4332 = vpack.c.b16 %v4258, %v4256
    %v4333 = vpack.c.b16 %v4259, %v4257
    %v4334 = vpack.c.b16 %v4262, %v4260
    %v4335 = vpack.c.b16 %v4263, %v4261
    %v4336 = vpack.c.b16 %v4266, %v4264
    %v4337 = vpack.c.b16 %v4267, %v4265
    %v4338 = vpack.c.b16 %v4270, %v4268
    %v4339 = vpack.c.b16 %v4271, %v4269
    %v4340 = vpack.c.b16 %v4274, %v4272
    %v4341 = vpack.c.b16 %v4275, %v4273
    %v4342 = vpack.c.b16 %v4278, %v4276
    %v4343 = vpack.c.b16 %v4279, %v4277
    %4408 = vmatpush.bf16.msra.mxu0 %v4294
    %4409 = vmatpush.bf16.msra.mxu0 %v4292
    %4410 = vmatpush.bf16.msra.mxu0 %v4290
    %4411 = vmatpush.bf16.msra.mxu0 %v4288
    %4412 = vmatpush.bf16.msra.mxu0 %v4286
    %4413 = vmatpush.bf16.msra.mxu0 %v4284
    %4414 = vmatpush.bf16.msra.mxu0 %v4282
    %4415 = vmatpush.bf16.msra.mxu0 %v4280
    %4416 = vmatmul.bf16.gmra.mxu0 %v3986
    %v4417 = vpop.f32.mrf.mxu0
    %v4418 = vadd.f32 %v4084, %v4417
    %v4419 = vpop.f32.mrf.mxu0
    %v4420 = vadd.f32 %v4084, %v4419
    %4421 = vmatmul.bf16.gmra.mxu0 %v3990
    %v4422 = vpop.f32.mrf.mxu0
    %v4423 = vadd.f32 %v4084, %v4422
    %v4424 = vpop.f32.mrf.mxu0
    %v4425 = vadd.f32 %v4084, %v4424
    %4426 = vmatmul.bf16.gmra.mxu0 %v3994
    %v4427 = vpop.f32.mrf.mxu0
    %v4428 = vadd.f32 %v4084, %v4427
    %v4429 = vpop.f32.mrf.mxu0
    %v4430 = vadd.f32 %v4084, %v4429
    %4431 = vmatmul.bf16.gmra.mxu0 %v3998
    %v4432 = vpop.f32.mrf.mxu0
    %v4433 = vadd.f32 %v4084, %v4432
    %v4434 = vpop.f32.mrf.mxu0
    %v4435 = vadd.f32 %v4084, %v4434
    %4436 = vmatmul.bf16.gmra.mxu0 %v4002
    %v4437 = vpop.f32.mrf.mxu0
    %v4438 = vadd.f32 %v4084, %v4437
    %v4439 = vpop.f32.mrf.mxu0
    %v4440 = vadd.f32 %v4084, %v4439
    %4441 = vmatmul.bf16.gmra.mxu0 %v4006
    %v4442 = vpop.f32.mrf.mxu0
    %v4443 = vadd.f32 %v4084, %v4442
    %v4444 = vpop.f32.mrf.mxu0
    %v4445 = vadd.f32 %v4084, %v4444
    %4446 = vmatmul.bf16.gmra.mxu0 %v4010
    %v4447 = vpop.f32.mrf.mxu0
    %v4448 = vadd.f32 %v4084, %v4447
    %v4449 = vpop.f32.mrf.mxu0
    %v4450 = vadd.f32 %v4084, %v4449
    %4451 = vmatmul.bf16.gmra.mxu0 %v4014
    %v4452 = vpop.f32.mrf.mxu0
    %v4453 = vadd.f32 %v4084, %v4452
    %v4454 = vpop.f32.mrf.mxu0
    %v4455 = vadd.f32 %v4084, %v4454
    %4456 = vdwg.mxu0
    %4457 = vmatpush.bf16.msra.mxu0 %v4310
    %4458 = vmatpush.bf16.msra.mxu0 %v4308
    %4459 = vmatpush.bf16.msra.mxu0 %v4306
    %4460 = vmatpush.bf16.msra.mxu0 %v4304
    %4461 = vmatpush.bf16.msra.mxu0 %v4302
    %4462 = vmatpush.bf16.msra.mxu0 %v4300
    %4463 = vmatpush.bf16.msra.mxu0 %v4298
    %4464 = vmatpush.bf16.msra.mxu0 %v4296
    %4465 = vmatmul.bf16.gmra.mxu0 %v3987
    %v4466 = vpop.f32.mrf.mxu0
    %v4467 = vadd.f32 %v4418, %v4466
    %v4468 = vpop.f32.mrf.mxu0
    %v4469 = vadd.f32 %v4420, %v4468
    %4470 = vmatmul.bf16.gmra.mxu0 %v3991
    %v4471 = vpop.f32.mrf.mxu0
    %v4472 = vadd.f32 %v4423, %v4471
    %v4473 = vpop.f32.mrf.mxu0
    %v4474 = vadd.f32 %v4425, %v4473
    %4475 = vmatmul.bf16.gmra.mxu0 %v3995
    %v4476 = vpop.f32.mrf.mxu0
    %v4477 = vadd.f32 %v4428, %v4476
    %v4478 = vpop.f32.mrf.mxu0
    %v4479 = vadd.f32 %v4430, %v4478
    %4480 = vmatmul.bf16.gmra.mxu0 %v3999
    %v4481 = vpop.f32.mrf.mxu0
    %v4482 = vadd.f32 %v4433, %v4481
    %v4483 = vpop.f32.mrf.mxu0
    %v4484 = vadd.f32 %v4435, %v4483
    %4485 = vmatmul.bf16.gmra.mxu0 %v4003
    %v4486 = vpop.f32.mrf.mxu0
    %v4487 = vadd.f32 %v4438, %v4486
    %v4488 = vpop.f32.mrf.mxu0
    %v4489 = vadd.f32 %v4440, %v4488
    %4490 = vmatmul.bf16.gmra.mxu0 %v4007
    %v4491 = vpop.f32.mrf.mxu0
    %v4492 = vadd.f32 %v4443, %v4491
    %v4493 = vpop.f32.mrf.mxu0
    %v4494 = vadd.f32 %v4445, %v4493
    %4495 = vmatmul.bf16.gmra.mxu0 %v4011
    %v4496 = vpop.f32.mrf.mxu0
    %v4497 = vadd.f32 %v4448, %v4496
    %v4498 = vpop.f32.mrf.mxu0
    %v4499 = vadd.f32 %v4450, %v4498
    %4500 = vmatmul.bf16.gmra.mxu0 %v4015
    %v4501 = vpop.f32.mrf.mxu0
    %v4502 = vadd.f32 %v4453, %v4501
    %v4503 = vpop.f32.mrf.mxu0
    %v4504 = vadd.f32 %v4455, %v4503
    %4505 = vdwg.mxu0
    %4506 = vmatpush.bf16.msra.mxu0 %v4326
    %4507 = vmatpush.bf16.msra.mxu0 %v4324
    %4508 = vmatpush.bf16.msra.mxu0 %v4322
    %4509 = vmatpush.bf16.msra.mxu0 %v4320
    %4510 = vmatpush.bf16.msra.mxu0 %v4318
    %4511 = vmatpush.bf16.msra.mxu0 %v4316
    %4512 = vmatpush.bf16.msra.mxu0 %v4314
    %4513 = vmatpush.bf16.msra.mxu0 %v4312
    %4514 = vmatmul.bf16.gmra.mxu0 %v3988
    %v4515 = vpop.f32.mrf.mxu0
    %v4516 = vadd.f32 %v4467, %v4515
    %v4517 = vpop.f32.mrf.mxu0
    %v4518 = vadd.f32 %v4469, %v4517
    %4519 = vmatmul.bf16.gmra.mxu0 %v3992
    %v4520 = vpop.f32.mrf.mxu0
    %v4521 = vadd.f32 %v4472, %v4520
    %v4522 = vpop.f32.mrf.mxu0
    %v4523 = vadd.f32 %v4474, %v4522
    %4524 = vmatmul.bf16.gmra.mxu0 %v3996
    %v4525 = vpop.f32.mrf.mxu0
    %v4526 = vadd.f32 %v4477, %v4525
    %v4527 = vpop.f32.mrf.mxu0
    %v4528 = vadd.f32 %v4479, %v4527
    %4529 = vmatmul.bf16.gmra.mxu0 %v4000
    %v4530 = vpop.f32.mrf.mxu0
    %v4531 = vadd.f32 %v4482, %v4530
    %v4532 = vpop.f32.mrf.mxu0
    %v4533 = vadd.f32 %v4484, %v4532
    %4534 = vmatmul.bf16.gmra.mxu0 %v4004
    %v4535 = vpop.f32.mrf.mxu0
    %v4536 = vadd.f32 %v4487, %v4535
    %v4537 = vpop.f32.mrf.mxu0
    %v4538 = vadd.f32 %v4489, %v4537
    %4539 = vmatmul.bf16.gmra.mxu0 %v4008
    %v4540 = vpop.f32.mrf.mxu0
    %v4541 = vadd.f32 %v4492, %v4540
    %v4542 = vpop.f32.mrf.mxu0
    %v4543 = vadd.f32 %v4494, %v4542
    %4544 = vmatmul.bf16.gmra.mxu0 %v4012
    %v4545 = vpop.f32.mrf.mxu0
    %v4546 = vadd.f32 %v4497, %v4545
    %v4547 = vpop.f32.mrf.mxu0
    %v4548 = vadd.f32 %v4499, %v4547
    %4549 = vmatmul.bf16.gmra.mxu0 %v4016
    %v4550 = vpop.f32.mrf.mxu0
    %v4551 = vadd.f32 %v4502, %v4550
    %v4552 = vpop.f32.mrf.mxu0
    %v4553 = vadd.f32 %v4504, %v4552
    %4554 = vdwg.mxu0
    %4555 = vmatpush.bf16.msra.mxu0 %v4342
    %4556 = vmatpush.bf16.msra.mxu0 %v4340
    %4557 = vmatpush.bf16.msra.mxu0 %v4338
    %4558 = vmatpush.bf16.msra.mxu0 %v4336
    %4559 = vmatpush.bf16.msra.mxu0 %v4334
    %4560 = vmatpush.bf16.msra.mxu0 %v4332
    %4561 = vmatpush.bf16.msra.mxu0 %v4330
    %4562 = vmatpush.bf16.msra.mxu0 %v4328
    %4563 = vmatmul.bf16.gmra.mxu0 %v3989
    %v4564 = vpop.f32.mrf.mxu0
    %v4565 = vadd.f32 %v4516, %v4564
    %v4566 = vpop.f32.mrf.mxu0
    %v4567 = vadd.f32 %v4518, %v4566
    %4568 = vmatmul.bf16.gmra.mxu0 %v3993
    %v4569 = vpop.f32.mrf.mxu0
    %v4570 = vadd.f32 %v4521, %v4569
    %v4571 = vpop.f32.mrf.mxu0
    %v4572 = vadd.f32 %v4523, %v4571
    %4573 = vmatmul.bf16.gmra.mxu0 %v3997
    %v4574 = vpop.f32.mrf.mxu0
    %v4575 = vadd.f32 %v4526, %v4574
    %v4576 = vpop.f32.mrf.mxu0
    %v4577 = vadd.f32 %v4528, %v4576
    %4578 = vmatmul.bf16.gmra.mxu0 %v4001
    %v4579 = vpop.f32.mrf.mxu0
    %v4580 = vadd.f32 %v4531, %v4579
    %v4581 = vpop.f32.mrf.mxu0
    %v4582 = vadd.f32 %v4533, %v4581
    %4583 = vmatmul.bf16.gmra.mxu0 %v4005
    %v4584 = vpop.f32.mrf.mxu0
    %v4585 = vadd.f32 %v4536, %v4584
    %v4586 = vpop.f32.mrf.mxu0
    %v4587 = vadd.f32 %v4538, %v4586
    %4588 = vmatmul.bf16.gmra.mxu0 %v4009
    %v4589 = vpop.f32.mrf.mxu0
    %v4590 = vadd.f32 %v4541, %v4589
    %v4591 = vpop.f32.mrf.mxu0
    %v4592 = vadd.f32 %v4543, %v4591
    %4593 = vmatmul.bf16.gmra.mxu0 %v4013
    %v4594 = vpop.f32.mrf.mxu0
    %v4595 = vadd.f32 %v4546, %v4594
    %v4596 = vpop.f32.mrf.mxu0
    %v4597 = vadd.f32 %v4548, %v4596
    %4598 = vmatmul.bf16.gmra.mxu0 %v4017
    %v4599 = vpop.f32.mrf.mxu0
    %v4600 = vadd.f32 %v4551, %v4599
    %v4601 = vpop.f32.mrf.mxu0
    %v4602 = vadd.f32 %v4553, %v4601
    %4603 = vdwg.mxu0
    %4604 = vmatpush.bf16.msra.mxu0 %v4295
    %4605 = vmatpush.bf16.msra.mxu0 %v4293
    %4606 = vmatpush.bf16.msra.mxu0 %v4291
    %4607 = vmatpush.bf16.msra.mxu0 %v4289
    %4608 = vmatpush.bf16.msra.mxu0 %v4287
    %4609 = vmatpush.bf16.msra.mxu0 %v4285
    %4610 = vmatpush.bf16.msra.mxu0 %v4283
    %4611 = vmatpush.bf16.msra.mxu0 %v4281
    %4612 = vmatmul.bf16.gmra.mxu0 %v3986
    %v4613 = vpop.f32.mrf.mxu0
    %v4614 = vadd.f32 %v4085, %v4613
    %v4615 = vpop.f32.mrf.mxu0
    %v4616 = vadd.f32 %v4085, %v4615
    %4617 = vmatmul.bf16.gmra.mxu0 %v3990
    %v4618 = vpop.f32.mrf.mxu0
    %v4619 = vadd.f32 %v4085, %v4618
    %v4620 = vpop.f32.mrf.mxu0
    %v4621 = vadd.f32 %v4085, %v4620
    %4622 = vmatmul.bf16.gmra.mxu0 %v3994
    %v4623 = vpop.f32.mrf.mxu0
    %v4624 = vadd.f32 %v4085, %v4623
    %v4625 = vpop.f32.mrf.mxu0
    %v4626 = vadd.f32 %v4085, %v4625
    %4627 = vmatmul.bf16.gmra.mxu0 %v3998
    %v4628 = vpop.f32.mrf.mxu0
    %v4629 = vadd.f32 %v4085, %v4628
    %v4630 = vpop.f32.mrf.mxu0
    %v4631 = vadd.f32 %v4085, %v4630
    %4632 = vmatmul.bf16.gmra.mxu0 %v4002
    %v4633 = vpop.f32.mrf.mxu0
    %v4634 = vadd.f32 %v4085, %v4633
    %v4635 = vpop.f32.mrf.mxu0
    %v4636 = vadd.f32 %v4085, %v4635
    %4637 = vmatmul.bf16.gmra.mxu0 %v4006
    %v4638 = vpop.f32.mrf.mxu0
    %v4639 = vadd.f32 %v4085, %v4638
    %v4640 = vpop.f32.mrf.mxu0
    %v4641 = vadd.f32 %v4085, %v4640
    %4642 = vmatmul.bf16.gmra.mxu0 %v4010
    %v4643 = vpop.f32.mrf.mxu0
    %v4644 = vadd.f32 %v4085, %v4643
    %v4645 = vpop.f32.mrf.mxu0
    %v4646 = vadd.f32 %v4085, %v4645
    %4647 = vmatmul.bf16.gmra.mxu0 %v4014
    %v4648 = vpop.f32.mrf.mxu0
    %v4649 = vadd.f32 %v4085, %v4648
    %v4650 = vpop.f32.mrf.mxu0
    %v4651 = vadd.f32 %v4085, %v4650
    %4652 = vdwg.mxu0
    %4653 = vmatpush.bf16.msra.mxu0 %v4311
    %4654 = vmatpush.bf16.msra.mxu0 %v4309
    %4655 = vmatpush.bf16.msra.mxu0 %v4307
    %4656 = vmatpush.bf16.msra.mxu0 %v4305
    %4657 = vmatpush.bf16.msra.mxu0 %v4303
    %4658 = vmatpush.bf16.msra.mxu0 %v4301
    %4659 = vmatpush.bf16.msra.mxu0 %v4299
    %4660 = vmatpush.bf16.msra.mxu0 %v4297
    %4661 = vmatmul.bf16.gmra.mxu0 %v3987
    %v4662 = vpop.f32.mrf.mxu0
    %v4663 = vadd.f32 %v4614, %v4662
    %v4664 = vpop.f32.mrf.mxu0
    %v4665 = vadd.f32 %v4616, %v4664
    %4666 = vmatmul.bf16.gmra.mxu0 %v3991
    %v4667 = vpop.f32.mrf.mxu0
    %v4668 = vadd.f32 %v4619, %v4667
    %v4669 = vpop.f32.mrf.mxu0
    %v4670 = vadd.f32 %v4621, %v4669
    %4671 = vmatmul.bf16.gmra.mxu0 %v3995
    %v4672 = vpop.f32.mrf.mxu0
    %v4673 = vadd.f32 %v4624, %v4672
    %v4674 = vpop.f32.mrf.mxu0
    %v4675 = vadd.f32 %v4626, %v4674
    %4676 = vmatmul.bf16.gmra.mxu0 %v3999
    %v4677 = vpop.f32.mrf.mxu0
    %v4678 = vadd.f32 %v4629, %v4677
    %v4679 = vpop.f32.mrf.mxu0
    %v4680 = vadd.f32 %v4631, %v4679
    %4681 = vmatmul.bf16.gmra.mxu0 %v4003
    %v4682 = vpop.f32.mrf.mxu0
    %v4683 = vadd.f32 %v4634, %v4682
    %v4684 = vpop.f32.mrf.mxu0
    %v4685 = vadd.f32 %v4636, %v4684
    %4686 = vmatmul.bf16.gmra.mxu0 %v4007
    %v4687 = vpop.f32.mrf.mxu0
    %v4688 = vadd.f32 %v4639, %v4687
    %v4689 = vpop.f32.mrf.mxu0
    %v4690 = vadd.f32 %v4641, %v4689
    %4691 = vmatmul.bf16.gmra.mxu0 %v4011
    %v4692 = vpop.f32.mrf.mxu0
    %v4693 = vadd.f32 %v4644, %v4692
    %v4694 = vpop.f32.mrf.mxu0
    %v4695 = vadd.f32 %v4646, %v4694
    %4696 = vmatmul.bf16.gmra.mxu0 %v4015
    %v4697 = vpop.f32.mrf.mxu0
    %v4698 = vadd.f32 %v4649, %v4697
    %v4699 = vpop.f32.mrf.mxu0
    %v4700 = vadd.f32 %v4651, %v4699
    %4701 = vdwg.mxu0
    %4702 = vmatpush.bf16.msra.mxu0 %v4327
    %4703 = vmatpush.bf16.msra.mxu0 %v4325
    %4704 = vmatpush.bf16.msra.mxu0 %v4323
    %4705 = vmatpush.bf16.msra.mxu0 %v4321
    %4706 = vmatpush.bf16.msra.mxu0 %v4319
    %4707 = vmatpush.bf16.msra.mxu0 %v4317
    %4708 = vmatpush.bf16.msra.mxu0 %v4315
    %4709 = vmatpush.bf16.msra.mxu0 %v4313
    %4710 = vmatmul.bf16.gmra.mxu0 %v3988
    %v4711 = vpop.f32.mrf.mxu0
    %v4712 = vadd.f32 %v4663, %v4711
    %v4713 = vpop.f32.mrf.mxu0
    %v4714 = vadd.f32 %v4665, %v4713
    %4715 = vmatmul.bf16.gmra.mxu0 %v3992
    %v4716 = vpop.f32.mrf.mxu0
    %v4717 = vadd.f32 %v4668, %v4716
    %v4718 = vpop.f32.mrf.mxu0
    %v4719 = vadd.f32 %v4670, %v4718
    %4720 = vmatmul.bf16.gmra.mxu0 %v3996
    %v4721 = vpop.f32.mrf.mxu0
    %v4722 = vadd.f32 %v4673, %v4721
    %v4723 = vpop.f32.mrf.mxu0
    %v4724 = vadd.f32 %v4675, %v4723
    %4725 = vmatmul.bf16.gmra.mxu0 %v4000
    %v4726 = vpop.f32.mrf.mxu0
    %v4727 = vadd.f32 %v4678, %v4726
    %v4728 = vpop.f32.mrf.mxu0
    %v4729 = vadd.f32 %v4680, %v4728
    %4730 = vmatmul.bf16.gmra.mxu0 %v4004
    %v4731 = vpop.f32.mrf.mxu0
    %v4732 = vadd.f32 %v4683, %v4731
    %v4733 = vpop.f32.mrf.mxu0
    %v4734 = vadd.f32 %v4685, %v4733
    %4735 = vmatmul.bf16.gmra.mxu0 %v4008
    %v4736 = vpop.f32.mrf.mxu0
    %v4737 = vadd.f32 %v4688, %v4736
    %v4738 = vpop.f32.mrf.mxu0
    %v4739 = vadd.f32 %v4690, %v4738
    %4740 = vmatmul.bf16.gmra.mxu0 %v4012
    %v4741 = vpop.f32.mrf.mxu0
    %v4742 = vadd.f32 %v4693, %v4741
    %v4743 = vpop.f32.mrf.mxu0
    %v4744 = vadd.f32 %v4695, %v4743
    %4745 = vmatmul.bf16.gmra.mxu0 %v4016
    %v4746 = vpop.f32.mrf.mxu0
    %v4747 = vadd.f32 %v4698, %v4746
    %v4748 = vpop.f32.mrf.mxu0
    %v4749 = vadd.f32 %v4700, %v4748
    %4750 = vdwg.mxu0
    %4751 = vmatpush.bf16.msra.mxu0 %v4343
    %4752 = vmatpush.bf16.msra.mxu0 %v4341
    %4753 = vmatpush.bf16.msra.mxu0 %v4339
    %4754 = vmatpush.bf16.msra.mxu0 %v4337
    %4755 = vmatpush.bf16.msra.mxu0 %v4335
    %4756 = vmatpush.bf16.msra.mxu0 %v4333
    %4757 = vmatpush.bf16.msra.mxu0 %v4331
    %4758 = vmatpush.bf16.msra.mxu0 %v4329
    %4759 = vmatmul.bf16.gmra.mxu0 %v3989
    %v4760 = vpop.f32.mrf.mxu0
    %v4761 = vadd.f32 %v4712, %v4760
    %v4762 = vpop.f32.mrf.mxu0
    %v4763 = vadd.f32 %v4714, %v4762
    %4764 = vmatmul.bf16.gmra.mxu0 %v3993
    %v4765 = vpop.f32.mrf.mxu0
    %v4766 = vadd.f32 %v4717, %v4765
    %v4767 = vpop.f32.mrf.mxu0
    %v4768 = vadd.f32 %v4719, %v4767
    %4769 = vmatmul.bf16.gmra.mxu0 %v3997
    %v4770 = vpop.f32.mrf.mxu0
    %v4771 = vadd.f32 %v4722, %v4770
    %v4772 = vpop.f32.mrf.mxu0
    %v4773 = vadd.f32 %v4724, %v4772
    %4774 = vmatmul.bf16.gmra.mxu0 %v4001
    %v4775 = vpop.f32.mrf.mxu0
    %v4776 = vadd.f32 %v4727, %v4775
    %v4777 = vpop.f32.mrf.mxu0
    %v4778 = vadd.f32 %v4729, %v4777
    %4779 = vmatmul.bf16.gmra.mxu0 %v4005
    %v4780 = vpop.f32.mrf.mxu0
    %v4781 = vadd.f32 %v4732, %v4780
    %v4782 = vpop.f32.mrf.mxu0
    %v4783 = vadd.f32 %v4734, %v4782
    %4784 = vmatmul.bf16.gmra.mxu0 %v4009
    %v4785 = vpop.f32.mrf.mxu0
    %v4786 = vadd.f32 %v4737, %v4785
    %v4787 = vpop.f32.mrf.mxu0
    %v4788 = vadd.f32 %v4739, %v4787
    %4789 = vmatmul.bf16.gmra.mxu0 %v4013
    %v4790 = vpop.f32.mrf.mxu0
    %v4791 = vadd.f32 %v4742, %v4790
    %v4792 = vpop.f32.mrf.mxu0
    %v4793 = vadd.f32 %v4744, %v4792
    %4794 = vmatmul.bf16.gmra.mxu0 %v4017
    %v4795 = vpop.f32.mrf.mxu0
    %v4796 = vadd.f32 %v4747, %v4795
    %v4797 = vpop.f32.mrf.mxu0
    %v4798 = vadd.f32 %v4749, %v4797
    %4799 = vdwg.mxu0
    %v4800 = vmax.f32 %v4565, 0.0
    %v4801 = vmax.f32 %v4761, 0.0
    %v4802 = vmax.f32 %v4567, 0.0
    %v4803 = vmax.f32 %v4763, 0.0
    %v4804 = vmax.f32 %v4570, 0.0
    %v4805 = vmax.f32 %v4766, 0.0
    %v4806 = vmax.f32 %v4572, 0.0
    %v4807 = vmax.f32 %v4768, 0.0
    %v4808 = vmax.f32 %v4575, 0.0
    %v4809 = vmax.f32 %v4771, 0.0
    %v4810 = vmax.f32 %v4577, 0.0
    %v4811 = vmax.f32 %v4773, 0.0
    %v4812 = vmax.f32 %v4580, 0.0
    %v4813 = vmax.f32 %v4776, 0.0
    %v4814 = vmax.f32 %v4582, 0.0
    %v4815 = vmax.f32 %v4778, 0.0
    %v4816 = vmax.f32 %v4585, 0.0
    %v4817 = vmax.f32 %v4781, 0.0
    %v4818 = vmax.f32 %v4587, 0.0
    %v4819 = vmax.f32 %v4783, 0.0
    %v4820 = vmax.f32 %v4590, 0.0
    %v4821 = vmax.f32 %v4786, 0.0
    %v4822 = vmax.f32 %v4592, 0.0
    %v4823 = vmax.f32 %v4788, 0.0
    %v4824 = vmax.f32 %v4595, 0.0
    %v4825 = vmax.f32 %v4791, 0.0
    %v4826 = vmax.f32 %v4597, 0.0
    %v4827 = vmax.f32 %v4793, 0.0
    %v4828 = vmax.f32 %v4600, 0.0
    %v4829 = vmax.f32 %v4796, 0.0
    %v4830 = vmax.f32 %v4602, 0.0
    %v4831 = vmax.f32 %v4798, 0.0
    %v4832 = vpack.c.bf16 %v4802, %v4800
    %v4833 = vpack.c.bf16 %v4803, %v4801
    %v4834 = vpack.c.bf16 %v4806, %v4804
    %v4835 = vpack.c.bf16 %v4807, %v4805
    %v4836 = vpack.c.bf16 %v4810, %v4808
    %v4837 = vpack.c.bf16 %v4811, %v4809
    %v4838 = vpack.c.bf16 %v4814, %v4812
    %v4839 = vpack.c.bf16 %v4815, %v4813
    %v4840 = vpack.c.bf16 %v4818, %v4816
    %v4841 = vpack.c.bf16 %v4819, %v4817
    %v4842 = vpack.c.bf16 %v4822, %v4820
    %v4843 = vpack.c.bf16 %v4823, %v4821
    %v4844 = vpack.c.bf16 %v4826, %v4824
    %v4845 = vpack.c.bf16 %v4827, %v4825
    %v4846 = vpack.c.bf16 %v4830, %v4828
    %v4847 = vpack.c.bf16 %v4831, %v4829
    %v4848 = vld [vmem:[%s5] sm:$0xf]
    %v4849 = vld [vmem:[%s5 + $0x4] sm:$0xf]
    %v4850 = vld [vmem:[%s5 + $0x8] sm:$0xf]
    %v4851 = vld [vmem:[%s5 + $0xc] sm:$0xf]
    %v4852 = vld [vmem:[%s5 + $0x10] sm:$0xf]
    %v4853 = vld [vmem:[%s5 + $0x14] sm:$0xf]
    %v4854 = vld [vmem:[%s5 + $0x18] sm:$0xf]
    %v4855 = vld [vmem:[%s5 + $0x1c] sm:$0xf]
    %v4856 = vld [vmem:[%s5 + $0x20] sm:$0xf]
    %v4857 = vld [vmem:[%s5 + $0x24] sm:$0xf]
    %v4858 = vld [vmem:[%s5 + $0x28] sm:$0xf]
    %v4859 = vld [vmem:[%s5 + $0x2c] sm:$0xf]
    %v4860 = vld [vmem:[%s5 + $0x30] sm:$0xf]
    %v4861 = vld [vmem:[%s5 + $0x34] sm:$0xf]
    %v4862 = vld [vmem:[%s5 + $0x38] sm:$0xf]
    %v4863 = vld [vmem:[%s5 + $0x3c] sm:$0xf]
    %v4864 = vld [vmem:[%s5 + $0x40] sm:$0xf]
    %v4865 = vld [vmem:[%s5 + $0x44] sm:$0xf]
    %v4866 = vld [vmem:[%s5 + $0x48] sm:$0xf]
    %v4867 = vld [vmem:[%s5 + $0x4c] sm:$0xf]
    %v4868 = vld [vmem:[%s5 + $0x50] sm:$0xf]
    %v4869 = vld [vmem:[%s5 + $0x54] sm:$0xf]
    %v4870 = vld [vmem:[%s5 + $0x58] sm:$0xf]
    %v4871 = vld [vmem:[%s5 + $0x5c] sm:$0xf]
    %v4872 = vld [vmem:[%s5 + $0x60] sm:$0xf]
    %v4873 = vld [vmem:[%s5 + $0x64] sm:$0xf]
    %v4874 = vld [vmem:[%s5 + $0x68] sm:$0xf]
    %v4875 = vld [vmem:[%s5 + $0x6c] sm:$0xf]
    %v4876 = vld [vmem:[%s5 + $0x70] sm:$0xf]
    %v4877 = vld [vmem:[%s5 + $0x74] sm:$0xf]
    %v4878 = vld [vmem:[%s5 + $0x78] sm:$0xf]
    %v4879 = vld [vmem:[%s5 + $0x7c] sm:$0xf]
    %v4880 = vld [vmem:[%s6] sm:$0x1]
    %v4882 = vperm.slane %v4880, 0
    %v4916 = vunpack.c.l.b16 %v4848
    %v4917 = vunpack.c.l.b16 %v4849
    %v4918 = vunpack.c.l.b16 %v4850
    %v4919 = vunpack.c.l.b16 %v4851
    %v4920 = vunpack.c.l.b16 %v4852
    %v4921 = vunpack.c.l.b16 %v4853
    %v4922 = vunpack.c.l.b16 %v4854
    %v4923 = vunpack.c.l.b16 %v4855
    %v4924 = vunpack.c.l.b16 %v4856
    %v4925 = vunpack.c.l.b16 %v4857
    %v4926 = vunpack.c.l.b16 %v4858
    %v4927 = vunpack.c.l.b16 %v4859
    %v4928 = vunpack.c.l.b16 %v4860
    %v4929 = vunpack.c.l.b16 %v4861
    %v4930 = vunpack.c.l.b16 %v4862
    %v4931 = vunpack.c.l.b16 %v4863
    %v4932 = vunpack.c.l.b16 %v4864
    %v4933 = vunpack.c.l.b16 %v4865
    %v4934 = vunpack.c.l.b16 %v4866
    %v4935 = vunpack.c.l.b16 %v4867
    %v4936 = vunpack.c.l.b16 %v4868
    %v4937 = vunpack.c.l.b16 %v4869
    %v4938 = vunpack.c.l.b16 %v4870
    %v4939 = vunpack.c.l.b16 %v4871
    %v4940 = vunpack.c.l.b16 %v4872
    %v4941 = vunpack.c.l.b16 %v4873
    %v4942 = vunpack.c.l.b16 %v4874
    %v4943 = vunpack.c.l.b16 %v4875
    %v4944 = vunpack.c.l.b16 %v4876
    %v4945 = vunpack.c.l.b16 %v4877
    %v4946 = vunpack.c.l.b16 %v4878
    %v4947 = vunpack.c.l.b16 %v4879
    %v4948 = vpack.c.b16 %v4917, %v4916
    %v4949 = vpack.c.b16 %v4919, %v4918
    %v4950 = vpack.c.b16 %v4921, %v4920
    %v4951 = vpack.c.b16 %v4923, %v4922
    %v4952 = vpack.c.b16 %v4925, %v4924
    %v4953 = vpack.c.b16 %v4927, %v4926
    %v4954 = vpack.c.b16 %v4929, %v4928
    %v4955 = vpack.c.b16 %v4931, %v4930
    %v4956 = vpack.c.b16 %v4933, %v4932
    %v4957 = vpack.c.b16 %v4935, %v4934
    %v4958 = vpack.c.b16 %v4937, %v4936
    %v4959 = vpack.c.b16 %v4939, %v4938
    %v4960 = vpack.c.b16 %v4941, %v4940
    %v4961 = vpack.c.b16 %v4943, %v4942
    %v4962 = vpack.c.b16 %v4945, %v4944
    %v4963 = vpack.c.b16 %v4947, %v4946
    %4980 = vmatpush.bf16.msra.mxu0 %v4955
    %4981 = vmatpush.bf16.msra.mxu0 %v4954
    %4982 = vmatpush.bf16.msra.mxu0 %v4953
    %4983 = vmatpush.bf16.msra.mxu0 %v4952
    %4984 = vmatpush.bf16.msra.mxu0 %v4951
    %4985 = vmatpush.bf16.msra.mxu0 %v4950
    %4986 = vmatpush.bf16.msra.mxu0 %v4949
    %4987 = vmatpush.bf16.msra.mxu0 %v4948
    %4988 = vmatmul.bf16.gmra.mxu0 %v4832
    %v4989 = vpop.f32.mrf.mxu0
    %v4990 = vadd.f32 %v4882, %v4989
    %v4991 = vpop.f32.mrf.mxu0
    %v4992 = vadd.f32 %v4882, %v4991
    %4993 = vmatmul.bf16.gmra.mxu0 %v4834
    %v4994 = vpop.f32.mrf.mxu0
    %v4995 = vadd.f32 %v4882, %v4994
    %v4996 = vpop.f32.mrf.mxu0
    %v4997 = vadd.f32 %v4882, %v4996
    %4998 = vmatmul.bf16.gmra.mxu0 %v4836
    %v4999 = vpop.f32.mrf.mxu0
    %v5000 = vadd.f32 %v4882, %v4999
    %v5001 = vpop.f32.mrf.mxu0
    %v5002 = vadd.f32 %v4882, %v5001
    %5003 = vmatmul.bf16.gmra.mxu0 %v4838
    %v5004 = vpop.f32.mrf.mxu0
    %v5005 = vadd.f32 %v4882, %v5004
    %v5006 = vpop.f32.mrf.mxu0
    %v5007 = vadd.f32 %v4882, %v5006
    %5008 = vmatmul.bf16.gmra.mxu0 %v4840
    %v5009 = vpop.f32.mrf.mxu0
    %v5010 = vadd.f32 %v4882, %v5009
    %v5011 = vpop.f32.mrf.mxu0
    %v5012 = vadd.f32 %v4882, %v5011
    %5013 = vmatmul.bf16.gmra.mxu0 %v4842
    %v5014 = vpop.f32.mrf.mxu0
    %v5015 = vadd.f32 %v4882, %v5014
    %v5016 = vpop.f32.mrf.mxu0
    %v5017 = vadd.f32 %v4882, %v5016
    %5018 = vmatmul.bf16.gmra.mxu0 %v4844
    %v5019 = vpop.f32.mrf.mxu0
    %v5020 = vadd.f32 %v4882, %v5019
    %v5021 = vpop.f32.mrf.mxu0
    %v5022 = vadd.f32 %v4882, %v5021
    %5023 = vmatmul.bf16.gmra.mxu0 %v4846
    %v5024 = vpop.f32.mrf.mxu0
    %v5025 = vadd.f32 %v4882, %v5024
    %v5026 = vpop.f32.mrf.mxu0
    %v5027 = vadd.f32 %v4882, %v5026
    %5028 = vdwg.mxu0
    %5029 = vmatpush.bf16.msra.mxu0 %v4963
    %5030 = vmatpush.bf16.msra.mxu0 %v4962
    %5031 = vmatpush.bf16.msra.mxu0 %v4961
    %5032 = vmatpush.bf16.msra.mxu0 %v4960
    %5033 = vmatpush.bf16.msra.mxu0 %v4959
    %5034 = vmatpush.bf16.msra.mxu0 %v4958
    %5035 = vmatpush.bf16.msra.mxu0 %v4957
    %5036 = vmatpush.bf16.msra.mxu0 %v4956
    %5037 = vmatmul.bf16.gmra.mxu0 %v4833
    %v5038 = vpop.f32.mrf.mxu0
    %v5039 = vadd.f32 %v4990, %v5038
    %v5040 = vpop.f32.mrf.mxu0
    %v5041 = vadd.f32 %v4992, %v5040
    %5042 = vmatmul.bf16.gmra.mxu0 %v4835
    %v5043 = vpop.f32.mrf.mxu0
    %v5044 = vadd.f32 %v4995, %v5043
    %v5045 = vpop.f32.mrf.mxu0
    %v5046 = vadd.f32 %v4997, %v5045
    %5047 = vmatmul.bf16.gmra.mxu0 %v4837
    %v5048 = vpop.f32.mrf.mxu0
    %v5049 = vadd.f32 %v5000, %v5048
    %v5050 = vpop.f32.mrf.mxu0
    %v5051 = vadd.f32 %v5002, %v5050
    %5052 = vmatmul.bf16.gmra.mxu0 %v4839
    %v5053 = vpop.f32.mrf.mxu0
    %v5054 = vadd.f32 %v5005, %v5053
    %v5055 = vpop.f32.mrf.mxu0
    %v5056 = vadd.f32 %v5007, %v5055
    %5057 = vmatmul.bf16.gmra.mxu0 %v4841
    %v5058 = vpop.f32.mrf.mxu0
    %v5059 = vadd.f32 %v5010, %v5058
    %v5060 = vpop.f32.mrf.mxu0
    %v5061 = vadd.f32 %v5012, %v5060
    %5062 = vmatmul.bf16.gmra.mxu0 %v4843
    %v5063 = vpop.f32.mrf.mxu0
    %v5064 = vadd.f32 %v5015, %v5063
    %v5065 = vpop.f32.mrf.mxu0
    %v5066 = vadd.f32 %v5017, %v5065
    %5067 = vmatmul.bf16.gmra.mxu0 %v4845
    %v5068 = vpop.f32.mrf.mxu0
    %v5069 = vadd.f32 %v5020, %v5068
    %v5070 = vpop.f32.mrf.mxu0
    %v5071 = vadd.f32 %v5022, %v5070
    %5072 = vmatmul.bf16.gmra.mxu0 %v4847
    %v5073 = vpop.f32.mrf.mxu0
    %v5074 = vadd.f32 %v5025, %v5073
    %v5075 = vpop.f32.mrf.mxu0
    %v5076 = vadd.f32 %v5027, %v5075
    %5077 = vdwg.mxu0
    %v5078 = vmax.f32 %v5039, 0.0
    %v5079 = vmax.f32 %v5041, 0.0
    %v5080 = vmax.f32 %v5044, 0.0
    %v5081 = vmax.f32 %v5046, 0.0
    %v5082 = vmax.f32 %v5049, 0.0
    %v5083 = vmax.f32 %v5051, 0.0
    %v5084 = vmax.f32 %v5054, 0.0
    %v5085 = vmax.f32 %v5056, 0.0
    %v5086 = vmax.f32 %v5059, 0.0
    %v5087 = vmax.f32 %v5061, 0.0
    %v5088 = vmax.f32 %v5064, 0.0
    %v5089 = vmax.f32 %v5066, 0.0
    %v5090 = vmax.f32 %v5069, 0.0
    %v5091 = vmax.f32 %v5071, 0.0
    %v5092 = vmax.f32 %v5074, 0.0
    %v5093 = vmax.f32 %v5076, 0.0
    %v5094 = vld [vmem:[%s7] sm:$0x1]
    %v5096 = vperm.slane %v5094, 0
    %v5098 = vmul.f32 %v5078, %v5096
    %v5099 = vmul.f32 %v5079, %v5096
    %v5100 = vmul.f32 %v5080, %v5096
    %v5101 = vmul.f32 %v5081, %v5096
    %v5102 = vmul.f32 %v5082, %v5096
    %v5103 = vmul.f32 %v5083, %v5096
    %v5104 = vmul.f32 %v5084, %v5096
    %v5105 = vmul.f32 %v5085, %v5096
    %v5106 = vmul.f32 %v5086, %v5096
    %v5107 = vmul.f32 %v5087, %v5096
    %v5108 = vmul.f32 %v5088, %v5096
    %v5109 = vmul.f32 %v5089, %v5096
    %v5110 = vmul.f32 %v5090, %v5096
    %v5111 = vmul.f32 %v5091, %v5096
    %v5112 = vmul.f32 %v5092, %v5096
    %v5113 = vmul.f32 %v5093, %v5096
    %5114 = vadd.xlane.f32.xlu0 %v5098
    %v5115 = vpop.xlane.xlu0 %5114
    %5116 = vadd.xlane.f32.xlu0 %v5099
    %v5117 = vpop.xlane.xlu0 %5116
    %5118 = vadd.xlane.f32.xlu0 %v5100
    %v5119 = vpop.xlane.xlu0 %5118
    %5120 = vadd.xlane.f32.xlu0 %v5101
    %v5121 = vpop.xlane.xlu0 %5120
    %5122 = vadd.xlane.f32.xlu0 %v5102
    %v5123 = vpop.xlane.xlu0 %5122
    %5124 = vadd.xlane.f32.xlu0 %v5103
    %v5125 = vpop.xlane.xlu0 %5124
    %5126 = vadd.xlane.f32.xlu0 %v5104
    %v5127 = vpop.xlane.xlu0 %5126
    %5128 = vadd.xlane.f32.xlu0 %v5105
    %v5129 = vpop.xlane.xlu0 %5128
    %5130 = vadd.xlane.f32.xlu0 %v5106
    %v5131 = vpop.xlane.xlu0 %5130
    %5132 = vadd.xlane.f32.xlu0 %v5107
    %v5133 = vpop.xlane.xlu0 %5132
    %5134 = vadd.xlane.f32.xlu0 %v5108
    %v5135 = vpop.xlane.xlu0 %5134
    %5136 = vadd.xlane.f32.xlu0 %v5109
    %v5137 = vpop.xlane.xlu0 %5136
    %5138 = vadd.xlane.f32.xlu0 %v5110
    %v5139 = vpop.xlane.xlu0 %5138
    %5140 = vadd.xlane.f32.xlu0 %v5111
    %v5141 = vpop.xlane.xlu0 %5140
    %5142 = vadd.xlane.f32.xlu0 %v5112
    %v5143 = vpop.xlane.xlu0 %5142
    %5144 = vadd.xlane.f32.xlu0 %v5113
    %v5145 = vpop.xlane.xlu0 %5144
    %s5146 = sld [smem:[#allocation3]]
    %v5147 = vstv %s5146
    %v5148 = vadd.f32 %v5115, %v5147
    %v5149 = vadd.f32 %v5117, %v5147
    %v5150 = vadd.f32 %v5119, %v5147
    %v5151 = vadd.f32 %v5121, %v5147
    %v5152 = vadd.f32 %v5123, %v5147
    %v5153 = vadd.f32 %v5125, %v5147
    %v5154 = vadd.f32 %v5127, %v5147
    %v5155 = vadd.f32 %v5129, %v5147
    %v5156 = vadd.f32 %v5131, %v5147
    %v5157 = vadd.f32 %v5133, %v5147
    %v5158 = vadd.f32 %v5135, %v5147
    %v5159 = vadd.f32 %v5137, %v5147
    %v5160 = vadd.f32 %v5139, %v5147
    %v5161 = vadd.f32 %v5141, %v5147
    %v5162 = vadd.f32 %v5143, %v5147
    %v5163 = vadd.f32 %v5145, %v5147
    %v5180 = vlaneseq
    %v5181 = vand.u32 %v5180, 127
    %v5182 = vperm.slane %v5148, %v5181
    %v5183 = vadd.s32 %v5181, 4294967288
    %v5184 = vperm.slane %v5149, %v5183
    %vm5185 = vcmask 130112
    %v5186 = vsel %vm5185, %v5184, %v5182
    %v5187 = vadd.s32 %v5181, 4294967280
    %v5188 = vperm.slane %v5150, %v5187
    %vm5189 = vcmask 195712
    %v5190 = vsel %vm5189, %v5188, %v5186
    %v5191 = vadd.s32 %v5181, 4294967272
    %v5192 = vperm.slane %v5151, %v5191
    %vm5193 = vcmask 261312
    %v5194 = vsel %vm5193, %v5192, %v5190
    %v5195 = vadd.s32 %v5181, 4294967264
    %v5196 = vperm.slane %v5152, %v5195
    %vm5197 = vcmask 326912
    %v5198 = vsel %vm5197, %v5196, %v5194
    %v5199 = vadd.s32 %v5181, 4294967256
    %v5200 = vperm.slane %v5153, %v5199
    %vm5201 = vcmask 392512
    %v5202 = vsel %vm5201, %v5200, %v5198
    %v5203 = vadd.s32 %v5181, 4294967248
    %v5204 = vperm.slane %v5154, %v5203
    %vm5205 = vcmask 458112
    %v5206 = vsel %vm5205, %v5204, %v5202
    %v5207 = vadd.s32 %v5181, 4294967240
    %v5208 = vperm.slane %v5155, %v5207
    %vm5209 = vcmask 523712
    %v5210 = vsel %vm5209, %v5208, %v5206
    %v5211 = vadd.s32 %v5181, 4294967232
    %v5212 = vperm.slane %v5156, %v5211
    %vm5213 = vcmask 589312
    %v5214 = vsel %vm5213, %v5212, %v5210
    %v5215 = vadd.s32 %v5181, 4294967224
    %v5216 = vperm.slane %v5157, %v5215
    %vm5217 = vcmask 654912
    %v5218 = vsel %vm5217, %v5216, %v5214
    %v5219 = vadd.s32 %v5181, 4294967216
    %v5220 = vperm.slane %v5158, %v5219
    %vm5221 = vcmask 720512
    %v5222 = vsel %vm5221, %v5220, %v5218
    %v5223 = vadd.s32 %v5181, 4294967208
    %v5224 = vperm.slane %v5159, %v5223
    %vm5225 = vcmask 786112
    %v5226 = vsel %vm5225, %v5224, %v5222
    %v5227 = vadd.s32 %v5181, 4294967200
    %v5228 = vperm.slane %v5160, %v5227
    %vm5229 = vcmask 851712
    %v5230 = vsel %vm5229, %v5228, %v5226
    %v5231 = vadd.s32 %v5181, 4294967192
    %v5232 = vperm.slane %v5161, %v5231
    %vm5233 = vcmask 917312
    %v5234 = vsel %vm5233, %v5232, %v5230
    %v5235 = vadd.s32 %v5181, 4294967184
    %v5236 = vperm.slane %v5162, %v5235
    %vm5237 = vcmask 982912
    %v5238 = vsel %vm5237, %v5236, %v5234
    %v5239 = vadd.s32 %v5181, 4294967176
    %v5240 = vperm.slane %v5163, %v5239
    %vm5241 = vcmask 1048512
    %v5242 = vsel %vm5241, %v5240, %v5238
    %5244 = vst [vmem:[%s9] sm:$0x1] %v5242
  $region45: #{fc_critic_forward.1} parent=0 // pred_fallthru
    _
  // Predicated region
  $region46: #{fc_critic_forward.1} parent=0 // pred_check
    _
  $region47: #{fc_critic_forward.1} parent=0 // pred_check_branch
    %5246 = sbr.rel (0) target = $region49
  $region48: #{fc_critic_forward.1} parent=0 // pred_region
    _
  $region49: #{fc_critic_forward.1} parent=0 // pred_fallthru
    _
  // Predicated region
  $region50: #{fc_critic_forward.1} parent=0 // pred_check
    _
  $region51: #{fc_critic_forward.1} parent=0 // pred_check_branch
    %5248 = sbr.rel (0) target = $region53
  $region52: #{fc_critic_forward.1} parent=0 // pred_region
    _
  $region53: #{fc_critic_forward.1} parent=0 // pred_fallthru
    _

</llo_original>
